<compile_context>
chip_gen: v7x
topology: tpu7x:2x2x1
jax: 0.10.0
libtpu: 0.0.40
codegen_flags: <defaults>
</compile_context>

<pallas_src>
import functools
import numpy as np
import jax
import jax.numpy as jnp
from jax import lax
from jax.experimental import pallas as pl
from jax.experimental.pallas import tpu as pltpu

# ---- model hyper-parameters (small synthetic sizes) -------------------------
NODE_DIM = 32
EDGE_DIM = 8
HEADS = 4
HEAD_DIM = 16
N_QPTS = 4
N_VPTS = 8

WC = (2.0 / N_QPTS) ** 0.5 / 6.0
INV_SQRT3 = 3.0 ** -0.5

SV_DIM = HEAD_DIM + 3 * N_VPTS                 # 40: fused [scalar_v | value points]
PER_HEAD = SV_DIM + EDGE_DIM                   # 48: per-head output columns
OUT_DIM = HEADS * PER_HEAD                     # 192 useful columns
OUT_PAD = ((OUT_DIM + 127) // 128) * 128       # 256 -> unmasked writeback stores

# dot_general dims: contract the last axis of both operands (A @ B^T).
_DN_NT = (((1,), (1,)), ((), ()))
# batched over the query row i: (i, h, j) x (i, j, d) -> (i, h, d)
_DN_BATCH_I = (((2,), (1,)), ((0,), (0,)))


# ----------------------------- Pallas kernel --------------------------------
def _ipa_attention_kernel(pw_ref,                       # (H,) scalar prefetch (SMEM)
                          sq_ref, sk_ref, svp_ref,      # (1,TQ,H*D) (1,TJ,H*D) (1,TJ,H*SV)
                          qpt_ref, kpt_ref,             # (1,TQ,H*3*PQ) (1,TJ,H*3*PQ)
                          qn_ref, knt_ref,              # (1,TQ,H*PQ)  (1,H*PQ,TJ)
                          ebias_ref,                    # (1,H,TQ,TJ)  precomputed bias
                          edge_ref,                     # (1,TQ,TJ,De)
                          out_ref,                      # (1,TQ,OUT_PAD)
                          m_sc, l_sc, accsv_sc, acce_sc):
    kj = pl.program_id(2)
    TQ = sq_ref.shape[1]
    TJ = sk_ref.shape[1]
    D, PQ, De, H = HEAD_DIM, N_QPTS, EDGE_DIM, HEADS

    # ---- init running accumulators at the first key tile of each (b, qi) ----
    @pl.when(kj == 0)
    def _init():
        m_sc[...] = jnp.full_like(m_sc, -1e30)
        l_sc[...] = jnp.zeros_like(l_sc)
        accsv_sc[...] = jnp.zeros_like(accsv_sc)
        acce_sc[...] = jnp.zeros_like(acce_sc)

    sq = sq_ref[0]            # (TQ, H*D)
    sk = sk_ref[0]            # (TJ, H*D)
    svp = svp_ref[0]          # (TJ, H*SV_DIM)   per-head [v_h | vpt_h]
    qpt = qpt_ref[0]          # (TQ, H*3*PQ)
    kpt = kpt_ref[0]          # (TJ, H*3*PQ)
    qn = qn_ref[0]            # (TQ, H*PQ)       hoisted |q_p|^2
    knt = knt_ref[0]          # (H*PQ, TJ)       hoisted |k_p|^2, row-vector layout
    ebias = ebias_ref[0]      # (H, TQ, TJ)
    edge = edge_ref[0]        # (TQ, TJ, De)

    ps, alphas = [], []
    for h in range(H):                               # H = 4, unrolled at trace time
        # scalar QK^T (contract last dims directly; no pre-transposed operands)
        q = sq[:, h * D:(h + 1) * D]
        k = sk[:, h * D:(h + 1) * D]
        s = lax.dot_general(q, k, _DN_NT,
                            preferred_element_type=jnp.float32) * (D ** -0.5)
        bias = ebias[h]                              # (TQ, TJ), precomputed in wrapper

        # point-distance term: sum_p ||gq_p(i) - gk_p(j)||, with |q|^2 / |k|^2
        # hoisted to the wrapper and only the K=3 cross term on the MXU.
        dist = jnp.zeros((TQ, TJ), jnp.float32)
        for pt in range(PQ):
            hp = h * PQ + pt
            qs_ = qpt[:, 3 * hp:3 * hp + 3]          # (TQ, 3)
            ks_ = kpt[:, 3 * hp:3 * hp + 3]          # (TJ, 3)
            cross = lax.dot_general(qs_, ks_, _DN_NT,
                                    preferred_element_type=jnp.float32)   # (TQ, TJ)
            d2 = jnp.maximum(qn[:, hp:hp + 1] + knt[hp:hp + 1, :] - 2.0 * cross, 0.0)
            dist = dist + jnp.sqrt(d2)

        pw = pw_ref[h]                               # raw point weight (module spec)
        logits = (s + bias - WC * pw * dist) * INV_SQRT3

        # online softmax over the streamed j axis
        m_prev = m_sc[:, h:h + 1]
        m_new = jnp.maximum(m_prev, jnp.max(logits, axis=-1, keepdims=True))
        alpha = jnp.exp(m_prev - m_new)
        p = jnp.exp(logits - m_new)                  # (TQ, TJ), unnormalized
        l_sc[:, h:h + 1] = alpha * l_sc[:, h:h + 1] + jnp.sum(p, axis=-1, keepdims=True)
        m_sc[:, h:h + 1] = m_new

        # fused scalar + point-value aggregation: one (TQ,TJ)@(TJ,40) matmul
        cols = slice(h * SV_DIM, (h + 1) * SV_DIM)
        accsv_sc[:, cols] = alpha * accsv_sc[:, cols] + jnp.dot(
            p, svp[:, cols], preferred_element_type=jnp.float32)

        ps.append(p)
        alphas.append(alpha)

    # edge aggregation for all heads in one batched-over-i MXU contraction:
    #   e_new[i, h, d] = sum_j p[i, h, j] * edge[i, j, d]
    p_all = jnp.stack(ps, axis=1)                                        # (TQ, H, TJ)
    e_new = lax.dot_general(p_all, edge, _DN_BATCH_I,
                            preferred_element_type=jnp.float32)          # (TQ, H, De)
    for h in range(H):
        ecols = slice(h * De, (h + 1) * De)
        acce_sc[:, ecols] = alphas[h] * acce_sc[:, ecols] + e_new[:, h, :]

    # ---- finalize: normalize and write the lane-dense (TQ, 256) output slab ----
    @pl.when(kj == pl.num_programs(2) - 1)
    def _finalize():
        for h in range(H):
            inv_l = pl.reciprocal(l_sc[:, h:h + 1], approx=True)         # EUP slot
            base = h * PER_HEAD
            out_ref[0, :, base:base + SV_DIM] = accsv_sc[:, h * SV_DIM:(h + 1) * SV_DIM] * inv_l
            out_ref[0, :, base + SV_DIM:base + PER_HEAD] = acce_sc[:, h * De:(h + 1) * De] * inv_l
        if OUT_PAD > OUT_DIM:
            out_ref[0, :, OUT_DIM:] = jnp.zeros((TQ, OUT_PAD - OUT_DIM), jnp.float32)


def _run_attention_kernel(point_weight, sq, sk, svp, qpts, kpts, qn, knT, ebias, edge):
    B, N, _ = sq.shape
    TQ = min(N, 128)
    TJ = min(N, 128)
    assert N % TQ == 0 and N % TJ == 0

    def qspec(c):           # blocked along query rows
        return pl.BlockSpec((1, TQ, c), lambda b, qi, kj, pw: (b, qi, 0))

    def kspec(c):           # blocked along key rows (streamed over kj)
        return pl.BlockSpec((1, TJ, c), lambda b, qi, kj, pw: (b, kj, 0))

    out = pl.pallas_call(
        _ipa_attention_kernel,
        out_shape=jax.ShapeDtypeStruct((B, N, OUT_PAD), jnp.float32),
        grid_spec=pltpu.PrefetchScalarGridSpec(
            num_scalar_prefetch=1,
            grid=(B, N // TQ, N // TJ),
            in_specs=[
                qspec(HEADS * HEAD_DIM),                               # scalar q
                kspec(HEADS * HEAD_DIM),                               # scalar k
                kspec(HEADS * SV_DIM),                                 # fused [v | vpt]
                qspec(HEADS * 3 * N_QPTS),                             # global query points
                kspec(HEADS * 3 * N_QPTS),                             # global key points
                qspec(HEADS * N_QPTS),                                 # hoisted |q_p|^2
                pl.BlockSpec((1, HEADS * N_QPTS, TJ),
                             lambda b, qi, kj, pw: (b, 0, kj)),        # hoisted |k_p|^2 (row layout)
                pl.BlockSpec((1, HEADS, TQ, TJ),
                             lambda b, qi, kj, pw: (b, 0, qi, kj)),    # precomputed edge bias
                pl.BlockSpec((1, TQ, TJ, EDGE_DIM),
                             lambda b, qi, kj, pw: (b, qi, kj, 0)),    # edge features
            ],
            out_specs=pl.BlockSpec((1, TQ, OUT_PAD),
                                   lambda b, qi, kj, pw: (b, qi, 0)),
            scratch_shapes=[
                pltpu.VMEM((TQ, HEADS), jnp.float32),                  # running max
                pltpu.VMEM((TQ, HEADS), jnp.float32),                  # running denom
                pltpu.VMEM((TQ, HEADS * SV_DIM), jnp.float32),         # scalar+vector acc
                pltpu.VMEM((TQ, HEADS * EDGE_DIM), jnp.float32),       # edge acc
            ]),
        compiler_params=pltpu.CompilerParams(
            dimension_semantics=("parallel", "parallel", "arbitrary")),
    )(point_weight, sq, sk, svp, qpts, kpts, qn, knT, ebias, edge)
    return out[:, :, :OUT_DIM]


# ------------------------------- glue ---------------------------------------
def init_params(key):
    ks = jax.random.split(key, 6)

    def lin(k, out_dim, in_dim):
        scale = 1.0 / np.sqrt(in_dim)
        return jax.random.uniform(k, (out_dim, in_dim), jnp.float32, -scale, scale)

    after_cat = HEADS * EDGE_DIM + HEADS * HEAD_DIM + HEADS * N_VPTS * 4
    return {
        'point_weight': jnp.full((HEADS,), float(np.log(np.exp(1.0) - 1.0)), jnp.float32),
        'w_scalar_qkv': lin(ks[0], 3 * HEADS * HEAD_DIM, NODE_DIM),
        'w_vector_qk': lin(ks[1], 2 * 3 * N_QPTS * HEADS, NODE_DIM),
        'w_vector_v': lin(ks[2], 3 * N_VPTS * HEADS, NODE_DIM),
        'w_edge_bias': lin(ks[3], HEADS, EDGE_DIM),
        'w_final': lin(ks[4], NODE_DIM, after_cat),
        'b_final': jax.random.uniform(ks[5], (NODE_DIM,), jnp.float32, -0.1, 0.1),
    }


def quat_to_rotmat(q):
    w, x, y, z = q[..., 0], q[..., 1], q[..., 2], q[..., 3]
    R = jnp.stack([
        1 - 2 * (y * y + z * z), 2 * (x * y - w * z),     2 * (x * z + w * y),
        2 * (x * y + w * z),     1 - 2 * (x * x + z * z), 2 * (y * z - w * x),
        2 * (x * z - w * y),     2 * (y * z + w * x),     1 - 2 * (x * x + y * y),
    ], axis=-1)
    return R.reshape(q.shape[:-1] + (3, 3))


@functools.partial(jax.jit, static_argnames=('use_pallas',))
def ipa_forward(params, node, edge, R, t, use_pallas=True):
    B, N, _ = node.shape
    H, D, PQ, PV, De = HEADS, HEAD_DIM, N_QPTS, N_VPTS, EDGE_DIM

    # scalar q/k/v projections, kept in natural (B, N, H*D) 'n (h d)' layout
    sqkv = node @ params['w_scalar_qkv'].T
    sq, sk, sv = jnp.split(sqkv, 3, axis=-1)

    # vector (point) q/k/v; rigid frames applied in (B, N, H, P, 3) layout
    vqk = node @ params['w_vector_qk'].T
    vq, vk = jnp.split(vqk, 2, axis=-1)
    vq = vq.reshape(B, N, H, PQ, 3)
    vk = vk.reshape(B, N, H, PQ, 3)
    vv = (node @ params['w_vector_v'].T).reshape(B, N, H, PV, 3)

    def apply_rigid(pts):                                    # global = R @ p + t
        return jnp.einsum('bnij,bnhpj->bnhpi', R, pts) + t[:, :, None, None, :]

    gq, gk, gv = apply_rigid(vq), apply_rigid(vk), apply_rigid(vv)
    qpts = gq.reshape(B, N, H * PQ * 3)
    kpts = gk.reshape(B, N, H * PQ * 3)

    if use_pallas:
        # fused per-head value slab [scalar_v_h | global_vpt_h]  (fused agg matmul)
        svp = jnp.concatenate(
            [sv.reshape(B, N, H, D), gv.reshape(B, N, H, PV * 3)], axis=-1
        ).reshape(B, N, H * SV_DIM)
        # hoisted point-norm terms (kills the 32 tiny in-kernel norm ops)
        qn = jnp.sum(gq * gq, axis=-1).reshape(B, N, H * PQ)
        knT = jnp.swapaxes(jnp.sum(gk * gk, axis=-1).reshape(B, N, H * PQ), 1, 2)
        # wrapper-side edge attention bias, lane-dense (j last)
        ebias = jnp.einsum('bijd,hd->bhij', edge, params['w_edge_bias'])

        slab = _run_attention_kernel(params['point_weight'], sq, sk, svp,
                                     qpts, kpts, qn, knT, ebias, edge)
        per_head = slab.reshape(B, N, H, PER_HEAD)
        sout = per_head[..., :D].reshape(B, N, H * D)                     # 'n (h d)'
        av = per_head[..., D:D + 3 * PV].reshape(B, N, H, PV, 3)          # attended points
        eout = per_head[..., D + 3 * PV:].reshape(B, N, H * De)           # 'n (h d)'
    else:
        # pure-JAX reference of the kernel's hot path (for verification)
        sq4 = sq.reshape(B, N, H, D)
        sk4 = sk.reshape(B, N, H, D)
        sv4 = sv.reshape(B, N, H, D)
        s = jnp.einsum('bihd,bjhd->bhij', sq4, sk4) * D ** -0.5
        ebias = jnp.einsum('bijd,hd->bhij', edge, params['w_edge_bias'])
        diff = gq[:, :, None] - gk[:, None, :]                 # (B, i, j, H, P, 3)
        dist = jnp.sqrt(jnp.sum(diff * diff, axis=-1)).sum(-1)  # (B, i, j, H)
        pw = params['point_weight'][None, :, None, None]
        logits = (s + ebias - WC * pw * dist.transpose(0, 3, 1, 2)) * INV_SQRT3
        attn = jax.nn.softmax(logits, axis=-1)                 # (B, H, i, j)
        sout = jnp.einsum('bhij,bjhd->bihd', attn, sv4).reshape(B, N, H * D)
        av = jnp.einsum('bhij,bjhpc->bihpc', attn, gv)         # (B, N, H, PV, 3)
        eout = jnp.einsum('bhij,bijd->bihd', attn, edge).reshape(B, N, H * De)

    # back to local frame: R^T (v - t), then [norm, x, y, z]
    local = jnp.einsum('bnji,bnhpj->bnhpi', R, av - t[:, :, None, None, :])
    norm = jnp.sqrt(jnp.sum(local * local, axis=-1, keepdims=True))
    vec_out = jnp.concatenate([norm, local], axis=-1).reshape(B, N, H * PV * 4)

    combined = jnp.concatenate([eout, sout, vec_out], axis=-1)
    return node + combined @ params['w_final'].T + params['b_final']


# ------------------------------- main ----------------------------------------
if __name__ == "__main__":
    key = jax.random.PRNGKey(0)
    kp, kn, ke, kq, kt_ = jax.random.split(key, 5)

    B, N = 2, 8
    params = init_params(kp)
    node = jax.random.normal(kn, (B, N, NODE_DIM), jnp.float32)
    edge = jax.random.normal(ke, (B, N, N, EDGE_DIM), jnp.float32)

    quat = jax.random.normal(kq, (B, N, 4), jnp.float32)
    quat = quat / jnp.linalg.norm(quat, axis=-1, keepdims=True)
    R = quat_to_rotmat(quat)                                 # (B, N, 3, 3)
    t = jax.random.normal(kt_, (B, N, 3), jnp.float32)       # (B, N, 3)

    out = jax.block_until_ready(ipa_forward(params, node, edge, R, t, use_pallas=True))
    ref = jax.block_until_ready(ipa_forward(params, node, edge, R, t, use_pallas=False))
    np.testing.assert_allclose(np.asarray(out), np.asarray(ref), rtol=2e-3, atol=2e-3)
    print("KERNEL_OK")
</pallas_src>

<mosaic_0001>
module attributes {stable_mosaic.version = 11 : i64} {
  func.func @_ipa_attention_kernel(%arg0: i32, %arg1: i32, %arg2: i32, %arg3: memref<4xf32, #tpu.memory_space<smem>>, %arg4: memref<1x8x64xf32, #tpu.memory_space<vmem>>, %arg5: memref<1x8x64xf32, #tpu.memory_space<vmem>>, %arg6: memref<1x8x160xf32, #tpu.memory_space<vmem>>, %arg7: memref<1x8x48xf32, #tpu.memory_space<vmem>>, %arg8: memref<1x8x48xf32, #tpu.memory_space<vmem>>, %arg9: memref<1x8x16xf32, #tpu.memory_space<vmem>>, %arg10: memref<1x16x8xf32, #tpu.memory_space<vmem>>, %arg11: memref<1x4x8x8xf32, #tpu.memory_space<vmem>>, %arg12: memref<1x8x8x8xf32, #tpu.memory_space<vmem>>, %arg13: memref<1x8x256xf32, #tpu.memory_space<vmem>>, %arg14: memref<8x4xf32, #tpu.memory_space<vmem>>, %arg15: memref<8x4xf32, #tpu.memory_space<vmem>>, %arg16: memref<8x160xf32, #tpu.memory_space<vmem>>, %arg17: memref<8x32xf32, #tpu.memory_space<vmem>>) attributes {dimension_semantics = [#tpu.dimension_semantics<parallel>, #tpu.dimension_semantics<parallel>, #tpu.dimension_semantics<arbitrary>], iteration_bounds = array<i64: 2, 1, 1>, scalar_prefetch = 1 : i64, scratch_operands = 4 : i64, tpu.core_type = #tpu.core_type<tc>, window_params = [{transform_indices = @transform_0, window_bounds = array<i64: 1, 8, 64>}, {transform_indices = @transform_1, window_bounds = array<i64: 1, 8, 64>}, {transform_indices = @transform_2, window_bounds = array<i64: 1, 8, 160>}, {transform_indices = @transform_3, window_bounds = array<i64: 1, 8, 48>}, {transform_indices = @transform_4, window_bounds = array<i64: 1, 8, 48>}, {transform_indices = @transform_5, window_bounds = array<i64: 1, 8, 16>}, {transform_indices = @transform_6, window_bounds = array<i64: 1, 16, 8>}, {transform_indices = @transform_7, window_bounds = array<i64: 1, 4, 8, 8>}, {transform_indices = @transform_8, window_bounds = array<i64: 1, 8, 8, 8>}, {transform_indices = @transform_9, window_bounds = array<i64: 1, 8, 256>}]} {
    %c0_i32 = arith.constant 0 : i32
    %0 = arith.cmpi eq, %arg2, %c0_i32 : i32
    %1 = arith.extui %0 : i1 to i32
    %c0_i32_0 = arith.constant 0 : i32
    %2 = arith.cmpi ne, %1, %c0_i32_0 : i32
    scf.if %2 {
      %cst_170 = arith.constant -1.000000e+30 : f32
      %454 = vector.broadcast %cst_170 : f32 to vector<8x4xf32>
      %c0_171 = arith.constant 0 : index
      %c0_172 = arith.constant 0 : index
      %455 = vector.load %arg14[%c0_171, %c0_172] : memref<8x4xf32, #tpu.memory_space<vmem>>, vector<8x4xf32>
      tpu.vector_store %arg14[%c0_171, %c0_172], %454 {strides = array<i32>} : memref<8x4xf32, #tpu.memory_space<vmem>>, vector<8x4xf32>,
      %cst_173 = arith.constant 0.000000e+00 : f32
      %456 = vector.broadcast %cst_173 : f32 to vector<8x4xf32>
      %c0_174 = arith.constant 0 : index
      %c0_175 = arith.constant 0 : index
      %457 = vector.load %arg15[%c0_174, %c0_175] : memref<8x4xf32, #tpu.memory_space<vmem>>, vector<8x4xf32>
      tpu.vector_store %arg15[%c0_174, %c0_175], %456 {strides = array<i32>} : memref<8x4xf32, #tpu.memory_space<vmem>>, vector<8x4xf32>,
      %cst_176 = arith.constant 0.000000e+00 : f32
      %458 = vector.broadcast %cst_176 : f32 to vector<8x160xf32>
      %c0_177 = arith.constant 0 : index
      %c0_178 = arith.constant 0 : index
      %459 = vector.load %arg16[%c0_177, %c0_178] : memref<8x160xf32, #tpu.memory_space<vmem>>, vector<8x160xf32>
      tpu.vector_store %arg16[%c0_177, %c0_178], %458 {strides = array<i32>} : memref<8x160xf32, #tpu.memory_space<vmem>>, vector<8x160xf32>,
      %cst_179 = arith.constant 0.000000e+00 : f32
      %460 = vector.broadcast %cst_179 : f32 to vector<8x32xf32>
      %c0_180 = arith.constant 0 : index
      %c0_181 = arith.constant 0 : index
      %461 = vector.load %arg17[%c0_180, %c0_181] : memref<8x32xf32, #tpu.memory_space<vmem>>, vector<8x32xf32>
      tpu.vector_store %arg17[%c0_180, %c0_181], %460 {strides = array<i32>} : memref<8x32xf32, #tpu.memory_space<vmem>>, vector<8x32xf32>,
    } else {
    }
    %c0 = arith.constant 0 : index
    %c0_1 = arith.constant 0 : index
    %c0_2 = arith.constant 0 : index
    %3 = vector.load %arg4[%c0, %c0_1, %c0_2] : memref<1x8x64xf32, #tpu.memory_space<vmem>>, vector<1x8x64xf32>
    %4 = vector.shape_cast %3 : vector<1x8x64xf32> to vector<8x64xf32>
    %c0_3 = arith.constant 0 : index
    %c0_4 = arith.constant 0 : index
    %c0_5 = arith.constant 0 : index
    %5 = vector.load %arg5[%c0_3, %c0_4, %c0_5] : memref<1x8x64xf32, #tpu.memory_space<vmem>>, vector<1x8x64xf32>
    %6 = vector.shape_cast %5 : vector<1x8x64xf32> to vector<8x64xf32>
    %c0_6 = arith.constant 0 : index
    %c0_7 = arith.constant 0 : index
    %c0_8 = arith.constant 0 : index
    %7 = vector.load %arg6[%c0_6, %c0_7, %c0_8] : memref<1x8x160xf32, #tpu.memory_space<vmem>>, vector<1x8x160xf32>
    %8 = vector.shape_cast %7 : vector<1x8x160xf32> to vector<8x160xf32>
    %c0_9 = arith.constant 0 : index
    %c0_10 = arith.constant 0 : index
    %c0_11 = arith.constant 0 : index
    %9 = vector.load %arg7[%c0_9, %c0_10, %c0_11] : memref<1x8x48xf32, #tpu.memory_space<vmem>>, vector<1x8x48xf32>
    %10 = vector.shape_cast %9 : vector<1x8x48xf32> to vector<8x48xf32>
    %c0_12 = arith.constant 0 : index
    %c0_13 = arith.constant 0 : index
    %c0_14 = arith.constant 0 : index
    %11 = vector.load %arg8[%c0_12, %c0_13, %c0_14] : memref<1x8x48xf32, #tpu.memory_space<vmem>>, vector<1x8x48xf32>
    %12 = vector.shape_cast %11 : vector<1x8x48xf32> to vector<8x48xf32>
    %c0_15 = arith.constant 0 : index
    %c0_16 = arith.constant 0 : index
    %c0_17 = arith.constant 0 : index
    %13 = vector.load %arg9[%c0_15, %c0_16, %c0_17] : memref<1x8x16xf32, #tpu.memory_space<vmem>>, vector<1x8x16xf32>
    %14 = vector.shape_cast %13 : vector<1x8x16xf32> to vector<8x16xf32>
    %c0_18 = arith.constant 0 : index
    %c0_19 = arith.constant 0 : index
    %c0_20 = arith.constant 0 : index
    %15 = vector.load %arg10[%c0_18, %c0_19, %c0_20] : memref<1x16x8xf32, #tpu.memory_space<vmem>>, vector<1x16x8xf32>
    %16 = vector.shape_cast %15 : vector<1x16x8xf32> to vector<16x8xf32>
    %c0_21 = arith.constant 0 : index
    %c0_22 = arith.constant 0 : index
    %c0_23 = arith.constant 0 : index
    %c0_24 = arith.constant 0 : index
    %17 = vector.load %arg11[%c0_21, %c0_22, %c0_23, %c0_24] : memref<1x4x8x8xf32, #tpu.memory_space<vmem>>, vector<1x4x8x8xf32>
    %18 = vector.shape_cast %17 : vector<1x4x8x8xf32> to vector<4x8x8xf32>
    %c0_25 = arith.constant 0 : index
    %c0_26 = arith.constant 0 : index
    %c0_27 = arith.constant 0 : index
    %c0_28 = arith.constant 0 : index
    %19 = vector.load %arg12[%c0_25, %c0_26, %c0_27, %c0_28] : memref<1x8x8x8xf32, #tpu.memory_space<vmem>>, vector<1x8x8x8xf32>
    %20 = vector.shape_cast %19 : vector<1x8x8x8xf32> to vector<8x8x8xf32>
    %21 = vector.extract_strided_slice %4 {offsets = [0, 0], sizes = [8, 16], strides = [1, 1]} : vector<8x64xf32> to vector<8x16xf32>
    %22 = vector.extract_strided_slice %6 {offsets = [0, 0], sizes = [8, 16], strides = [1, 1]} : vector<8x64xf32> to vector<8x16xf32>
    %cst = arith.constant dense<0.000000e+00> : vector<8x8xf32>
    %23 = tpu.matmul %21, %22, %cst {dimension_numbers = #tpu.dot_dimension_numbers<[1], [1], [0], [0], [0, 0, 1, 0], [], []>} : vector<8x16xf32>, vector<8x16xf32>, vector<8x8xf32> -> vector<8x8xf32>
    %cst_29 = arith.constant 2.500000e-01 : f32
    %24 = vector.broadcast %cst_29 : f32 to vector<8x8xf32>
    %25 = arith.mulf %23, %24 : vector<8x8xf32>
    %26 = vector.extract_strided_slice %18 {offsets = [0, 0, 0], sizes = [1, 8, 8], strides = [1, 1, 1]} : vector<4x8x8xf32> to vector<1x8x8xf32>
    %27 = vector.shape_cast %26 : vector<1x8x8xf32> to vector<8x8xf32>
    %cst_30 = arith.constant 0.000000e+00 : f32
    %28 = vector.broadcast %cst_30 : f32 to vector<8x8xf32>
    %29 = vector.extract_strided_slice %10 {offsets = [0, 0], sizes = [8, 3], strides = [1, 1]} : vector<8x48xf32> to vector<8x3xf32>
    %30 = vector.extract_strided_slice %12 {offsets = [0, 0], sizes = [8, 3], strides = [1, 1]} : vector<8x48xf32> to vector<8x3xf32>
    %cst_31 = arith.constant dense<0.000000e+00> : vector<8x8xf32>
    %31 = tpu.matmul %29, %30, %cst_31 {dimension_numbers = #tpu.dot_dimension_numbers<[1], [1], [0], [0], [0, 0, 1, 0], [], []>} : vector<8x3xf32>, vector<8x3xf32>, vector<8x8xf32> -> vector<8x8xf32>
    %32 = vector.extract_strided_slice %14 {offsets = [0, 0], sizes = [8, 1], strides = [1, 1]} : vector<8x16xf32> to vector<8x1xf32>
    %33 = vector.extract_strided_slice %16 {offsets = [0, 0], sizes = [1, 8], strides = [1, 1]} : vector<16x8xf32> to vector<1x8xf32>
    %34 = vector.broadcast %32 : vector<8x1xf32> to vector<8x8xf32>
    %35 = vector.broadcast %33 : vector<1x8xf32> to vector<8x8xf32>
    %36 = arith.addf %34, %35 : vector<8x8xf32>
    %cst_32 = arith.constant 2.000000e+00 : f32
    %37 = vector.broadcast %cst_32 : f32 to vector<8x8xf32>
    %38 = arith.mulf %37, %31 : vector<8x8xf32>
    %39 = arith.subf %36, %38 : vector<8x8xf32>
    %cst_33 = arith.constant 0.000000e+00 : f32
    %40 = vector.broadcast %cst_33 : f32 to vector<8x8xf32>
    %41 = arith.maximumf %39, %40 : vector<8x8xf32>
    %42 = math.sqrt %41 : vector<8x8xf32>
    %43 = arith.addf %28, %42 : vector<8x8xf32>
    %44 = vector.extract_strided_slice %10 {offsets = [0, 3], sizes = [8, 3], strides = [1, 1]} : vector<8x48xf32> to vector<8x3xf32>
    %45 = vector.extract_strided_slice %12 {offsets = [0, 3], sizes = [8, 3], strides = [1, 1]} : vector<8x48xf32> to vector<8x3xf32>
    %cst_34 = arith.constant dense<0.000000e+00> : vector<8x8xf32>
    %46 = tpu.matmul %44, %45, %cst_34 {dimension_numbers = #tpu.dot_dimension_numbers<[1], [1], [0], [0], [0, 0, 1, 0], [], []>} : vector<8x3xf32>, vector<8x3xf32>, vector<8x8xf32> -> vector<8x8xf32>
    %47 = vector.extract_strided_slice %14 {offsets = [0, 1], sizes = [8, 1], strides = [1, 1]} : vector<8x16xf32> to vector<8x1xf32>
    %48 = vector.extract_strided_slice %16 {offsets = [1, 0], sizes = [1, 8], strides = [1, 1]} : vector<16x8xf32> to vector<1x8xf32>
    %49 = vector.broadcast %47 : vector<8x1xf32> to vector<8x8xf32>
    %50 = vector.broadcast %48 : vector<1x8xf32> to vector<8x8xf32>
    %51 = arith.addf %49, %50 : vector<8x8xf32>
    %cst_35 = arith.constant 2.000000e+00 : f32
    %52 = vector.broadcast %cst_35 : f32 to vector<8x8xf32>
    %53 = arith.mulf %52, %46 : vector<8x8xf32>
    %54 = arith.subf %51, %53 : vector<8x8xf32>
    %cst_36 = arith.constant 0.000000e+00 : f32
    %55 = vector.broadcast %cst_36 : f32 to vector<8x8xf32>
    %56 = arith.maximumf %54, %55 : vector<8x8xf32>
    %57 = math.sqrt %56 : vector<8x8xf32>
    %58 = arith.addf %43, %57 : vector<8x8xf32>
    %59 = vector.extract_strided_slice %10 {offsets = [0, 6], sizes = [8, 3], strides = [1, 1]} : vector<8x48xf32> to vector<8x3xf32>
    %60 = vector.extract_strided_slice %12 {offsets = [0, 6], sizes = [8, 3], strides = [1, 1]} : vector<8x48xf32> to vector<8x3xf32>
    %cst_37 = arith.constant dense<0.000000e+00> : vector<8x8xf32>
    %61 = tpu.matmul %59, %60, %cst_37 {dimension_numbers = #tpu.dot_dimension_numbers<[1], [1], [0], [0], [0, 0, 1, 0], [], []>} : vector<8x3xf32>, vector<8x3xf32>, vector<8x8xf32> -> vector<8x8xf32>
    %62 = vector.extract_strided_slice %14 {offsets = [0, 2], sizes = [8, 1], strides = [1, 1]} : vector<8x16xf32> to vector<8x1xf32>
    %63 = vector.extract_strided_slice %16 {offsets = [2, 0], sizes = [1, 8], strides = [1, 1]} : vector<16x8xf32> to vector<1x8xf32>
    %64 = vector.broadcast %62 : vector<8x1xf32> to vector<8x8xf32>
    %65 = vector.broadcast %63 : vector<1x8xf32> to vector<8x8xf32>
    %66 = arith.addf %64, %65 : vector<8x8xf32>
    %cst_38 = arith.constant 2.000000e+00 : f32
    %67 = vector.broadcast %cst_38 : f32 to vector<8x8xf32>
    %68 = arith.mulf %67, %61 : vector<8x8xf32>
    %69 = arith.subf %66, %68 : vector<8x8xf32>
    %cst_39 = arith.constant 0.000000e+00 : f32
    %70 = vector.broadcast %cst_39 : f32 to vector<8x8xf32>
    %71 = arith.maximumf %69, %70 : vector<8x8xf32>
    %72 = math.sqrt %71 : vector<8x8xf32>
    %73 = arith.addf %58, %72 : vector<8x8xf32>
    %74 = vector.extract_strided_slice %10 {offsets = [0, 9], sizes = [8, 3], strides = [1, 1]} : vector<8x48xf32> to vector<8x3xf32>
    %75 = vector.extract_strided_slice %12 {offsets = [0, 9], sizes = [8, 3], strides = [1, 1]} : vector<8x48xf32> to vector<8x3xf32>
    %cst_40 = arith.constant dense<0.000000e+00> : vector<8x8xf32>
    %76 = tpu.matmul %74, %75, %cst_40 {dimension_numbers = #tpu.dot_dimension_numbers<[1], [1], [0], [0], [0, 0, 1, 0], [], []>} : vector<8x3xf32>, vector<8x3xf32>, vector<8x8xf32> -> vector<8x8xf32>
    %77 = vector.extract_strided_slice %14 {offsets = [0, 3], sizes = [8, 1], strides = [1, 1]} : vector<8x16xf32> to vector<8x1xf32>
    %78 = vector.extract_strided_slice %16 {offsets = [3, 0], sizes = [1, 8], strides = [1, 1]} : vector<16x8xf32> to vector<1x8xf32>
    %79 = vector.broadcast %77 : vector<8x1xf32> to vector<8x8xf32>
    %80 = vector.broadcast %78 : vector<1x8xf32> to vector<8x8xf32>
    %81 = arith.addf %79, %80 : vector<8x8xf32>
    %cst_41 = arith.constant 2.000000e+00 : f32
    %82 = vector.broadcast %cst_41 : f32 to vector<8x8xf32>
    %83 = arith.mulf %82, %76 : vector<8x8xf32>
    %84 = arith.subf %81, %83 : vector<8x8xf32>
    %cst_42 = arith.constant 0.000000e+00 : f32
    %85 = vector.broadcast %cst_42 : f32 to vector<8x8xf32>
    %86 = arith.maximumf %84, %85 : vector<8x8xf32>
    %87 = math.sqrt %86 : vector<8x8xf32>
    %88 = arith.addf %73, %87 : vector<8x8xf32>
    %c0_43 = arith.constant 0 : index
    %89 = memref.load %arg3[%c0_43] : memref<4xf32, #tpu.memory_space<smem>>
    %90 = arith.addf %25, %27 : vector<8x8xf32>
    %cst_44 = arith.constant 0.117851131 : f32
    %91 = arith.mulf %cst_44, %89 : f32
    %92 = vector.broadcast %91 : f32 to vector<8x8xf32>
    %93 = arith.mulf %92, %88 : vector<8x8xf32>
    %94 = arith.subf %90, %93 : vector<8x8xf32>
    %cst_45 = arith.constant 0.577350259 : f32
    %95 = vector.broadcast %cst_45 : f32 to vector<8x8xf32>
    %96 = arith.mulf %94, %95 : vector<8x8xf32>
    %c0_46 = arith.constant 0 : index
    %c0_47 = arith.constant 0 : index
    %97 = vector.load %arg14[%c0_46, %c0_47] : memref<8x4xf32, #tpu.memory_space<vmem>>, vector<8x1xf32>
    %cst_48 = arith.constant dense<0xFF800000> : vector<8xf32>
    %98 = vector.multi_reduction <maximumf>, %96, %cst_48 [1] : vector<8x8xf32> to vector<8xf32>
    %99 = vector.shape_cast %98 : vector<8xf32> to vector<8x1xf32>
    %100 = arith.maximumf %97, %99 : vector<8x1xf32>
    %101 = arith.subf %97, %100 : vector<8x1xf32>
    %102 = math.exp %101 : vector<8x1xf32>
    %103 = vector.broadcast %100 : vector<8x1xf32> to vector<8x8xf32>
    %104 = arith.subf %96, %103 : vector<8x8xf32>
    %105 = math.exp %104 : vector<8x8xf32>
    %c0_49 = arith.constant 0 : index
    %c0_50 = arith.constant 0 : index
    %106 = vector.load %arg15[%c0_49, %c0_50] : memref<8x4xf32, #tpu.memory_space<vmem>>, vector<8x1xf32>
    %107 = arith.mulf %102, %106 : vector<8x1xf32>
    %cst_51 = arith.constant dense<0.000000e+00> : vector<8xf32>
    %108 = vector.multi_reduction <add>, %105, %cst_51 [1] : vector<8x8xf32> to vector<8xf32>
    %109 = vector.shape_cast %108 : vector<8xf32> to vector<8x1xf32>
    %110 = arith.addf %107, %109 : vector<8x1xf32>
    %c0_52 = arith.constant 0 : index
    %c0_53 = arith.constant 0 : index
    %111 = vector.load %arg15[%c0_52, %c0_53] : memref<8x4xf32, #tpu.memory_space<vmem>>, vector<8x1xf32>
    tpu.vector_store %arg15[%c0_52, %c0_53], %110 {strides = array<i32>} : memref<8x4xf32, #tpu.memory_space<vmem>>, vector<8x1xf32>,
    %c0_54 = arith.constant 0 : index
    %c0_55 = arith.constant 0 : index
    %112 = vector.load %arg14[%c0_54, %c0_55] : memref<8x4xf32, #tpu.memory_space<vmem>>, vector<8x1xf32>
    tpu.vector_store %arg14[%c0_54, %c0_55], %100 {strides = array<i32>} : memref<8x4xf32, #tpu.memory_space<vmem>>, vector<8x1xf32>,
    %c0_56 = arith.constant 0 : index
    %c0_57 = arith.constant 0 : index
    %113 = vector.load %arg16[%c0_56, %c0_57] : memref<8x160xf32, #tpu.memory_space<vmem>>, vector<8x40xf32>
    %114 = vector.broadcast %102 : vector<8x1xf32> to vector<8x40xf32>
    %115 = arith.mulf %114, %113 : vector<8x40xf32>
    %116 = vector.extract_strided_slice %8 {offsets = [0, 0], sizes = [8, 40], strides = [1, 1]} : vector<8x160xf32> to vector<8x40xf32>
    %cst_58 = arith.constant dense<0.000000e+00> : vector<8x40xf32>
    %117 = tpu.matmul %105, %116, %cst_58 {dimension_numbers = #tpu.dot_dimension_numbers<[1], [0], [0], [1], [0, 0, 1, 1], [], []>} : vector<8x8xf32>, vector<8x40xf32>, vector<8x40xf32> -> vector<8x40xf32>
    %118 = arith.addf %115, %117 : vector<8x40xf32>
    %c0_59 = arith.constant 0 : index
    %c0_60 = arith.constant 0 : index
    %119 = vector.load %arg16[%c0_59, %c0_60] : memref<8x160xf32, #tpu.memory_space<vmem>>, vector<8x40xf32>
    tpu.vector_store %arg16[%c0_59, %c0_60], %118 {strides = array<i32>} : memref<8x160xf32, #tpu.memory_space<vmem>>, vector<8x40xf32>,
    %120 = vector.extract_strided_slice %4 {offsets = [0, 16], sizes = [8, 16], strides = [1, 1]} : vector<8x64xf32> to vector<8x16xf32>
    %121 = vector.extract_strided_slice %6 {offsets = [0, 16], sizes = [8, 16], strides = [1, 1]} : vector<8x64xf32> to vector<8x16xf32>
    %cst_61 = arith.constant dense<0.000000e+00> : vector<8x8xf32>
    %122 = tpu.matmul %120, %121, %cst_61 {dimension_numbers = #tpu.dot_dimension_numbers<[1], [1], [0], [0], [0, 0, 1, 0], [], []>} : vector<8x16xf32>, vector<8x16xf32>, vector<8x8xf32> -> vector<8x8xf32>
    %cst_62 = arith.constant 2.500000e-01 : f32
    %123 = vector.broadcast %cst_62 : f32 to vector<8x8xf32>
    %124 = arith.mulf %122, %123 : vector<8x8xf32>
    %125 = vector.extract_strided_slice %18 {offsets = [1, 0, 0], sizes = [1, 8, 8], strides = [1, 1, 1]} : vector<4x8x8xf32> to vector<1x8x8xf32>
    %126 = vector.shape_cast %125 : vector<1x8x8xf32> to vector<8x8xf32>
    %cst_63 = arith.constant 0.000000e+00 : f32
    %127 = vector.broadcast %cst_63 : f32 to vector<8x8xf32>
    %128 = vector.extract_strided_slice %10 {offsets = [0, 12], sizes = [8, 3], strides = [1, 1]} : vector<8x48xf32> to vector<8x3xf32>
    %129 = vector.extract_strided_slice %12 {offsets = [0, 12], sizes = [8, 3], strides = [1, 1]} : vector<8x48xf32> to vector<8x3xf32>
    %cst_64 = arith.constant dense<0.000000e+00> : vector<8x8xf32>
    %130 = tpu.matmul %128, %129, %cst_64 {dimension_numbers = #tpu.dot_dimension_numbers<[1], [1], [0], [0], [0, 0, 1, 0], [], []>} : vector<8x3xf32>, vector<8x3xf32>, vector<8x8xf32> -> vector<8x8xf32>
    %131 = vector.extract_strided_slice %14 {offsets = [0, 4], sizes = [8, 1], strides = [1, 1]} : vector<8x16xf32> to vector<8x1xf32>
    %132 = vector.extract_strided_slice %16 {offsets = [4, 0], sizes = [1, 8], strides = [1, 1]} : vector<16x8xf32> to vector<1x8xf32>
    %133 = vector.broadcast %131 : vector<8x1xf32> to vector<8x8xf32>
    %134 = vector.broadcast %132 : vector<1x8xf32> to vector<8x8xf32>
    %135 = arith.addf %133, %134 : vector<8x8xf32>
    %cst_65 = arith.constant 2.000000e+00 : f32
    %136 = vector.broadcast %cst_65 : f32 to vector<8x8xf32>
    %137 = arith.mulf %136, %130 : vector<8x8xf32>
    %138 = arith.subf %135, %137 : vector<8x8xf32>
    %cst_66 = arith.constant 0.000000e+00 : f32
    %139 = vector.broadcast %cst_66 : f32 to vector<8x8xf32>
    %140 = arith.maximumf %138, %139 : vector<8x8xf32>
    %141 = math.sqrt %140 : vector<8x8xf32>
    %142 = arith.addf %127, %141 : vector<8x8xf32>
    %143 = vector.extract_strided_slice %10 {offsets = [0, 15], sizes = [8, 3], strides = [1, 1]} : vector<8x48xf32> to vector<8x3xf32>
    %144 = vector.extract_strided_slice %12 {offsets = [0, 15], sizes = [8, 3], strides = [1, 1]} : vector<8x48xf32> to vector<8x3xf32>
    %cst_67 = arith.constant dense<0.000000e+00> : vector<8x8xf32>
    %145 = tpu.matmul %143, %144, %cst_67 {dimension_numbers = #tpu.dot_dimension_numbers<[1], [1], [0], [0], [0, 0, 1, 0], [], []>} : vector<8x3xf32>, vector<8x3xf32>, vector<8x8xf32> -> vector<8x8xf32>
    %146 = vector.extract_strided_slice %14 {offsets = [0, 5], sizes = [8, 1], strides = [1, 1]} : vector<8x16xf32> to vector<8x1xf32>
    %147 = vector.extract_strided_slice %16 {offsets = [5, 0], sizes = [1, 8], strides = [1, 1]} : vector<16x8xf32> to vector<1x8xf32>
    %148 = vector.broadcast %146 : vector<8x1xf32> to vector<8x8xf32>
    %149 = vector.broadcast %147 : vector<1x8xf32> to vector<8x8xf32>
    %150 = arith.addf %148, %149 : vector<8x8xf32>
    %cst_68 = arith.constant 2.000000e+00 : f32
    %151 = vector.broadcast %cst_68 : f32 to vector<8x8xf32>
    %152 = arith.mulf %151, %145 : vector<8x8xf32>
    %153 = arith.subf %150, %152 : vector<8x8xf32>
    %cst_69 = arith.constant 0.000000e+00 : f32
    %154 = vector.broadcast %cst_69 : f32 to vector<8x8xf32>
    %155 = arith.maximumf %153, %154 : vector<8x8xf32>
    %156 = math.sqrt %155 : vector<8x8xf32>
    %157 = arith.addf %142, %156 : vector<8x8xf32>
    %158 = vector.extract_strided_slice %10 {offsets = [0, 18], sizes = [8, 3], strides = [1, 1]} : vector<8x48xf32> to vector<8x3xf32>
    %159 = vector.extract_strided_slice %12 {offsets = [0, 18], sizes = [8, 3], strides = [1, 1]} : vector<8x48xf32> to vector<8x3xf32>
    %cst_70 = arith.constant dense<0.000000e+00> : vector<8x8xf32>
    %160 = tpu.matmul %158, %159, %cst_70 {dimension_numbers = #tpu.dot_dimension_numbers<[1], [1], [0], [0], [0, 0, 1, 0], [], []>} : vector<8x3xf32>, vector<8x3xf32>, vector<8x8xf32> -> vector<8x8xf32>
    %161 = vector.extract_strided_slice %14 {offsets = [0, 6], sizes = [8, 1], strides = [1, 1]} : vector<8x16xf32> to vector<8x1xf32>
    %162 = vector.extract_strided_slice %16 {offsets = [6, 0], sizes = [1, 8], strides = [1, 1]} : vector<16x8xf32> to vector<1x8xf32>
    %163 = vector.broadcast %161 : vector<8x1xf32> to vector<8x8xf32>
    %164 = vector.broadcast %162 : vector<1x8xf32> to vector<8x8xf32>
    %165 = arith.addf %163, %164 : vector<8x8xf32>
    %cst_71 = arith.constant 2.000000e+00 : f32
    %166 = vector.broadcast %cst_71 : f32 to vector<8x8xf32>
    %167 = arith.mulf %166, %160 : vector<8x8xf32>
    %168 = arith.subf %165, %167 : vector<8x8xf32>
    %cst_72 = arith.constant 0.000000e+00 : f32
    %169 = vector.broadcast %cst_72 : f32 to vector<8x8xf32>
    %170 = arith.maximumf %168, %169 : vector<8x8xf32>
    %171 = math.sqrt %170 : vector<8x8xf32>
    %172 = arith.addf %157, %171 : vector<8x8xf32>
    %173 = vector.extract_strided_slice %10 {offsets = [0, 21], sizes = [8, 3], strides = [1, 1]} : vector<8x48xf32> to vector<8x3xf32>
    %174 = vector.extract_strided_slice %12 {offsets = [0, 21], sizes = [8, 3], strides = [1, 1]} : vector<8x48xf32> to vector<8x3xf32>
    %cst_73 = arith.constant dense<0.000000e+00> : vector<8x8xf32>
    %175 = tpu.matmul %173, %174, %cst_73 {dimension_numbers = #tpu.dot_dimension_numbers<[1], [1], [0], [0], [0, 0, 1, 0], [], []>} : vector<8x3xf32>, vector<8x3xf32>, vector<8x8xf32> -> vector<8x8xf32>
    %176 = vector.extract_strided_slice %14 {offsets = [0, 7], sizes = [8, 1], strides = [1, 1]} : vector<8x16xf32> to vector<8x1xf32>
    %177 = vector.extract_strided_slice %16 {offsets = [7, 0], sizes = [1, 8], strides = [1, 1]} : vector<16x8xf32> to vector<1x8xf32>
    %178 = vector.broadcast %176 : vector<8x1xf32> to vector<8x8xf32>
    %179 = vector.broadcast %177 : vector<1x8xf32> to vector<8x8xf32>
    %180 = arith.addf %178, %179 : vector<8x8xf32>
    %cst_74 = arith.constant 2.000000e+00 : f32
    %181 = vector.broadcast %cst_74 : f32 to vector<8x8xf32>
    %182 = arith.mulf %181, %175 : vector<8x8xf32>
    %183 = arith.subf %180, %182 : vector<8x8xf32>
    %cst_75 = arith.constant 0.000000e+00 : f32
    %184 = vector.broadcast %cst_75 : f32 to vector<8x8xf32>
    %185 = arith.maximumf %183, %184 : vector<8x8xf32>
    %186 = math.sqrt %185 : vector<8x8xf32>
    %187 = arith.addf %172, %186 : vector<8x8xf32>
    %c1 = arith.constant 1 : index
    %188 = memref.load %arg3[%c1] : memref<4xf32, #tpu.memory_space<smem>>
    %189 = arith.addf %124, %126 : vector<8x8xf32>
    %cst_76 = arith.constant 0.117851131 : f32
    %190 = arith.mulf %cst_76, %188 : f32
    %191 = vector.broadcast %190 : f32 to vector<8x8xf32>
    %192 = arith.mulf %191, %187 : vector<8x8xf32>
    %193 = arith.subf %189, %192 : vector<8x8xf32>
    %cst_77 = arith.constant 0.577350259 : f32
    %194 = vector.broadcast %cst_77 : f32 to vector<8x8xf32>
    %195 = arith.mulf %193, %194 : vector<8x8xf32>
    %c0_78 = arith.constant 0 : index
    %c1_79 = arith.constant 1 : index
    %196 = vector.load %arg14[%c0_78, %c1_79] : memref<8x4xf32, #tpu.memory_space<vmem>>, vector<8x1xf32>
    %cst_80 = arith.constant dense<0xFF800000> : vector<8xf32>
    %197 = vector.multi_reduction <maximumf>, %195, %cst_80 [1] : vector<8x8xf32> to vector<8xf32>
    %198 = vector.shape_cast %197 : vector<8xf32> to vector<8x1xf32>
    %199 = arith.maximumf %196, %198 : vector<8x1xf32>
    %200 = arith.subf %196, %199 : vector<8x1xf32>
    %201 = math.exp %200 : vector<8x1xf32>
    %202 = vector.broadcast %199 : vector<8x1xf32> to vector<8x8xf32>
    %203 = arith.subf %195, %202 : vector<8x8xf32>
    %204 = math.exp %203 : vector<8x8xf32>
    %c0_81 = arith.constant 0 : index
    %c1_82 = arith.constant 1 : index
    %205 = vector.load %arg15[%c0_81, %c1_82] : memref<8x4xf32, #tpu.memory_space<vmem>>, vector<8x1xf32>
    %206 = arith.mulf %201, %205 : vector<8x1xf32>
    %cst_83 = arith.constant dense<0.000000e+00> : vector<8xf32>
    %207 = vector.multi_reduction <add>, %204, %cst_83 [1] : vector<8x8xf32> to vector<8xf32>
    %208 = vector.shape_cast %207 : vector<8xf32> to vector<8x1xf32>
    %209 = arith.addf %206, %208 : vector<8x1xf32>
    %c0_84 = arith.constant 0 : index
    %c1_85 = arith.constant 1 : index
    %210 = vector.load %arg15[%c0_84, %c1_85] : memref<8x4xf32, #tpu.memory_space<vmem>>, vector<8x1xf32>
    tpu.vector_store %arg15[%c0_84, %c1_85], %209 {strides = array<i32>} : memref<8x4xf32, #tpu.memory_space<vmem>>, vector<8x1xf32>,
    %c0_86 = arith.constant 0 : index
    %c1_87 = arith.constant 1 : index
    %211 = vector.load %arg14[%c0_86, %c1_87] : memref<8x4xf32, #tpu.memory_space<vmem>>, vector<8x1xf32>
    tpu.vector_store %arg14[%c0_86, %c1_87], %199 {strides = array<i32>} : memref<8x4xf32, #tpu.memory_space<vmem>>, vector<8x1xf32>,
    %c0_88 = arith.constant 0 : index
    %c40 = arith.constant 40 : index
    %212 = vector.load %arg16[%c0_88, %c40] : memref<8x160xf32, #tpu.memory_space<vmem>>, vector<8x40xf32>
    %213 = vector.broadcast %201 : vector<8x1xf32> to vector<8x40xf32>
    %214 = arith.mulf %213, %212 : vector<8x40xf32>
    %215 = vector.extract_strided_slice %8 {offsets = [0, 40], sizes = [8, 40], strides = [1, 1]} : vector<8x160xf32> to vector<8x40xf32>
    %cst_89 = arith.constant dense<0.000000e+00> : vector<8x40xf32>
    %216 = tpu.matmul %204, %215, %cst_89 {dimension_numbers = #tpu.dot_dimension_numbers<[1], [0], [0], [1], [0, 0, 1, 1], [], []>} : vector<8x8xf32>, vector<8x40xf32>, vector<8x40xf32> -> vector<8x40xf32>
    %217 = arith.addf %214, %216 : vector<8x40xf32>
    %c0_90 = arith.constant 0 : index
    %c40_91 = arith.constant 40 : index
    %218 = vector.load %arg16[%c0_90, %c40_91] : memref<8x160xf32, #tpu.memory_space<vmem>>, vector<8x40xf32>
    tpu.vector_store %arg16[%c0_90, %c40_91], %217 {strides = array<i32>} : memref<8x160xf32, #tpu.memory_space<vmem>>, vector<8x40xf32>,
    %219 = vector.extract_strided_slice %4 {offsets = [0, 32], sizes = [8, 16], strides = [1, 1]} : vector<8x64xf32> to vector<8x16xf32>
    %220 = vector.extract_strided_slice %6 {offsets = [0, 32], sizes = [8, 16], strides = [1, 1]} : vector<8x64xf32> to vector<8x16xf32>
    %cst_92 = arith.constant dense<0.000000e+00> : vector<8x8xf32>
    %221 = tpu.matmul %219, %220, %cst_92 {dimension_numbers = #tpu.dot_dimension_numbers<[1], [1], [0], [0], [0, 0, 1, 0], [], []>} : vector<8x16xf32>, vector<8x16xf32>, vector<8x8xf32> -> vector<8x8xf32>
    %cst_93 = arith.constant 2.500000e-01 : f32
    %222 = vector.broadcast %cst_93 : f32 to vector<8x8xf32>
    %223 = arith.mulf %221, %222 : vector<8x8xf32>
    %224 = vector.extract_strided_slice %18 {offsets = [2, 0, 0], sizes = [1, 8, 8], strides = [1, 1, 1]} : vector<4x8x8xf32> to vector<1x8x8xf32>
    %225 = vector.shape_cast %224 : vector<1x8x8xf32> to vector<8x8xf32>
    %cst_94 = arith.constant 0.000000e+00 : f32
    %226 = vector.broadcast %cst_94 : f32 to vector<8x8xf32>
    %227 = vector.extract_strided_slice %10 {offsets = [0, 24], sizes = [8, 3], strides = [1, 1]} : vector<8x48xf32> to vector<8x3xf32>
    %228 = vector.extract_strided_slice %12 {offsets = [0, 24], sizes = [8, 3], strides = [1, 1]} : vector<8x48xf32> to vector<8x3xf32>
    %cst_95 = arith.constant dense<0.000000e+00> : vector<8x8xf32>
    %229 = tpu.matmul %227, %228, %cst_95 {dimension_numbers = #tpu.dot_dimension_numbers<[1], [1], [0], [0], [0, 0, 1, 0], [], []>} : vector<8x3xf32>, vector<8x3xf32>, vector<8x8xf32> -> vector<8x8xf32>
    %230 = vector.extract_strided_slice %14 {offsets = [0, 8], sizes = [8, 1], strides = [1, 1]} : vector<8x16xf32> to vector<8x1xf32>
    %231 = vector.extract_strided_slice %16 {offsets = [8, 0], sizes = [1, 8], strides = [1, 1]} : vector<16x8xf32> to vector<1x8xf32>
    %232 = vector.broadcast %230 : vector<8x1xf32> to vector<8x8xf32>
    %233 = vector.broadcast %231 : vector<1x8xf32> to vector<8x8xf32>
    %234 = arith.addf %232, %233 : vector<8x8xf32>
    %cst_96 = arith.constant 2.000000e+00 : f32
    %235 = vector.broadcast %cst_96 : f32 to vector<8x8xf32>
    %236 = arith.mulf %235, %229 : vector<8x8xf32>
    %237 = arith.subf %234, %236 : vector<8x8xf32>
    %cst_97 = arith.constant 0.000000e+00 : f32
    %238 = vector.broadcast %cst_97 : f32 to vector<8x8xf32>
    %239 = arith.maximumf %237, %238 : vector<8x8xf32>
    %240 = math.sqrt %239 : vector<8x8xf32>
    %241 = arith.addf %226, %240 : vector<8x8xf32>
    %242 = vector.extract_strided_slice %10 {offsets = [0, 27], sizes = [8, 3], strides = [1, 1]} : vector<8x48xf32> to vector<8x3xf32>
    %243 = vector.extract_strided_slice %12 {offsets = [0, 27], sizes = [8, 3], strides = [1, 1]} : vector<8x48xf32> to vector<8x3xf32>
    %cst_98 = arith.constant dense<0.000000e+00> : vector<8x8xf32>
    %244 = tpu.matmul %242, %243, %cst_98 {dimension_numbers = #tpu.dot_dimension_numbers<[1], [1], [0], [0], [0, 0, 1, 0], [], []>} : vector<8x3xf32>, vector<8x3xf32>, vector<8x8xf32> -> vector<8x8xf32>
    %245 = vector.extract_strided_slice %14 {offsets = [0, 9], sizes = [8, 1], strides = [1, 1]} : vector<8x16xf32> to vector<8x1xf32>
    %246 = vector.extract_strided_slice %16 {offsets = [9, 0], sizes = [1, 8], strides = [1, 1]} : vector<16x8xf32> to vector<1x8xf32>
    %247 = vector.broadcast %245 : vector<8x1xf32> to vector<8x8xf32>
    %248 = vector.broadcast %246 : vector<1x8xf32> to vector<8x8xf32>
    %249 = arith.addf %247, %248 : vector<8x8xf32>
    %cst_99 = arith.constant 2.000000e+00 : f32
    %250 = vector.broadcast %cst_99 : f32 to vector<8x8xf32>
    %251 = arith.mulf %250, %244 : vector<8x8xf32>
    %252 = arith.subf %249, %251 : vector<8x8xf32>
    %cst_100 = arith.constant 0.000000e+00 : f32
    %253 = vector.broadcast %cst_100 : f32 to vector<8x8xf32>
    %254 = arith.maximumf %252, %253 : vector<8x8xf32>
    %255 = math.sqrt %254 : vector<8x8xf32>
    %256 = arith.addf %241, %255 : vector<8x8xf32>
    %257 = vector.extract_strided_slice %10 {offsets = [0, 30], sizes = [8, 3], strides = [1, 1]} : vector<8x48xf32> to vector<8x3xf32>
    %258 = vector.extract_strided_slice %12 {offsets = [0, 30], sizes = [8, 3], strides = [1, 1]} : vector<8x48xf32> to vector<8x3xf32>
    %cst_101 = arith.constant dense<0.000000e+00> : vector<8x8xf32>
    %259 = tpu.matmul %257, %258, %cst_101 {dimension_numbers = #tpu.dot_dimension_numbers<[1], [1], [0], [0], [0, 0, 1, 0], [], []>} : vector<8x3xf32>, vector<8x3xf32>, vector<8x8xf32> -> vector<8x8xf32>
    %260 = vector.extract_strided_slice %14 {offsets = [0, 10], sizes = [8, 1], strides = [1, 1]} : vector<8x16xf32> to vector<8x1xf32>
    %261 = vector.extract_strided_slice %16 {offsets = [10, 0], sizes = [1, 8], strides = [1, 1]} : vector<16x8xf32> to vector<1x8xf32>
    %262 = vector.broadcast %260 : vector<8x1xf32> to vector<8x8xf32>
    %263 = vector.broadcast %261 : vector<1x8xf32> to vector<8x8xf32>
    %264 = arith.addf %262, %263 : vector<8x8xf32>
    %cst_102 = arith.constant 2.000000e+00 : f32
    %265 = vector.broadcast %cst_102 : f32 to vector<8x8xf32>
    %266 = arith.mulf %265, %259 : vector<8x8xf32>
    %267 = arith.subf %264, %266 : vector<8x8xf32>
    %cst_103 = arith.constant 0.000000e+00 : f32
    %268 = vector.broadcast %cst_103 : f32 to vector<8x8xf32>
    %269 = arith.maximumf %267, %268 : vector<8x8xf32>
    %270 = math.sqrt %269 : vector<8x8xf32>
    %271 = arith.addf %256, %270 : vector<8x8xf32>
    %272 = vector.extract_strided_slice %10 {offsets = [0, 33], sizes = [8, 3], strides = [1, 1]} : vector<8x48xf32> to vector<8x3xf32>
    %273 = vector.extract_strided_slice %12 {offsets = [0, 33], sizes = [8, 3], strides = [1, 1]} : vector<8x48xf32> to vector<8x3xf32>
    %cst_104 = arith.constant dense<0.000000e+00> : vector<8x8xf32>
    %274 = tpu.matmul %272, %273, %cst_104 {dimension_numbers = #tpu.dot_dimension_numbers<[1], [1], [0], [0], [0, 0, 1, 0], [], []>} : vector<8x3xf32>, vector<8x3xf32>, vector<8x8xf32> -> vector<8x8xf32>
    %275 = vector.extract_strided_slice %14 {offsets = [0, 11], sizes = [8, 1], strides = [1, 1]} : vector<8x16xf32> to vector<8x1xf32>
    %276 = vector.extract_strided_slice %16 {offsets = [11, 0], sizes = [1, 8], strides = [1, 1]} : vector<16x8xf32> to vector<1x8xf32>
    %277 = vector.broadcast %275 : vector<8x1xf32> to vector<8x8xf32>
    %278 = vector.broadcast %276 : vector<1x8xf32> to vector<8x8xf32>
    %279 = arith.addf %277, %278 : vector<8x8xf32>
    %cst_105 = arith.constant 2.000000e+00 : f32
    %280 = vector.broadcast %cst_105 : f32 to vector<8x8xf32>
    %281 = arith.mulf %280, %274 : vector<8x8xf32>
    %282 = arith.subf %279, %281 : vector<8x8xf32>
    %cst_106 = arith.constant 0.000000e+00 : f32
    %283 = vector.broadcast %cst_106 : f32 to vector<8x8xf32>
    %284 = arith.maximumf %282, %283 : vector<8x8xf32>
    %285 = math.sqrt %284 : vector<8x8xf32>
    %286 = arith.addf %271, %285 : vector<8x8xf32>
    %c2 = arith.constant 2 : index
    %287 = memref.load %arg3[%c2] : memref<4xf32, #tpu.memory_space<smem>>
    %288 = arith.addf %223, %225 : vector<8x8xf32>
    %cst_107 = arith.constant 0.117851131 : f32
    %289 = arith.mulf %cst_107, %287 : f32
    %290 = vector.broadcast %289 : f32 to vector<8x8xf32>
    %291 = arith.mulf %290, %286 : vector<8x8xf32>
    %292 = arith.subf %288, %291 : vector<8x8xf32>
    %cst_108 = arith.constant 0.577350259 : f32
    %293 = vector.broadcast %cst_108 : f32 to vector<8x8xf32>
    %294 = arith.mulf %292, %293 : vector<8x8xf32>
    %c0_109 = arith.constant 0 : index
    %c2_110 = arith.constant 2 : index
    %295 = vector.load %arg14[%c0_109, %c2_110] : memref<8x4xf32, #tpu.memory_space<vmem>>, vector<8x1xf32>
    %cst_111 = arith.constant dense<0xFF800000> : vector<8xf32>
    %296 = vector.multi_reduction <maximumf>, %294, %cst_111 [1] : vector<8x8xf32> to vector<8xf32>
    %297 = vector.shape_cast %296 : vector<8xf32> to vector<8x1xf32>
    %298 = arith.maximumf %295, %297 : vector<8x1xf32>
    %299 = arith.subf %295, %298 : vector<8x1xf32>
    %300 = math.exp %299 : vector<8x1xf32>
    %301 = vector.broadcast %298 : vector<8x1xf32> to vector<8x8xf32>
    %302 = arith.subf %294, %301 : vector<8x8xf32>
    %303 = math.exp %302 : vector<8x8xf32>
    %c0_112 = arith.constant 0 : index
    %c2_113 = arith.constant 2 : index
    %304 = vector.load %arg15[%c0_112, %c2_113] : memref<8x4xf32, #tpu.memory_space<vmem>>, vector<8x1xf32>
    %305 = arith.mulf %300, %304 : vector<8x1xf32>
    %cst_114 = arith.constant dense<0.000000e+00> : vector<8xf32>
    %306 = vector.multi_reduction <add>, %303, %cst_114 [1] : vector<8x8xf32> to vector<8xf32>
    %307 = vector.shape_cast %306 : vector<8xf32> to vector<8x1xf32>
    %308 = arith.addf %305, %307 : vector<8x1xf32>
    %c0_115 = arith.constant 0 : index
    %c2_116 = arith.constant 2 : index
    %309 = vector.load %arg15[%c0_115, %c2_116] : memref<8x4xf32, #tpu.memory_space<vmem>>, vector<8x1xf32>
    tpu.vector_store %arg15[%c0_115, %c2_116], %308 {strides = array<i32>} : memref<8x4xf32, #tpu.memory_space<vmem>>, vector<8x1xf32>,
    %c0_117 = arith.constant 0 : index
    %c2_118 = arith.constant 2 : index
    %310 = vector.load %arg14[%c0_117, %c2_118] : memref<8x4xf32, #tpu.memory_space<vmem>>, vector<8x1xf32>
    tpu.vector_store %arg14[%c0_117, %c2_118], %298 {strides = array<i32>} : memref<8x4xf32, #tpu.memory_space<vmem>>, vector<8x1xf32>,
    %c0_119 = arith.constant 0 : index
    %c80 = arith.constant 80 : index
    %311 = vector.load %arg16[%c0_119, %c80] : memref<8x160xf32, #tpu.memory_space<vmem>>, vector<8x40xf32>
    %312 = vector.broadcast %300 : vector<8x1xf32> to vector<8x40xf32>
    %313 = arith.mulf %312, %311 : vector<8x40xf32>
    %314 = vector.extract_strided_slice %8 {offsets = [0, 80], sizes = [8, 40], strides = [1, 1]} : vector<8x160xf32> to vector<8x40xf32>
    %cst_120 = arith.constant dense<0.000000e+00> : vector<8x40xf32>
    %315 = tpu.matmul %303, %314, %cst_120 {dimension_numbers = #tpu.dot_dimension_numbers<[1], [0], [0], [1], [0, 0, 1, 1], [], []>} : vector<8x8xf32>, vector<8x40xf32>, vector<8x40xf32> -> vector<8x40xf32>
    %316 = arith.addf %313, %315 : vector<8x40xf32>
    %c0_121 = arith.constant 0 : index
    %c80_122 = arith.constant 80 : index
    %317 = vector.load %arg16[%c0_121, %c80_122] : memref<8x160xf32, #tpu.memory_space<vmem>>, vector<8x40xf32>
    tpu.vector_store %arg16[%c0_121, %c80_122], %316 {strides = array<i32>} : memref<8x160xf32, #tpu.memory_space<vmem>>, vector<8x40xf32>,
    %318 = vector.extract_strided_slice %4 {offsets = [0, 48], sizes = [8, 16], strides = [1, 1]} : vector<8x64xf32> to vector<8x16xf32>
    %319 = vector.extract_strided_slice %6 {offsets = [0, 48], sizes = [8, 16], strides = [1, 1]} : vector<8x64xf32> to vector<8x16xf32>
    %cst_123 = arith.constant dense<0.000000e+00> : vector<8x8xf32>
    %320 = tpu.matmul %318, %319, %cst_123 {dimension_numbers = #tpu.dot_dimension_numbers<[1], [1], [0], [0], [0, 0, 1, 0], [], []>} : vector<8x16xf32>, vector<8x16xf32>, vector<8x8xf32> -> vector<8x8xf32>
    %cst_124 = arith.constant 2.500000e-01 : f32
    %321 = vector.broadcast %cst_124 : f32 to vector<8x8xf32>
    %322 = arith.mulf %320, %321 : vector<8x8xf32>
    %323 = vector.extract_strided_slice %18 {offsets = [3, 0, 0], sizes = [1, 8, 8], strides = [1, 1, 1]} : vector<4x8x8xf32> to vector<1x8x8xf32>
    %324 = vector.shape_cast %323 : vector<1x8x8xf32> to vector<8x8xf32>
    %cst_125 = arith.constant 0.000000e+00 : f32
    %325 = vector.broadcast %cst_125 : f32 to vector<8x8xf32>
    %326 = vector.extract_strided_slice %10 {offsets = [0, 36], sizes = [8, 3], strides = [1, 1]} : vector<8x48xf32> to vector<8x3xf32>
    %327 = vector.extract_strided_slice %12 {offsets = [0, 36], sizes = [8, 3], strides = [1, 1]} : vector<8x48xf32> to vector<8x3xf32>
    %cst_126 = arith.constant dense<0.000000e+00> : vector<8x8xf32>
    %328 = tpu.matmul %326, %327, %cst_126 {dimension_numbers = #tpu.dot_dimension_numbers<[1], [1], [0], [0], [0, 0, 1, 0], [], []>} : vector<8x3xf32>, vector<8x3xf32>, vector<8x8xf32> -> vector<8x8xf32>
    %329 = vector.extract_strided_slice %14 {offsets = [0, 12], sizes = [8, 1], strides = [1, 1]} : vector<8x16xf32> to vector<8x1xf32>
    %330 = vector.extract_strided_slice %16 {offsets = [12, 0], sizes = [1, 8], strides = [1, 1]} : vector<16x8xf32> to vector<1x8xf32>
    %331 = vector.broadcast %329 : vector<8x1xf32> to vector<8x8xf32>
    %332 = vector.broadcast %330 : vector<1x8xf32> to vector<8x8xf32>
    %333 = arith.addf %331, %332 : vector<8x8xf32>
    %cst_127 = arith.constant 2.000000e+00 : f32
    %334 = vector.broadcast %cst_127 : f32 to vector<8x8xf32>
    %335 = arith.mulf %334, %328 : vector<8x8xf32>
    %336 = arith.subf %333, %335 : vector<8x8xf32>
    %cst_128 = arith.constant 0.000000e+00 : f32
    %337 = vector.broadcast %cst_128 : f32 to vector<8x8xf32>
    %338 = arith.maximumf %336, %337 : vector<8x8xf32>
    %339 = math.sqrt %338 : vector<8x8xf32>
    %340 = arith.addf %325, %339 : vector<8x8xf32>
    %341 = vector.extract_strided_slice %10 {offsets = [0, 39], sizes = [8, 3], strides = [1, 1]} : vector<8x48xf32> to vector<8x3xf32>
    %342 = vector.extract_strided_slice %12 {offsets = [0, 39], sizes = [8, 3], strides = [1, 1]} : vector<8x48xf32> to vector<8x3xf32>
    %cst_129 = arith.constant dense<0.000000e+00> : vector<8x8xf32>
    %343 = tpu.matmul %341, %342, %cst_129 {dimension_numbers = #tpu.dot_dimension_numbers<[1], [1], [0], [0], [0, 0, 1, 0], [], []>} : vector<8x3xf32>, vector<8x3xf32>, vector<8x8xf32> -> vector<8x8xf32>
    %344 = vector.extract_strided_slice %14 {offsets = [0, 13], sizes = [8, 1], strides = [1, 1]} : vector<8x16xf32> to vector<8x1xf32>
    %345 = vector.extract_strided_slice %16 {offsets = [13, 0], sizes = [1, 8], strides = [1, 1]} : vector<16x8xf32> to vector<1x8xf32>
    %346 = vector.broadcast %344 : vector<8x1xf32> to vector<8x8xf32>
    %347 = vector.broadcast %345 : vector<1x8xf32> to vector<8x8xf32>
    %348 = arith.addf %346, %347 : vector<8x8xf32>
    %cst_130 = arith.constant 2.000000e+00 : f32
    %349 = vector.broadcast %cst_130 : f32 to vector<8x8xf32>
    %350 = arith.mulf %349, %343 : vector<8x8xf32>
    %351 = arith.subf %348, %350 : vector<8x8xf32>
    %cst_131 = arith.constant 0.000000e+00 : f32
    %352 = vector.broadcast %cst_131 : f32 to vector<8x8xf32>
    %353 = arith.maximumf %351, %352 : vector<8x8xf32>
    %354 = math.sqrt %353 : vector<8x8xf32>
    %355 = arith.addf %340, %354 : vector<8x8xf32>
    %356 = vector.extract_strided_slice %10 {offsets = [0, 42], sizes = [8, 3], strides = [1, 1]} : vector<8x48xf32> to vector<8x3xf32>
    %357 = vector.extract_strided_slice %12 {offsets = [0, 42], sizes = [8, 3], strides = [1, 1]} : vector<8x48xf32> to vector<8x3xf32>
    %cst_132 = arith.constant dense<0.000000e+00> : vector<8x8xf32>
    %358 = tpu.matmul %356, %357, %cst_132 {dimension_numbers = #tpu.dot_dimension_numbers<[1], [1], [0], [0], [0, 0, 1, 0], [], []>} : vector<8x3xf32>, vector<8x3xf32>, vector<8x8xf32> -> vector<8x8xf32>
    %359 = vector.extract_strided_slice %14 {offsets = [0, 14], sizes = [8, 1], strides = [1, 1]} : vector<8x16xf32> to vector<8x1xf32>
    %360 = vector.extract_strided_slice %16 {offsets = [14, 0], sizes = [1, 8], strides = [1, 1]} : vector<16x8xf32> to vector<1x8xf32>
    %361 = vector.broadcast %359 : vector<8x1xf32> to vector<8x8xf32>
    %362 = vector.broadcast %360 : vector<1x8xf32> to vector<8x8xf32>
    %363 = arith.addf %361, %362 : vector<8x8xf32>
    %cst_133 = arith.constant 2.000000e+00 : f32
    %364 = vector.broadcast %cst_133 : f32 to vector<8x8xf32>
    %365 = arith.mulf %364, %358 : vector<8x8xf32>
    %366 = arith.subf %363, %365 : vector<8x8xf32>
    %cst_134 = arith.constant 0.000000e+00 : f32
    %367 = vector.broadcast %cst_134 : f32 to vector<8x8xf32>
    %368 = arith.maximumf %366, %367 : vector<8x8xf32>
    %369 = math.sqrt %368 : vector<8x8xf32>
    %370 = arith.addf %355, %369 : vector<8x8xf32>
    %371 = vector.extract_strided_slice %10 {offsets = [0, 45], sizes = [8, 3], strides = [1, 1]} : vector<8x48xf32> to vector<8x3xf32>
    %372 = vector.extract_strided_slice %12 {offsets = [0, 45], sizes = [8, 3], strides = [1, 1]} : vector<8x48xf32> to vector<8x3xf32>
    %cst_135 = arith.constant dense<0.000000e+00> : vector<8x8xf32>
    %373 = tpu.matmul %371, %372, %cst_135 {dimension_numbers = #tpu.dot_dimension_numbers<[1], [1], [0], [0], [0, 0, 1, 0], [], []>} : vector<8x3xf32>, vector<8x3xf32>, vector<8x8xf32> -> vector<8x8xf32>
    %374 = vector.extract_strided_slice %14 {offsets = [0, 15], sizes = [8, 1], strides = [1, 1]} : vector<8x16xf32> to vector<8x1xf32>
    %375 = vector.extract_strided_slice %16 {offsets = [15, 0], sizes = [1, 8], strides = [1, 1]} : vector<16x8xf32> to vector<1x8xf32>
    %376 = vector.broadcast %374 : vector<8x1xf32> to vector<8x8xf32>
    %377 = vector.broadcast %375 : vector<1x8xf32> to vector<8x8xf32>
    %378 = arith.addf %376, %377 : vector<8x8xf32>
    %cst_136 = arith.constant 2.000000e+00 : f32
    %379 = vector.broadcast %cst_136 : f32 to vector<8x8xf32>
    %380 = arith.mulf %379, %373 : vector<8x8xf32>
    %381 = arith.subf %378, %380 : vector<8x8xf32>
    %cst_137 = arith.constant 0.000000e+00 : f32
    %382 = vector.broadcast %cst_137 : f32 to vector<8x8xf32>
    %383 = arith.maximumf %381, %382 : vector<8x8xf32>
    %384 = math.sqrt %383 : vector<8x8xf32>
    %385 = arith.addf %370, %384 : vector<8x8xf32>
    %c3 = arith.constant 3 : index
    %386 = memref.load %arg3[%c3] : memref<4xf32, #tpu.memory_space<smem>>
    %387 = arith.addf %322, %324 : vector<8x8xf32>
    %cst_138 = arith.constant 0.117851131 : f32
    %388 = arith.mulf %cst_138, %386 : f32
    %389 = vector.broadcast %388 : f32 to vector<8x8xf32>
    %390 = arith.mulf %389, %385 : vector<8x8xf32>
    %391 = arith.subf %387, %390 : vector<8x8xf32>
    %cst_139 = arith.constant 0.577350259 : f32
    %392 = vector.broadcast %cst_139 : f32 to vector<8x8xf32>
    %393 = arith.mulf %391, %392 : vector<8x8xf32>
    %c0_140 = arith.constant 0 : index
    %c3_141 = arith.constant 3 : index
    %394 = vector.load %arg14[%c0_140, %c3_141] : memref<8x4xf32, #tpu.memory_space<vmem>>, vector<8x1xf32>
    %cst_142 = arith.constant dense<0xFF800000> : vector<8xf32>
    %395 = vector.multi_reduction <maximumf>, %393, %cst_142 [1] : vector<8x8xf32> to vector<8xf32>
    %396 = vector.shape_cast %395 : vector<8xf32> to vector<8x1xf32>
    %397 = arith.maximumf %394, %396 : vector<8x1xf32>
    %398 = arith.subf %394, %397 : vector<8x1xf32>
    %399 = math.exp %398 : vector<8x1xf32>
    %400 = vector.broadcast %397 : vector<8x1xf32> to vector<8x8xf32>
    %401 = arith.subf %393, %400 : vector<8x8xf32>
    %402 = math.exp %401 : vector<8x8xf32>
    %c0_143 = arith.constant 0 : index
    %c3_144 = arith.constant 3 : index
    %403 = vector.load %arg15[%c0_143, %c3_144] : memref<8x4xf32, #tpu.memory_space<vmem>>, vector<8x1xf32>
    %404 = arith.mulf %399, %403 : vector<8x1xf32>
    %cst_145 = arith.constant dense<0.000000e+00> : vector<8xf32>
    %405 = vector.multi_reduction <add>, %402, %cst_145 [1] : vector<8x8xf32> to vector<8xf32>
    %406 = vector.shape_cast %405 : vector<8xf32> to vector<8x1xf32>
    %407 = arith.addf %404, %406 : vector<8x1xf32>
    %c0_146 = arith.constant 0 : index
    %c3_147 = arith.constant 3 : index
    %408 = vector.load %arg15[%c0_146, %c3_147] : memref<8x4xf32, #tpu.memory_space<vmem>>, vector<8x1xf32>
    tpu.vector_store %arg15[%c0_146, %c3_147], %407 {strides = array<i32>} : memref<8x4xf32, #tpu.memory_space<vmem>>, vector<8x1xf32>,
    %c0_148 = arith.constant 0 : index
    %c3_149 = arith.constant 3 : index
    %409 = vector.load %arg14[%c0_148, %c3_149] : memref<8x4xf32, #tpu.memory_space<vmem>>, vector<8x1xf32>
    tpu.vector_store %arg14[%c0_148, %c3_149], %397 {strides = array<i32>} : memref<8x4xf32, #tpu.memory_space<vmem>>, vector<8x1xf32>,
    %c0_150 = arith.constant 0 : index
    %c120 = arith.constant 120 : index
    %410 = vector.load %arg16[%c0_150, %c120] : memref<8x160xf32, #tpu.memory_space<vmem>>, vector<8x40xf32>
    %411 = vector.broadcast %399 : vector<8x1xf32> to vector<8x40xf32>
    %412 = arith.mulf %411, %410 : vector<8x40xf32>
    %413 = vector.extract_strided_slice %8 {offsets = [0, 120], sizes = [8, 40], strides = [1, 1]} : vector<8x160xf32> to vector<8x40xf32>
    %cst_151 = arith.constant dense<0.000000e+00> : vector<8x40xf32>
    %414 = tpu.matmul %402, %413, %cst_151 {dimension_numbers = #tpu.dot_dimension_numbers<[1], [0], [0], [1], [0, 0, 1, 1], [], []>} : vector<8x8xf32>, vector<8x40xf32>, vector<8x40xf32> -> vector<8x40xf32>
    %415 = arith.addf %412, %414 : vector<8x40xf32>
    %c0_152 = arith.constant 0 : index
    %c120_153 = arith.constant 120 : index
    %416 = vector.load %arg16[%c0_152, %c120_153] : memref<8x160xf32, #tpu.memory_space<vmem>>, vector<8x40xf32>
    tpu.vector_store %arg16[%c0_152, %c120_153], %415 {strides = array<i32>} : memref<8x160xf32, #tpu.memory_space<vmem>>, vector<8x40xf32>,
    %417 = vector.shape_cast %105 : vector<8x8xf32> to vector<8x1x8xf32>
    %418 = vector.shape_cast %204 : vector<8x8xf32> to vector<8x1x8xf32>
    %419 = vector.shape_cast %303 : vector<8x8xf32> to vector<8x1x8xf32>
    %420 = vector.shape_cast %402 : vector<8x8xf32> to vector<8x1x8xf32>
    %421 = tpu.concatenate %417, %418, %419, %420 in 1 : vector<8x1x8xf32>, vector<8x1x8xf32>, vector<8x1x8xf32>, vector<8x1x8xf32> -> vector<8x4x8xf32>
    %cst_154 = arith.constant dense<0.000000e+00> : vector<8x4x8xf32>
    %422 = tpu.matmul %421, %20, %cst_154 {dimension_numbers = #tpu.dot_dimension_numbers<[2], [1], [1], [2], [0, 0, 0, 1, 1, 2], [0], [0]>} : vector<8x4x8xf32>, vector<8x8x8xf32>, vector<8x4x8xf32> -> vector<8x4x8xf32>
    %c0_155 = arith.constant 0 : index
    %c0_156 = arith.constant 0 : index
    %423 = vector.load %arg17[%c0_155, %c0_156] : memref<8x32xf32, #tpu.memory_space<vmem>>, vector<8x8xf32>
    %424 = vector.broadcast %102 : vector<8x1xf32> to vector<8x8xf32>
    %425 = arith.mulf %424, %423 : vector<8x8xf32>
    %426 = vector.extract_strided_slice %422 {offsets = [0, 0, 0], sizes = [8, 1, 8], strides = [1, 1, 1]} : vector<8x4x8xf32> to vector<8x1x8xf32>
    %427 = vector.shape_cast %426 : vector<8x1x8xf32> to vector<8x8xf32>
    %428 = arith.addf %425, %427 : vector<8x8xf32>
    %c0_157 = arith.constant 0 : index
    %c0_158 = arith.constant 0 : index
    %429 = vector.load %arg17[%c0_157, %c0_158] : memref<8x32xf32, #tpu.memory_space<vmem>>, vector<8x8xf32>
    tpu.vector_store %arg17[%c0_157, %c0_158], %428 {strides = array<i32>} : memref<8x32xf32, #tpu.memory_space<vmem>>, vector<8x8xf32>,
    %c0_159 = arith.constant 0 : index
    %c8 = arith.constant 8 : index
    %430 = vector.load %arg17[%c0_159, %c8] : memref<8x32xf32, #tpu.memory_space<vmem>>, vector<8x8xf32>
    %431 = vector.broadcast %201 : vector<8x1xf32> to vector<8x8xf32>
    %432 = arith.mulf %431, %430 : vector<8x8xf32>
    %433 = vector.extract_strided_slice %422 {offsets = [0, 1, 0], sizes = [8, 1, 8], strides = [1, 1, 1]} : vector<8x4x8xf32> to vector<8x1x8xf32>
    %434 = vector.shape_cast %433 : vector<8x1x8xf32> to vector<8x8xf32>
    %435 = arith.addf %432, %434 : vector<8x8xf32>
    %c0_160 = arith.constant 0 : index
    %c8_161 = arith.constant 8 : index
    %436 = vector.load %arg17[%c0_160, %c8_161] : memref<8x32xf32, #tpu.memory_space<vmem>>, vector<8x8xf32>
    tpu.vector_store %arg17[%c0_160, %c8_161], %435 {strides = array<i32>} : memref<8x32xf32, #tpu.memory_space<vmem>>, vector<8x8xf32>,
    %c0_162 = arith.constant 0 : index
    %c16 = arith.constant 16 : index
    %437 = vector.load %arg17[%c0_162, %c16] : memref<8x32xf32, #tpu.memory_space<vmem>>, vector<8x8xf32>
    %438 = vector.broadcast %300 : vector<8x1xf32> to vector<8x8xf32>
    %439 = arith.mulf %438, %437 : vector<8x8xf32>
    %440 = vector.extract_strided_slice %422 {offsets = [0, 2, 0], sizes = [8, 1, 8], strides = [1, 1, 1]} : vector<8x4x8xf32> to vector<8x1x8xf32>
    %441 = vector.shape_cast %440 : vector<8x1x8xf32> to vector<8x8xf32>
    %442 = arith.addf %439, %441 : vector<8x8xf32>
    %c0_163 = arith.constant 0 : index
    %c16_164 = arith.constant 16 : index
    %443 = vector.load %arg17[%c0_163, %c16_164] : memref<8x32xf32, #tpu.memory_space<vmem>>, vector<8x8xf32>
    tpu.vector_store %arg17[%c0_163, %c16_164], %442 {strides = array<i32>} : memref<8x32xf32, #tpu.memory_space<vmem>>, vector<8x8xf32>,
    %c0_165 = arith.constant 0 : index
    %c24 = arith.constant 24 : index
    %444 = vector.load %arg17[%c0_165, %c24] : memref<8x32xf32, #tpu.memory_space<vmem>>, vector<8x8xf32>
    %445 = vector.broadcast %399 : vector<8x1xf32> to vector<8x8xf32>
    %446 = arith.mulf %445, %444 : vector<8x8xf32>
    %447 = vector.extract_strided_slice %422 {offsets = [0, 3, 0], sizes = [8, 1, 8], strides = [1, 1, 1]} : vector<8x4x8xf32> to vector<8x1x8xf32>
    %448 = vector.shape_cast %447 : vector<8x1x8xf32> to vector<8x8xf32>
    %449 = arith.addf %446, %448 : vector<8x8xf32>
    %c0_166 = arith.constant 0 : index
    %c24_167 = arith.constant 24 : index
    %450 = vector.load %arg17[%c0_166, %c24_167] : memref<8x32xf32, #tpu.memory_space<vmem>>, vector<8x8xf32>
    tpu.vector_store %arg17[%c0_166, %c24_167], %449 {strides = array<i32>} : memref<8x32xf32, #tpu.memory_space<vmem>>, vector<8x8xf32>,
    %c0_i32_168 = arith.constant 0 : i32
    %451 = arith.cmpi eq, %arg2, %c0_i32_168 : i32
    %452 = arith.extui %451 : i1 to i32
    %c0_i32_169 = arith.constant 0 : i32
    %453 = arith.cmpi ne, %452, %c0_i32_169 : i32
    scf.if %453 {
      %c0_170 = arith.constant 0 : index
      %c0_171 = arith.constant 0 : index
      %454 = vector.load %arg15[%c0_170, %c0_171] : memref<8x4xf32, #tpu.memory_space<vmem>>, vector<8x1xf32>
      %455 = tpu.reciprocal %454 {approx = true} : vector<8x1xf32> -> vector<8x1xf32>
      %c0_172 = arith.constant 0 : index
      %c0_173 = arith.constant 0 : index
      %456 = vector.load %arg16[%c0_172, %c0_173] : memref<8x160xf32, #tpu.memory_space<vmem>>, vector<8x40xf32>
      %457 = vector.broadcast %455 : vector<8x1xf32> to vector<8x40xf32>
      %458 = arith.mulf %456, %457 : vector<8x40xf32>
      %c0_174 = arith.constant 0 : index
      %c0_175 = arith.constant 0 : index
      %c0_176 = arith.constant 0 : index
      %459 = vector.load %arg13[%c0_174, %c0_175, %c0_176] : memref<1x8x256xf32, #tpu.memory_space<vmem>>, vector<1x8x40xf32>
      %460 = vector.shape_cast %459 : vector<1x8x40xf32> to vector<8x40xf32>
      %461 = vector.shape_cast %458 : vector<8x40xf32> to vector<1x8x40xf32>
      tpu.vector_store %arg13[%c0_174, %c0_175, %c0_176], %461 {strides = array<i32>} : memref<1x8x256xf32, #tpu.memory_space<vmem>>, vector<1x8x40xf32>,
      %c0_177 = arith.constant 0 : index
      %c0_178 = arith.constant 0 : index
      %462 = vector.load %arg17[%c0_177, %c0_178] : memref<8x32xf32, #tpu.memory_space<vmem>>, vector<8x8xf32>
      %463 = vector.broadcast %455 : vector<8x1xf32> to vector<8x8xf32>
      %464 = arith.mulf %462, %463 : vector<8x8xf32>
      %c0_179 = arith.constant 0 : index
      %c0_180 = arith.constant 0 : index
      %c40_181 = arith.constant 40 : index
      %465 = vector.load %arg13[%c0_179, %c0_180, %c40_181] : memref<1x8x256xf32, #tpu.memory_space<vmem>>, vector<1x8x8xf32>
      %466 = vector.shape_cast %465 : vector<1x8x8xf32> to vector<8x8xf32>
      %467 = vector.shape_cast %464 : vector<8x8xf32> to vector<1x8x8xf32>
      tpu.vector_store %arg13[%c0_179, %c0_180, %c40_181], %467 {strides = array<i32>} : memref<1x8x256xf32, #tpu.memory_space<vmem>>, vector<1x8x8xf32>,
      %c0_182 = arith.constant 0 : index
      %c1_183 = arith.constant 1 : index
      %468 = vector.load %arg15[%c0_182, %c1_183] : memref<8x4xf32, #tpu.memory_space<vmem>>, vector<8x1xf32>
      %469 = tpu.reciprocal %468 {approx = true} : vector<8x1xf32> -> vector<8x1xf32>
      %c0_184 = arith.constant 0 : index
      %c40_185 = arith.constant 40 : index
      %470 = vector.load %arg16[%c0_184, %c40_185] : memref<8x160xf32, #tpu.memory_space<vmem>>, vector<8x40xf32>
      %471 = vector.broadcast %469 : vector<8x1xf32> to vector<8x40xf32>
      %472 = arith.mulf %470, %471 : vector<8x40xf32>
      %c0_186 = arith.constant 0 : index
      %c0_187 = arith.constant 0 : index
      %c48 = arith.constant 48 : index
      %473 = vector.load %arg13[%c0_186, %c0_187, %c48] : memref<1x8x256xf32, #tpu.memory_space<vmem>>, vector<1x8x40xf32>
      %474 = vector.shape_cast %473 : vector<1x8x40xf32> to vector<8x40xf32>
      %475 = vector.shape_cast %472 : vector<8x40xf32> to vector<1x8x40xf32>
      tpu.vector_store %arg13[%c0_186, %c0_187, %c48], %475 {strides = array<i32>} : memref<1x8x256xf32, #tpu.memory_space<vmem>>, vector<1x8x40xf32>,
      %c0_188 = arith.constant 0 : index
      %c8_189 = arith.constant 8 : index
      %476 = vector.load %arg17[%c0_188, %c8_189] : memref<8x32xf32, #tpu.memory_space<vmem>>, vector<8x8xf32>
      %477 = vector.broadcast %469 : vector<8x1xf32> to vector<8x8xf32>
      %478 = arith.mulf %476, %477 : vector<8x8xf32>
      %c0_190 = arith.constant 0 : index
      %c0_191 = arith.constant 0 : index
      %c88 = arith.constant 88 : index
      %479 = vector.load %arg13[%c0_190, %c0_191, %c88] : memref<1x8x256xf32, #tpu.memory_space<vmem>>, vector<1x8x8xf32>
      %480 = vector.shape_cast %479 : vector<1x8x8xf32> to vector<8x8xf32>
      %481 = vector.shape_cast %478 : vector<8x8xf32> to vector<1x8x8xf32>
      tpu.vector_store %arg13[%c0_190, %c0_191, %c88], %481 {strides = array<i32>} : memref<1x8x256xf32, #tpu.memory_space<vmem>>, vector<1x8x8xf32>,
      %c0_192 = arith.constant 0 : index
      %c2_193 = arith.constant 2 : index
      %482 = vector.load %arg15[%c0_192, %c2_193] : memref<8x4xf32, #tpu.memory_space<vmem>>, vector<8x1xf32>
      %483 = tpu.reciprocal %482 {approx = true} : vector<8x1xf32> -> vector<8x1xf32>
      %c0_194 = arith.constant 0 : index
      %c80_195 = arith.constant 80 : index
      %484 = vector.load %arg16[%c0_194, %c80_195] : memref<8x160xf32, #tpu.memory_space<vmem>>, vector<8x40xf32>
      %485 = vector.broadcast %483 : vector<8x1xf32> to vector<8x40xf32>
      %486 = arith.mulf %484, %485 : vector<8x40xf32>
      %c0_196 = arith.constant 0 : index
      %c0_197 = arith.constant 0 : index
      %c96 = arith.constant 96 : index
      %487 = vector.load %arg13[%c0_196, %c0_197, %c96] : memref<1x8x256xf32, #tpu.memory_space<vmem>>, vector<1x8x40xf32>
      %488 = vector.shape_cast %487 : vector<1x8x40xf32> to vector<8x40xf32>
      %489 = vector.shape_cast %486 : vector<8x40xf32> to vector<1x8x40xf32>
      tpu.vector_store %arg13[%c0_196, %c0_197, %c96], %489 {strides = array<i32>} : memref<1x8x256xf32, #tpu.memory_space<vmem>>, vector<1x8x40xf32>,
      %c0_198 = arith.constant 0 : index
      %c16_199 = arith.constant 16 : index
      %490 = vector.load %arg17[%c0_198, %c16_199] : memref<8x32xf32, #tpu.memory_space<vmem>>, vector<8x8xf32>
      %491 = vector.broadcast %483 : vector<8x1xf32> to vector<8x8xf32>
      %492 = arith.mulf %490, %491 : vector<8x8xf32>
      %c0_200 = arith.constant 0 : index
      %c0_201 = arith.constant 0 : index
      %c136 = arith.constant 136 : index
      %493 = vector.load %arg13[%c0_200, %c0_201, %c136] : memref<1x8x256xf32, #tpu.memory_space<vmem>>, vector<1x8x8xf32>
      %494 = vector.shape_cast %493 : vector<1x8x8xf32> to vector<8x8xf32>
      %495 = vector.shape_cast %492 : vector<8x8xf32> to vector<1x8x8xf32>
      tpu.vector_store %arg13[%c0_200, %c0_201, %c136], %495 {strides = array<i32>} : memref<1x8x256xf32, #tpu.memory_space<vmem>>, vector<1x8x8xf32>,
      %c0_202 = arith.constant 0 : index
      %c3_203 = arith.constant 3 : index
      %496 = vector.load %arg15[%c0_202, %c3_203] : memref<8x4xf32, #tpu.memory_space<vmem>>, vector<8x1xf32>
      %497 = tpu.reciprocal %496 {approx = true} : vector<8x1xf32> -> vector<8x1xf32>
      %c0_204 = arith.constant 0 : index
      %c120_205 = arith.constant 120 : index
      %498 = vector.load %arg16[%c0_204, %c120_205] : memref<8x160xf32, #tpu.memory_space<vmem>>, vector<8x40xf32>
      %499 = vector.broadcast %497 : vector<8x1xf32> to vector<8x40xf32>
      %500 = arith.mulf %498, %499 : vector<8x40xf32>
      %c0_206 = arith.constant 0 : index
      %c0_207 = arith.constant 0 : index
      %c144 = arith.constant 144 : index
      %501 = vector.load %arg13[%c0_206, %c0_207, %c144] : memref<1x8x256xf32, #tpu.memory_space<vmem>>, vector<1x8x40xf32>
      %502 = vector.shape_cast %501 : vector<1x8x40xf32> to vector<8x40xf32>
      %503 = vector.shape_cast %500 : vector<8x40xf32> to vector<1x8x40xf32>
      tpu.vector_store %arg13[%c0_206, %c0_207, %c144], %503 {strides = array<i32>} : memref<1x8x256xf32, #tpu.memory_space<vmem>>, vector<1x8x40xf32>,
      %c0_208 = arith.constant 0 : index
      %c24_209 = arith.constant 24 : index
      %504 = vector.load %arg17[%c0_208, %c24_209] : memref<8x32xf32, #tpu.memory_space<vmem>>, vector<8x8xf32>
      %505 = vector.broadcast %497 : vector<8x1xf32> to vector<8x8xf32>
      %506 = arith.mulf %504, %505 : vector<8x8xf32>
      %c0_210 = arith.constant 0 : index
      %c0_211 = arith.constant 0 : index
      %c184 = arith.constant 184 : index
      %507 = vector.load %arg13[%c0_210, %c0_211, %c184] : memref<1x8x256xf32, #tpu.memory_space<vmem>>, vector<1x8x8xf32>
      %508 = vector.shape_cast %507 : vector<1x8x8xf32> to vector<8x8xf32>
      %509 = vector.shape_cast %506 : vector<8x8xf32> to vector<1x8x8xf32>
      tpu.vector_store %arg13[%c0_210, %c0_211, %c184], %509 {strides = array<i32>} : memref<1x8x256xf32, #tpu.memory_space<vmem>>, vector<1x8x8xf32>,
      %cst_212 = arith.constant 0.000000e+00 : f32
      %510 = vector.broadcast %cst_212 : f32 to vector<8x64xf32>
      %c0_213 = arith.constant 0 : index
      %c0_214 = arith.constant 0 : index
      %c192 = arith.constant 192 : index
      %511 = vector.load %arg13[%c0_213, %c0_214, %c192] : memref<1x8x256xf32, #tpu.memory_space<vmem>>, vector<1x8x64xf32>
      %512 = vector.shape_cast %511 : vector<1x8x64xf32> to vector<8x64xf32>
      %513 = vector.shape_cast %510 : vector<8x64xf32> to vector<1x8x64xf32>
      tpu.vector_store %arg13[%c0_213, %c0_214, %c192], %513 {strides = array<i32>} : memref<1x8x256xf32, #tpu.memory_space<vmem>>, vector<1x8x64xf32>,
    } else {
    }
    return
  }
  func.func @transform_0(%arg0: i32, %arg1: i32, %arg2: i32, %arg3: memref<4xf32, #tpu.memory_space<smem>>) -> (i32, i32, i32) {
    %c0_i32 = arith.constant 0 : i32
    %c0_i32_0 = arith.constant 0 : i32
    return %arg0, %arg1, %c0_i32 : i32, i32, i32
  }
  func.func @transform_1(%arg0: i32, %arg1: i32, %arg2: i32, %arg3: memref<4xf32, #tpu.memory_space<smem>>) -> (i32, i32, i32) {
    %c0_i32 = arith.constant 0 : i32
    %c0_i32_0 = arith.constant 0 : i32
    return %arg0, %arg2, %c0_i32 : i32, i32, i32
  }
  func.func @transform_2(%arg0: i32, %arg1: i32, %arg2: i32, %arg3: memref<4xf32, #tpu.memory_space<smem>>) -> (i32, i32, i32) {
    %c0_i32 = arith.constant 0 : i32
    %c0_i32_0 = arith.constant 0 : i32
    return %arg0, %arg2, %c0_i32 : i32, i32, i32
  }
  func.func @transform_3(%arg0: i32, %arg1: i32, %arg2: i32, %arg3: memref<4xf32, #tpu.memory_space<smem>>) -> (i32, i32, i32) {
    %c0_i32 = arith.constant 0 : i32
    %c0_i32_0 = arith.constant 0 : i32
    return %arg0, %arg1, %c0_i32 : i32, i32, i32
  }
  func.func @transform_4(%arg0: i32, %arg1: i32, %arg2: i32, %arg3: memref<4xf32, #tpu.memory_space<smem>>) -> (i32, i32, i32) {
    %c0_i32 = arith.constant 0 : i32
    %c0_i32_0 = arith.constant 0 : i32
    return %arg0, %arg2, %c0_i32 : i32, i32, i32
  }
  func.func @transform_5(%arg0: i32, %arg1: i32, %arg2: i32, %arg3: memref<4xf32, #tpu.memory_space<smem>>) -> (i32, i32, i32) {
    %c0_i32 = arith.constant 0 : i32
    %c0_i32_0 = arith.constant 0 : i32
    return %arg0, %arg1, %c0_i32 : i32, i32, i32
  }
  func.func @transform_6(%arg0: i32, %arg1: i32, %arg2: i32, %arg3: memref<4xf32, #tpu.memory_space<smem>>) -> (i32, i32, i32) {
    %c0_i32 = arith.constant 0 : i32
    %c0_i32_0 = arith.constant 0 : i32
    return %arg0, %c0_i32, %arg2 : i32, i32, i32
  }
  func.func @transform_7(%arg0: i32, %arg1: i32, %arg2: i32, %arg3: memref<4xf32, #tpu.memory_space<smem>>) -> (i32, i32, i32, i32) {
    %c0_i32 = arith.constant 0 : i32
    %c0_i32_0 = arith.constant 0 : i32
    return %arg0, %c0_i32, %arg1, %arg2 : i32, i32, i32, i32
  }
  func.func @transform_8(%arg0: i32, %arg1: i32, %arg2: i32, %arg3: memref<4xf32, #tpu.memory_space<smem>>) -> (i32, i32, i32, i32) {
    %c0_i32 = arith.constant 0 : i32
    %c0_i32_0 = arith.constant 0 : i32
    return %arg0, %arg1, %arg2, %c0_i32 : i32, i32, i32, i32
  }
  func.func @transform_9(%arg0: i32, %arg1: i32, %arg2: i32, %arg3: memref<4xf32, #tpu.memory_space<smem>>) -> (i32, i32, i32) {
    %c0_i32 = arith.constant 0 : i32
    %c0_i32_0 = arith.constant 0 : i32
    return %arg0, %arg1, %c0_i32 : i32, i32, i32
  }
}

</mosaic_0001>

<llo_original>
// kernel: ipa_forward.1
$region0: #{ipa_forward.1}
  #allocation0 [shape = 'u32[]', space=smem, size = 0x4, offset = 0x4, fixed_abs, tag = 'smem constant byte address 0x4 - core index']
  #allocation1 [shape = 'u32[144,128]{1,0:T(1,128)}', space=vmem, size = 0x12000, scoped, tag = 'internal scratch']
  #allocation2 [shape = 'f32[8,4]{1,0:T(8,128)}', space=vmem, size = 0x1000, scoped, tag = 'scratch operand']
  #allocation3 [shape = 'f32[8,4]{1,0:T(8,128)}', space=vmem, size = 0x1000, scoped, tag = 'scratch operand']
  #allocation4 [shape = 'f32[8,160]{1,0:T(8,128)}', space=vmem, size = 0x2000, scoped, tag = 'scratch operand']
  #allocation5 [shape = 'f32[8,32]{1,0:T(8,128)}', space=vmem, size = 0x1000, scoped, tag = 'scratch operand']
  #allocation6 [shape = 's32[1]{0}', space=sflag, size = 0x4, scoped, tag = 'scoped memory for ipa_forward.1']
  #allocation7 [shape = 'u8[512]{0}', space=smem, size = 0x200, scoped, tag = 'prefetched SMEM operand 0']
  %s0 = inlined_call_operand.vmem [shape: f32[4], index: 0, kind: input, shape index: {}]
  %s1 = inlined_call_operand.vmem [shape: f32[2,8,64], index: 1, kind: input, shape index: {}]
  %s2 = inlined_call_operand.vmem [shape: f32[2,8,64], index: 2, kind: input, shape index: {}]
  %s3 = inlined_call_operand.vmem [shape: f32[2,8,160], index: 3, kind: input, shape index: {}]
  %s4 = inlined_call_operand.vmem [shape: f32[2,8,48], index: 4, kind: input, shape index: {}]
  %s5 = inlined_call_operand.vmem [shape: f32[2,8,48], index: 5, kind: input, shape index: {}]
  %s6 = inlined_call_operand.vmem [shape: f32[2,8,16], index: 6, kind: input, shape index: {}]
  %s7 = inlined_call_operand.vmem [shape: f32[2,16,8], index: 7, kind: input, shape index: {}]
  %s8 = inlined_call_operand.vmem [shape: f32[2,4,8,8], index: 8, kind: input, shape index: {}]
  %s9 = inlined_call_operand.vmem [shape: f32[2,8,8,8], index: 9, kind: input, shape index: {}]
  %s10 = inlined_call_operand.vmem [shape: f32[2,8,256], index: 10, kind: output, shape index: {}]
  %s11 = sld [smem:[#allocation0]]
  $region77: #{ipa_forward.1} parent=0
    _
  %s13 = ssub.s32 1, %s11
  %s14 = scalar_select 0, %s13, %s11
  %s15 = sshll.u32 %s0, 4
  %s16 = int_to_ptr.vmem [resolvable:$true] %s15
  %18 = dma.vmem_to_smem %s16, 16, [#allocation7], [#allocation6]
  %19 = dma.done [#allocation6], 16
  %20 = sfence
  loop: start=0, step=1, limit=4
  $region2: #{ipa_forward.1} parent=0 // loop_pre_header
    _
  $region3: #{ipa_forward.1} parent=0 // loop_header
    %s22 = sphi 0, %s26
    %p23 = scmp.ge.s32.totalorder %s22, 4
    %s29 = sphi 0, %s48
    %s30 = sphi 0, %s44
    %s31 = sphi 0, %s40
    %s32 = sphi 0, %s29
    %s33 = sphi 0, %s30
    %s34 = sphi 0, %s31
    %s35 = sphi 0, %s32
    %s36 = sphi 0, %s33
    %s37 = sphi 0, %s34
    %s53 = sphi 0, %s55
    %s56 = sphi 0, %s53
    %s57 = sphi 0, %s56
    %s73 = sphi 0, %s57
    %s81 = sphi 0, %s83
    %s84 = sphi 0, %s81
    %s85 = sphi 0, %s84
    %s101 = sphi 0, %s85
    %s109 = sphi 0, %s111
    %s112 = sphi 0, %s109
    %s113 = sphi 0, %s112
    %s129 = sphi 0, %s113
    %s137 = sphi 0, %s139
    %s140 = sphi 0, %s137
    %s141 = sphi 0, %s140
    %s157 = sphi 0, %s141
    %s165 = sphi 0, %s167
    %s168 = sphi 0, %s165
    %s169 = sphi 0, %s168
    %s185 = sphi 0, %s169
    %s193 = sphi 0, %s195
    %s196 = sphi 0, %s193
    %s197 = sphi 0, %s196
    %s213 = sphi 0, %s197
    %s221 = sphi 0, %s223
    %s224 = sphi 0, %s221
    %s225 = sphi 0, %s224
    %s241 = sphi 0, %s225
    %s251 = sphi 0, %s253
    %s254 = sphi 0, %s251
    %s255 = sphi 0, %s254
    %s271 = sphi 0, %s255
    %s281 = sphi 0, %s283
    %s284 = sphi 0, %s281
    %s285 = sphi 0, %s284
    %s301 = sphi 0, %s285
    %s309 = sphi 0, %s311
    %s312 = sphi 0, %s309
    %s313 = sphi 0, %s312
    %s329 = sphi 0, %s313
  $region4: #{ipa_forward.1} parent=0 // loop_header_branch
    %25 = sbr.rel (%p23) target = $region8
  $region5: #{ipa_forward.1} parent=0 // loop_body
    %s27 = ssub.s32 %s22, 1
    %s28 = ssub.s32 %s22, 2
    %s38 = sadd.s32 1, %s31
    %p39 = scmp.ge.s32.totalorder %s38, 1
    %s40 = scalar_select %p39, 0, %s38
    %s41 = sadd.s32 1, %s30
    %s42 = scalar_select %p39, %s41, %s30
    %p43 = scmp.ge.s32.totalorder %s42, 1
    %s44 = scalar_select %p43, 0, %s42
    %s45 = sadd.s32 1, %s29
    %s46 = scalar_select %p43, %s45, %s29
    %p47 = scmp.ge.s32.totalorder %s46, 2
    %s48 = scalar_select %p47, 0, %s46
    %s49 = ssub.s32 %s29, %s48
    %s50 = ssub.s32 %s30, %s44
    %s51 = sor.u32 %s49, %s50
    %p52 = scmp.eq.s32.totalorder %s51, 0
    %s54 = sadd.s32 %s53, 1
    %s55 = scalar_select %p52, %s53, %s54
    %p58 = pneg %p52
    %p59 = scmp.eq.s32.totalorder %s22, 1
    %p60 = por %p58, %p59
    %p61 = scmp.ne.s32.totalorder %s53, %s56
    %p62 = scmp.eq.s32.totalorder %s22, 0
    %p63 = por %p61, %p62
    %p64 = scmp.ne.s32.totalorder %s53, %s56
    %p65 = scmp.eq.s32.totalorder %s27, 1
    %p66 = por %p64, %p65
    %p67 = scmp.ne.s32.totalorder %s56, %s57
    %p68 = scmp.eq.s32.totalorder %s27, 0
    %p69 = por %p67, %p68
    %p70 = scmp.ne.s32.totalorder %s56, %s57
    %p71 = scmp.eq.s32.totalorder %s28, 1
    %p72 = por %p70, %p71
    %p74 = scmp.ne.s32.totalorder %s57, %s73
    %p75 = scmp.eq.s32.totalorder %s28, 0
    %p76 = por %p74, %p75
    %s77 = ssub.s32 %s29, %s48
    %s78 = ssub.s32 %s31, %s40
    %s79 = sor.u32 %s77, %s78
    %p80 = scmp.eq.s32.totalorder %s79, 0
    %s82 = sadd.s32 %s81, 1
    %s83 = scalar_select %p80, %s81, %s82
    %p86 = pneg %p80
    %p87 = scmp.eq.s32.totalorder %s22, 1
    %p88 = por %p86, %p87
    %p89 = scmp.ne.s32.totalorder %s81, %s84
    %p90 = scmp.eq.s32.totalorder %s22, 0
    %p91 = por %p89, %p90
    %p92 = scmp.ne.s32.totalorder %s81, %s84
    %p93 = scmp.eq.s32.totalorder %s27, 1
    %p94 = por %p92, %p93
    %p95 = scmp.ne.s32.totalorder %s84, %s85
    %p96 = scmp.eq.s32.totalorder %s27, 0
    %p97 = por %p95, %p96
    %p98 = scmp.ne.s32.totalorder %s84, %s85
    %p99 = scmp.eq.s32.totalorder %s28, 1
    %p100 = por %p98, %p99
    %p102 = scmp.ne.s32.totalorder %s85, %s101
    %p103 = scmp.eq.s32.totalorder %s28, 0
    %p104 = por %p102, %p103
    %s105 = ssub.s32 %s29, %s48
    %s106 = ssub.s32 %s31, %s40
    %s107 = sor.u32 %s105, %s106
    %p108 = scmp.eq.s32.totalorder %s107, 0
    %s110 = sadd.s32 %s109, 1
    %s111 = scalar_select %p108, %s109, %s110
    %p114 = pneg %p108
    %p115 = scmp.eq.s32.totalorder %s22, 1
    %p116 = por %p114, %p115
    %p117 = scmp.ne.s32.totalorder %s109, %s112
    %p118 = scmp.eq.s32.totalorder %s22, 0
    %p119 = por %p117, %p118
    %p120 = scmp.ne.s32.totalorder %s109, %s112
    %p121 = scmp.eq.s32.totalorder %s27, 1
    %p122 = por %p120, %p121
    %p123 = scmp.ne.s32.totalorder %s112, %s113
    %p124 = scmp.eq.s32.totalorder %s27, 0
    %p125 = por %p123, %p124
    %p126 = scmp.ne.s32.totalorder %s112, %s113
    %p127 = scmp.eq.s32.totalorder %s28, 1
    %p128 = por %p126, %p127
    %p130 = scmp.ne.s32.totalorder %s113, %s129
    %p131 = scmp.eq.s32.totalorder %s28, 0
    %p132 = por %p130, %p131
    %s133 = ssub.s32 %s29, %s48
    %s134 = ssub.s32 %s30, %s44
    %s135 = sor.u32 %s133, %s134
    %p136 = scmp.eq.s32.totalorder %s135, 0
    %s138 = sadd.s32 %s137, 1
    %s139 = scalar_select %p136, %s137, %s138
    %p142 = pneg %p136
    %p143 = scmp.eq.s32.totalorder %s22, 1
    %p144 = por %p142, %p143
    %p145 = scmp.ne.s32.totalorder %s137, %s140
    %p146 = scmp.eq.s32.totalorder %s22, 0
    %p147 = por %p145, %p146
    %p148 = scmp.ne.s32.totalorder %s137, %s140
    %p149 = scmp.eq.s32.totalorder %s27, 1
    %p150 = por %p148, %p149
    %p151 = scmp.ne.s32.totalorder %s140, %s141
    %p152 = scmp.eq.s32.totalorder %s27, 0
    %p153 = por %p151, %p152
    %p154 = scmp.ne.s32.totalorder %s140, %s141
    %p155 = scmp.eq.s32.totalorder %s28, 1
    %p156 = por %p154, %p155
    %p158 = scmp.ne.s32.totalorder %s141, %s157
    %p159 = scmp.eq.s32.totalorder %s28, 0
    %p160 = por %p158, %p159
    %s161 = ssub.s32 %s29, %s48
    %s162 = ssub.s32 %s31, %s40
    %s163 = sor.u32 %s161, %s162
    %p164 = scmp.eq.s32.totalorder %s163, 0
    %s166 = sadd.s32 %s165, 1
    %s167 = scalar_select %p164, %s165, %s166
    %p170 = pneg %p164
    %p171 = scmp.eq.s32.totalorder %s22, 1
    %p172 = por %p170, %p171
    %p173 = scmp.ne.s32.totalorder %s165, %s168
    %p174 = scmp.eq.s32.totalorder %s22, 0
    %p175 = por %p173, %p174
    %p176 = scmp.ne.s32.totalorder %s165, %s168
    %p177 = scmp.eq.s32.totalorder %s27, 1
    %p178 = por %p176, %p177
    %p179 = scmp.ne.s32.totalorder %s168, %s169
    %p180 = scmp.eq.s32.totalorder %s27, 0
    %p181 = por %p179, %p180
    %p182 = scmp.ne.s32.totalorder %s168, %s169
    %p183 = scmp.eq.s32.totalorder %s28, 1
    %p184 = por %p182, %p183
    %p186 = scmp.ne.s32.totalorder %s169, %s185
    %p187 = scmp.eq.s32.totalorder %s28, 0
    %p188 = por %p186, %p187
    %s189 = ssub.s32 %s29, %s48
    %s190 = ssub.s32 %s30, %s44
    %s191 = sor.u32 %s189, %s190
    %p192 = scmp.eq.s32.totalorder %s191, 0
    %s194 = sadd.s32 %s193, 1
    %s195 = scalar_select %p192, %s193, %s194
    %p198 = pneg %p192
    %p199 = scmp.eq.s32.totalorder %s22, 1
    %p200 = por %p198, %p199
    %p201 = scmp.ne.s32.totalorder %s193, %s196
    %p202 = scmp.eq.s32.totalorder %s22, 0
    %p203 = por %p201, %p202
    %p204 = scmp.ne.s32.totalorder %s193, %s196
    %p205 = scmp.eq.s32.totalorder %s27, 1
    %p206 = por %p204, %p205
    %p207 = scmp.ne.s32.totalorder %s196, %s197
    %p208 = scmp.eq.s32.totalorder %s27, 0
    %p209 = por %p207, %p208
    %p210 = scmp.ne.s32.totalorder %s196, %s197
    %p211 = scmp.eq.s32.totalorder %s28, 1
    %p212 = por %p210, %p211
    %p214 = scmp.ne.s32.totalorder %s197, %s213
    %p215 = scmp.eq.s32.totalorder %s28, 0
    %p216 = por %p214, %p215
    %s217 = ssub.s32 %s29, %s48
    %s218 = ssub.s32 %s31, %s40
    %s219 = sor.u32 %s217, %s218
    %p220 = scmp.eq.s32.totalorder %s219, 0
    %s222 = sadd.s32 %s221, 1
    %s223 = scalar_select %p220, %s221, %s222
    %p226 = pneg %p220
    %p227 = scmp.eq.s32.totalorder %s22, 1
    %p228 = por %p226, %p227
    %p229 = scmp.ne.s32.totalorder %s221, %s224
    %p230 = scmp.eq.s32.totalorder %s22, 0
    %p231 = por %p229, %p230
    %p232 = scmp.ne.s32.totalorder %s221, %s224
    %p233 = scmp.eq.s32.totalorder %s27, 1
    %p234 = por %p232, %p233
    %p235 = scmp.ne.s32.totalorder %s224, %s225
    %p236 = scmp.eq.s32.totalorder %s27, 0
    %p237 = por %p235, %p236
    %p238 = scmp.ne.s32.totalorder %s224, %s225
    %p239 = scmp.eq.s32.totalorder %s28, 1
    %p240 = por %p238, %p239
    %p242 = scmp.ne.s32.totalorder %s225, %s241
    %p243 = scmp.eq.s32.totalorder %s28, 0
    %p244 = por %p242, %p243
    %s245 = ssub.s32 %s29, %s48
    %s246 = ssub.s32 %s30, %s44
    %s247 = sor.u32 %s245, %s246
    %s248 = ssub.s32 %s31, %s40
    %s249 = sor.u32 %s247, %s248
    %p250 = scmp.eq.s32.totalorder %s249, 0
    %s252 = sadd.s32 %s251, 1
    %s253 = scalar_select %p250, %s251, %s252
    %p256 = pneg %p250
    %p257 = scmp.eq.s32.totalorder %s22, 1
    %p258 = por %p256, %p257
    %p259 = scmp.ne.s32.totalorder %s251, %s254
    %p260 = scmp.eq.s32.totalorder %s22, 0
    %p261 = por %p259, %p260
    %p262 = scmp.ne.s32.totalorder %s251, %s254
    %p263 = scmp.eq.s32.totalorder %s27, 1
    %p264 = por %p262, %p263
    %p265 = scmp.ne.s32.totalorder %s254, %s255
    %p266 = scmp.eq.s32.totalorder %s27, 0
    %p267 = por %p265, %p266
    %p268 = scmp.ne.s32.totalorder %s254, %s255
    %p269 = scmp.eq.s32.totalorder %s28, 1
    %p270 = por %p268, %p269
    %p272 = scmp.ne.s32.totalorder %s255, %s271
    %p273 = scmp.eq.s32.totalorder %s28, 0
    %p274 = por %p272, %p273
    %s275 = ssub.s32 %s29, %s48
    %s276 = ssub.s32 %s30, %s44
    %s277 = sor.u32 %s275, %s276
    %s278 = ssub.s32 %s31, %s40
    %s279 = sor.u32 %s277, %s278
    %p280 = scmp.eq.s32.totalorder %s279, 0
    %s282 = sadd.s32 %s281, 1
    %s283 = scalar_select %p280, %s281, %s282
    %p286 = pneg %p280
    %p287 = scmp.eq.s32.totalorder %s22, 1
    %p288 = por %p286, %p287
    %p289 = scmp.ne.s32.totalorder %s281, %s284
    %p290 = scmp.eq.s32.totalorder %s22, 0
    %p291 = por %p289, %p290
    %p292 = scmp.ne.s32.totalorder %s281, %s284
    %p293 = scmp.eq.s32.totalorder %s27, 1
    %p294 = por %p292, %p293
    %p295 = scmp.ne.s32.totalorder %s284, %s285
    %p296 = scmp.eq.s32.totalorder %s27, 0
    %p297 = por %p295, %p296
    %p298 = scmp.ne.s32.totalorder %s284, %s285
    %p299 = scmp.eq.s32.totalorder %s28, 1
    %p300 = por %p298, %p299
    %p302 = scmp.ne.s32.totalorder %s285, %s301
    %p303 = scmp.eq.s32.totalorder %s28, 0
    %p304 = por %p302, %p303
    %s305 = ssub.s32 %s29, %s48
    %s306 = ssub.s32 %s30, %s44
    %s307 = sor.u32 %s305, %s306
    %p308 = scmp.eq.s32.totalorder %s307, 0
    %s310 = sadd.s32 %s309, 1
    %s311 = scalar_select %p308, %s309, %s310
    %p314 = pneg %p308
    %p315 = scmp.eq.s32.totalorder %s22, 1
    %p316 = por %p314, %p315
    %p317 = scmp.ne.s32.totalorder %s309, %s312
    %p318 = scmp.eq.s32.totalorder %s22, 0
    %p319 = por %p317, %p318
    %p320 = scmp.ne.s32.totalorder %s309, %s312
    %p321 = scmp.eq.s32.totalorder %s27, 1
    %p322 = por %p320, %p321
    %p323 = scmp.ne.s32.totalorder %s312, %s313
    %p324 = scmp.eq.s32.totalorder %s27, 0
    %p325 = por %p323, %p324
    %p326 = scmp.ne.s32.totalorder %s312, %s313
    %p327 = scmp.eq.s32.totalorder %s28, 1
    %p328 = por %p326, %p327
    %p330 = scmp.ne.s32.totalorder %s313, %s329
    %p331 = scmp.eq.s32.totalorder %s28, 0
    %p332 = por %p330, %p331
    %p333 = scmp.le.s32.totalorder 1, %s22
    %p334 = scmp.lt.s32.totalorder %s22, 3
    %p335 = pnand %p333, %p334
    %p336 = pneg %p335
    // Predicated region
    $region9: #{ipa_forward.1} parent=5 // pred_check
      _
    $region10: #{ipa_forward.1} parent=5 // pred_check_branch
      %338 = sbr.rel (%p335) target = $region12
    $region11: #{ipa_forward.1} parent=5 // pred_region
      %s339 = ssub.s32 %s22, 1
    $region12: #{ipa_forward.1} parent=5 // pred_fallthru
      _
    %p340 = scmp.lt.s32.totalorder %s22, 2
    // Predicated region
    $region13: #{ipa_forward.1} parent=5 // pred_check
      %p341 = pneg %p340
    $region14: #{ipa_forward.1} parent=5 // pred_check_branch
      %343 = sbr.rel (%p341) target = $region16
    $region15: #{ipa_forward.1} parent=5 // pred_region
      // Predicated region
      $region17: #{ipa_forward.1} parent=15 // pred_check
        %p344 = pneg %p63
      $region18: #{ipa_forward.1} parent=15 // pred_check_branch
        %346 = sbr.rel (%p344) target = $region20
      $region19: #{ipa_forward.1} parent=15 // pred_region
        %p347 = scmp.lt.s32.totalorder %s29, 1
        %s348 = scalar_select %p347, %s29, 1
        %p349 = scmp.lt.s32.totalorder %s30, 0
        %s350 = scalar_select %p349, %s30, 0
        %s351 = sadd.s32 %s350, %s348
        %s352 = smul.addr %s351, 8
        %s353 = scalar_lea.vmem %s1, %s352
      $region20: #{ipa_forward.1} parent=15 // pred_fallthru
        _
      // Predicated region
      $region21: #{ipa_forward.1} parent=15 // pred_check
        %p354 = pneg %p91
      $region22: #{ipa_forward.1} parent=15 // pred_check_branch
        %356 = sbr.rel (%p354) target = $region24
      $region23: #{ipa_forward.1} parent=15 // pred_region
        %p357 = scmp.lt.s32.totalorder %s29, 1
        %s358 = scalar_select %p357, %s29, 1
        %p359 = scmp.lt.s32.totalorder %s31, 0
        %s360 = scalar_select %p359, %s31, 0
        %s361 = sadd.s32 %s360, %s358
        %s362 = smul.addr %s361, 8
        %s363 = scalar_lea.vmem %s2, %s362
      $region24: #{ipa_forward.1} parent=15 // pred_fallthru
        _
      // Predicated region
      $region25: #{ipa_forward.1} parent=15 // pred_check
        %p364 = pneg %p119
      $region26: #{ipa_forward.1} parent=15 // pred_check_branch
        %366 = sbr.rel (%p364) target = $region28
      $region27: #{ipa_forward.1} parent=15 // pred_region
        %p367 = scmp.lt.s32.totalorder %s29, 1
        %s368 = scalar_select %p367, %s29, 1
        %p369 = scmp.lt.s32.totalorder %s31, 0
        %s370 = scalar_select %p369, %s31, 0
        %s371 = smul.addr %s370, 2
        %s372 = smul.addr %s368, 2
        %s373 = sadd.s32 %s371, %s372
        %s374 = smul.addr %s373, 8
        %s375 = scalar_lea.vmem %s3, %s374
      $region28: #{ipa_forward.1} parent=15 // pred_fallthru
        _
      // Predicated region
      $region29: #{ipa_forward.1} parent=15 // pred_check
        %p376 = pneg %p147
      $region30: #{ipa_forward.1} parent=15 // pred_check_branch
        %378 = sbr.rel (%p376) target = $region32
      $region31: #{ipa_forward.1} parent=15 // pred_region
        %p379 = scmp.lt.s32.totalorder %s29, 1
        %s380 = scalar_select %p379, %s29, 1
        %p381 = scmp.lt.s32.totalorder %s30, 0
        %s382 = scalar_select %p381, %s30, 0
        %s383 = sadd.s32 %s382, %s380
        %s384 = smul.addr %s383, 8
        %s385 = scalar_lea.vmem %s4, %s384
      $region32: #{ipa_forward.1} parent=15 // pred_fallthru
        _
      // Predicated region
      $region33: #{ipa_forward.1} parent=15 // pred_check
        %p386 = pneg %p175
      $region34: #{ipa_forward.1} parent=15 // pred_check_branch
        %388 = sbr.rel (%p386) target = $region36
      $region35: #{ipa_forward.1} parent=15 // pred_region
        %p389 = scmp.lt.s32.totalorder %s29, 1
        %s390 = scalar_select %p389, %s29, 1
        %p391 = scmp.lt.s32.totalorder %s31, 0
        %s392 = scalar_select %p391, %s31, 0
        %s393 = sadd.s32 %s392, %s390
        %s394 = smul.addr %s393, 8
        %s395 = scalar_lea.vmem %s5, %s394
      $region36: #{ipa_forward.1} parent=15 // pred_fallthru
        _
      // Predicated region
      $region37: #{ipa_forward.1} parent=15 // pred_check
        %p396 = pneg %p203
      $region38: #{ipa_forward.1} parent=15 // pred_check_branch
        %398 = sbr.rel (%p396) target = $region40
      $region39: #{ipa_forward.1} parent=15 // pred_region
        %p399 = scmp.lt.s32.totalorder %s29, 1
        %s400 = scalar_select %p399, %s29, 1
        %p401 = scmp.lt.s32.totalorder %s30, 0
        %s402 = scalar_select %p401, %s30, 0
        %s403 = sadd.s32 %s402, %s400
        %s404 = smul.addr %s403, 8
        %s405 = scalar_lea.vmem %s6, %s404
      $region40: #{ipa_forward.1} parent=15 // pred_fallthru
        _
      // Predicated region
      $region41: #{ipa_forward.1} parent=15 // pred_check
        %p406 = pneg %p231
      $region42: #{ipa_forward.1} parent=15 // pred_check_branch
        %408 = sbr.rel (%p406) target = $region44
      $region43: #{ipa_forward.1} parent=15 // pred_region
        %p409 = scmp.lt.s32.totalorder %s29, 1
        %s410 = scalar_select %p409, %s29, 1
        %p411 = scmp.lt.s32.totalorder %s31, 0
        %s412 = scalar_select %p411, %s31, 0
        %s413 = smul.addr %s410, 2
        %s414 = sadd.s32 %s412, %s413
        %s415 = smul.addr %s414, 8
        %s416 = scalar_lea.vmem %s7, %s415
      $region44: #{ipa_forward.1} parent=15 // pred_fallthru
        _
      // Predicated region
      $region45: #{ipa_forward.1} parent=15 // pred_check
        %p417 = pneg %p261
      $region46: #{ipa_forward.1} parent=15 // pred_check_branch
        %419 = sbr.rel (%p417) target = $region48
      $region47: #{ipa_forward.1} parent=15 // pred_region
        %p420 = scmp.lt.s32.totalorder %s29, 1
        %s421 = scalar_select %p420, %s29, 1
        %p422 = scmp.lt.s32.totalorder %s30, 0
        %s423 = scalar_select %p422, %s30, 0
        %p424 = scmp.lt.s32.totalorder %s31, 0
        %s425 = scalar_select %p424, %s31, 0
        %s426 = sadd.s32 %s425, %s423
        %s427 = smul.addr %s421, 4
        %s428 = sadd.s32 %s426, %s427
        %s429 = smul.addr %s428, 8
        %s430 = scalar_lea.vmem %s8, %s429
      $region48: #{ipa_forward.1} parent=15 // pred_fallthru
        _
      // Predicated region
      $region49: #{ipa_forward.1} parent=15 // pred_check
        %p431 = pneg %p291
      $region50: #{ipa_forward.1} parent=15 // pred_check_branch
        %433 = sbr.rel (%p431) target = $region52
      $region51: #{ipa_forward.1} parent=15 // pred_region
        %s434 = smul.u32 8, %s30
        %p435 = scmp.lt.s32.totalorder %s29, 1
        %s436 = scalar_select %p435, %s29, 1
        %p437 = scmp.lt.s32.totalorder %s434, 7
        %s438 = scalar_select %p437, %s434, 7
        %p439 = scmp.lt.s32.totalorder %s31, 0
        %s440 = scalar_select %p439, %s31, 0
        %s441 = sadd.s32 %s440, %s438
        %s442 = smul.addr %s436, 8
        %s443 = sadd.s32 %s441, %s442
        %s444 = smul.addr %s443, 8
        %s445 = scalar_lea.vmem %s9, %s444
        %s446 = smul.u32 8, %s30
      $region52: #{ipa_forward.1} parent=15 // pred_fallthru
        _
    $region16: #{ipa_forward.1} parent=5 // pred_fallthru
      _
    %p447 = scmp.le.s32.totalorder 1, %s22
    %p448 = scmp.lt.s32.totalorder %s22, 3
    %p449 = pnand %p447, %p448
    %p450 = pneg %p449
    // Predicated region
    $region53: #{ipa_forward.1} parent=5 // pred_check
      _
    $region54: #{ipa_forward.1} parent=5 // pred_check_branch
      %452 = sbr.rel (%p449) target = $region56
    $region55: #{ipa_forward.1} parent=5 // pred_region
      %s453 = ssub.s32 %s22, 1
      %p454 = scmp.lt.s32.totalorder %s32, 1
      %s455 = scalar_select %p454, %s32, 1
      %p456 = scmp.lt.s32.totalorder %s33, 0
      %s457 = scalar_select %p456, %s33, 0
      %s458 = sadd.s32 %s457, %s455
      %s459 = smul.addr %s458, 8
      %s460 = scalar_lea.vmem %s1, %s459
      %p461 = pneg %p69
      %p462 = pneg %p66
      %p463 = scmp.lt.s32.totalorder %s32, 1
      %s464 = scalar_select %p463, %s32, 1
      %p465 = scmp.lt.s32.totalorder %s34, 0
      %s466 = scalar_select %p465, %s34, 0
      %s467 = sadd.s32 %s466, %s464
      %s468 = smul.addr %s467, 8
      %s469 = scalar_lea.vmem %s2, %s468
      %p470 = pneg %p97
      %p471 = pneg %p94
      %p472 = scmp.lt.s32.totalorder %s32, 1
      %s473 = scalar_select %p472, %s32, 1
      %p474 = scmp.lt.s32.totalorder %s34, 0
      %s475 = scalar_select %p474, %s34, 0
      %s476 = smul.addr %s475, 2
      %s477 = smul.addr %s473, 2
      %s478 = sadd.s32 %s476, %s477
      %s479 = smul.addr %s478, 8
      %s480 = scalar_lea.vmem %s3, %s479
      %p481 = pneg %p125
      %p482 = pneg %p122
      %p483 = scmp.lt.s32.totalorder %s32, 1
      %s484 = scalar_select %p483, %s32, 1
      %p485 = scmp.lt.s32.totalorder %s33, 0
      %s486 = scalar_select %p485, %s33, 0
      %s487 = sadd.s32 %s486, %s484
      %s488 = smul.addr %s487, 8
      %s489 = scalar_lea.vmem %s4, %s488
      %p490 = pneg %p153
      %p491 = pneg %p150
      %p492 = scmp.lt.s32.totalorder %s32, 1
      %s493 = scalar_select %p492, %s32, 1
      %p494 = scmp.lt.s32.totalorder %s34, 0
      %s495 = scalar_select %p494, %s34, 0
      %s496 = sadd.s32 %s495, %s493
      %s497 = smul.addr %s496, 8
      %s498 = scalar_lea.vmem %s5, %s497
      %p499 = pneg %p181
      %p500 = pneg %p178
      %p501 = scmp.lt.s32.totalorder %s32, 1
      %s502 = scalar_select %p501, %s32, 1
      %p503 = scmp.lt.s32.totalorder %s33, 0
      %s504 = scalar_select %p503, %s33, 0
      %s505 = sadd.s32 %s504, %s502
      %s506 = smul.addr %s505, 8
      %s507 = scalar_lea.vmem %s6, %s506
      %p508 = pneg %p209
      %p509 = pneg %p206
      %p510 = scmp.lt.s32.totalorder %s32, 1
      %s511 = scalar_select %p510, %s32, 1
      %p512 = scmp.lt.s32.totalorder %s34, 0
      %s513 = scalar_select %p512, %s34, 0
      %s514 = smul.addr %s511, 2
      %s515 = sadd.s32 %s513, %s514
      %s516 = smul.addr %s515, 8
      %s517 = scalar_lea.vmem %s7, %s516
      %p518 = pneg %p237
      %p519 = pneg %p234
      %p520 = scmp.lt.s32.totalorder %s32, 1
      %s521 = scalar_select %p520, %s32, 1
      %p522 = scmp.lt.s32.totalorder %s33, 0
      %s523 = scalar_select %p522, %s33, 0
      %p524 = scmp.lt.s32.totalorder %s34, 0
      %s525 = scalar_select %p524, %s34, 0
      %s526 = sadd.s32 %s525, %s523
      %s527 = smul.addr %s521, 4
      %s528 = sadd.s32 %s526, %s527
      %s529 = smul.addr %s528, 8
      %s530 = scalar_lea.vmem %s8, %s529
      %p531 = pneg %p267
      %p532 = pneg %p264
      %s533 = smul.u32 8, %s33
      %p534 = scmp.lt.s32.totalorder %s32, 1
      %s535 = scalar_select %p534, %s32, 1
      %p536 = scmp.lt.s32.totalorder %s533, 7
      %s537 = scalar_select %p536, %s533, 7
      %p538 = scmp.lt.s32.totalorder %s34, 0
      %s539 = scalar_select %p538, %s34, 0
      %s540 = sadd.s32 %s539, %s537
      %s541 = smul.addr %s535, 8
      %s542 = sadd.s32 %s540, %s541
      %s543 = smul.addr %s542, 8
      %s544 = scalar_lea.vmem %s9, %s543
      %p545 = pneg %p297
      %p546 = pneg %p294
      %p547 = pneg %p325
      %p548 = pneg %p322
      %p549 = scmp.lt.s32.totalorder %s32, 1
      %s550 = scalar_select %p549, %s32, 1
      %p551 = scmp.lt.s32.totalorder %s33, 0
      %s552 = scalar_select %p551, %s33, 0
      %s553 = smul.addr %s552, 2
      %s554 = smul.addr %s550, 2
      %s555 = sadd.s32 %s553, %s554
      %s556 = smul.addr %s555, 8
      %s557 = scalar_lea.vmem %s10, %s556
      %p558 = scmp.lt.s32.totalorder %s32, 1
      %s559 = scalar_select %p558, %s32, 1
      %p560 = scmp.lt.s32.totalorder %s33, 0
      %s561 = scalar_select %p560, %s33, 0
      %s562 = sadd.s32 %s561, %s559
      %s563 = smul.addr %s562, 8
      %s564 = scalar_lea.vmem %s1, %s563
      %p565 = scmp.lt.s32.totalorder %s32, 1
      %s566 = scalar_select %p565, %s32, 1
      %p567 = scmp.lt.s32.totalorder %s34, 0
      %s568 = scalar_select %p567, %s34, 0
      %s569 = sadd.s32 %s568, %s566
      %s570 = smul.addr %s569, 8
      %s571 = scalar_lea.vmem %s2, %s570
      %p572 = scmp.lt.s32.totalorder %s32, 1
      %s573 = scalar_select %p572, %s32, 1
      %p574 = scmp.lt.s32.totalorder %s34, 0
      %s575 = scalar_select %p574, %s34, 0
      %s576 = smul.addr %s575, 2
      %s577 = smul.addr %s573, 2
      %s578 = sadd.s32 %s576, %s577
      %s579 = smul.addr %s578, 8
      %s580 = scalar_lea.vmem %s3, %s579
      %p581 = scmp.lt.s32.totalorder %s32, 1
      %s582 = scalar_select %p581, %s32, 1
      %p583 = scmp.lt.s32.totalorder %s33, 0
      %s584 = scalar_select %p583, %s33, 0
      %s585 = sadd.s32 %s584, %s582
      %s586 = smul.addr %s585, 8
      %s587 = scalar_lea.vmem %s4, %s586
      %p588 = scmp.lt.s32.totalorder %s32, 1
      %s589 = scalar_select %p588, %s32, 1
      %p590 = scmp.lt.s32.totalorder %s34, 0
      %s591 = scalar_select %p590, %s34, 0
      %s592 = sadd.s32 %s591, %s589
      %s593 = smul.addr %s592, 8
      %s594 = scalar_lea.vmem %s5, %s593
      %p595 = scmp.lt.s32.totalorder %s32, 1
      %s596 = scalar_select %p595, %s32, 1
      %p597 = scmp.lt.s32.totalorder %s33, 0
      %s598 = scalar_select %p597, %s33, 0
      %s599 = sadd.s32 %s598, %s596
      %s600 = smul.addr %s599, 8
      %s601 = scalar_lea.vmem %s6, %s600
      %p602 = scmp.lt.s32.totalorder %s32, 1
      %s603 = scalar_select %p602, %s32, 1
      %p604 = scmp.lt.s32.totalorder %s34, 0
      %s605 = scalar_select %p604, %s34, 0
      %s606 = smul.addr %s603, 2
      %s607 = sadd.s32 %s605, %s606
      %s608 = smul.addr %s607, 8
      %s609 = scalar_lea.vmem %s7, %s608
      %p610 = scmp.lt.s32.totalorder %s32, 1
      %s611 = scalar_select %p610, %s32, 1
      %p612 = scmp.lt.s32.totalorder %s33, 0
      %s613 = scalar_select %p612, %s33, 0
      %p614 = scmp.lt.s32.totalorder %s34, 0
      %s615 = scalar_select %p614, %s34, 0
      %s616 = sadd.s32 %s615, %s613
      %s617 = smul.addr %s611, 4
      %s618 = sadd.s32 %s616, %s617
      %s619 = smul.addr %s618, 8
      %s620 = scalar_lea.vmem %s8, %s619
      %s621 = smul.u32 8, %s33
      %p622 = scmp.lt.s32.totalorder %s32, 1
      %s623 = scalar_select %p622, %s32, 1
      %p624 = scmp.lt.s32.totalorder %s621, 7
      %s625 = scalar_select %p624, %s621, 7
      %p626 = scmp.lt.s32.totalorder %s34, 0
      %s627 = scalar_select %p626, %s34, 0
      %s628 = sadd.s32 %s627, %s625
      %s629 = smul.addr %s623, 8
      %s630 = sadd.s32 %s628, %s629
      %s631 = smul.addr %s630, 8
      %s632 = scalar_lea.vmem %s9, %s631
      %s633 = smul.u32 8, %s33
      %p634 = scmp.lt.s32.totalorder %s32, 1
      %s635 = scalar_select %p634, %s32, 1
      %p636 = scmp.lt.s32.totalorder %s33, 0
      %s637 = scalar_select %p636, %s33, 0
      %s638 = smul.addr %s637, 2
      %s639 = smul.addr %s635, 2
      %s640 = sadd.s32 %s638, %s639
      %s641 = smul.addr %s640, 8
      %s642 = scalar_lea.vmem %s10, %s641
      %p643 = scmp.eq.s32.totalorder %s34, 0
      // Predicated region
      $region57: #{ipa_forward.1} parent=55 // pred_check
        %p644 = pneg %p643
      $region58: #{ipa_forward.1} parent=55 // pred_check_branch
        %646 = sbr.rel (%p644) target = $region60
      $region59: #{ipa_forward.1} parent=55 // pred_region
        %vm647 = vcmask 31744
        %648 = vst.msk [vmem:[#allocation2] sm:$0xff] %vm647, -1e+30
        %649 = vst.msk [vmem:[#allocation3] sm:$0xff] %vm647, 0.0
        %650 = vst [vmem:[#allocation4] sm:$0xff] 0.0
        %vm651 = vcmask 261120
        %652 = vst.msk [vmem:[#allocation4 + $0x8] sm:$0xff] %vm651, 0.0
        %653 = vst.msk [vmem:[#allocation5] sm:$0xff] %vm651, 0.0
      $region60: #{ipa_forward.1} parent=55 // pred_fallthru
        _
      %v654 = vld [vmem:[%s564] sm:$0xff]
      %v655 = vld [vmem:[%s571] sm:$0xff]
      %v656 = vld [vmem:[%s580] sm:$0xff]
      %v657 = vld [vmem:[%s580 + $0x8] sm:$0xff]
      %v658 = vld [vmem:[%s587] sm:$0xff]
      %v659 = vld [vmem:[%s594] sm:$0xff]
      %v660 = vld [vmem:[%s601] sm:$0xff]
      %v661 = vld [vmem:[%s609] sm:$0xff]
      %v662 = vld [vmem:[%s609 + $0x8] sm:$0xff]
      %v663 = vld [vmem:[%s620] sm:$0xff]
      %v664 = vld [vmem:[%s620 + $0x8] sm:$0xff]
      %v665 = vld [vmem:[%s620 + $0x10] sm:$0xff]
      %v666 = vld [vmem:[%s620 + $0x18] sm:$0xff]
      %v667 = vld [vmem:[%s632] sm:$0xff]
      %v668 = vld [vmem:[%s632 + $0x8] sm:$0xff]
      %v669 = vld [vmem:[%s632 + $0x10] sm:$0xff]
      %v670 = vld [vmem:[%s632 + $0x18] sm:$0xff]
      %v671 = vld [vmem:[%s632 + $0x20] sm:$0xff]
      %v672 = vld [vmem:[%s632 + $0x28] sm:$0xff]
      %v673 = vld [vmem:[%s632 + $0x30] sm:$0xff]
      %v674 = vld [vmem:[%s632 + $0x38] sm:$0xff]
      %vm675 = vcmask 130048
      %v677 = vsel %vm675, %v654, 0
      %v680 = vsel %vm675, %v655, 0
      %682 = vmatprep.subr.mxu0 0.0
      %683 = vmatpush1.xpose.msra.mxu0 %v680
      %684 = vmatprep.subr.mxu0 0.0
      %685 = vmatpush1.xpose.msra.mxu0 0.0
      %686 = vmatprep.subr.mxu0 0.0
      %687 = vmatpush1.xpose.msra.mxu0 0.0
      %688 = vmatprep.subr.mxu0 0.0
      %689 = vmatpush1.xpose.msra.mxu0 0.0
      %690 = vmatprep.subr.mxu0 0.0
      %691 = vmatpush1.xpose.msra.mxu0 0.0
      %692 = vmatprep.subr.mxu0 0.0
      %693 = vmatpush1.xpose.msra.mxu0 0.0
      %694 = vmatprep.subr.mxu0 0.0
      %695 = vmatpush1.xpose.msra.mxu0 0.0
      %696 = vmatprep.subr.mxu0 0.0
      %697 = vmatpush1.xpose.msra.mxu0 0.0
      %698 = vmatprep.subr.mxu0 0.0
      %699 = vmatpush1.xpose.msra.mxu0 0.0
      %700 = vmatprep.subr.mxu0 0.0
      %701 = vmatpush1.xpose.msra.mxu0 0.0
      %702 = vmatprep.subr.mxu0 0.0
      %703 = vmatpush1.xpose.msra.mxu0 0.0
      %704 = vmatprep.subr.mxu0 0.0
      %705 = vmatpush1.xpose.msra.mxu0 0.0
      %706 = vmatprep.subr.mxu0 0.0
      %707 = vmatpush1.xpose.msra.mxu0 0.0
      %708 = vmatprep.subr.mxu0 0.0
      %709 = vmatpush1.xpose.msra.mxu0 0.0
      %710 = vmatprep.subr.mxu0 0.0
      %711 = vmatpush1.xpose.msra.mxu0 0.0
      %712 = vmatprep.subr.mxu0 0.0
      %713 = vmatpush1.xpose.msra.mxu0 0.0
      %714 = vmatprep.subr.mxu0 0.0
      %715 = vmatpush1.xpose.msra.mxu0 0.0
      %716 = vmatprep.subr.mxu0 0.0
      %717 = vmatpush1.xpose.msra.mxu0 0.0
      %718 = vmatprep.subr.mxu0 0.0
      %719 = vmatpush1.xpose.msra.mxu0 0.0
      %720 = vmatprep.subr.mxu0 0.0
      %721 = vmatpush1.xpose.msra.mxu0 0.0
      %722 = vmatprep.subr.mxu0 0.0
      %723 = vmatpush1.xpose.msra.mxu0 0.0
      %724 = vmatprep.subr.mxu0 0.0
      %725 = vmatpush1.xpose.msra.mxu0 0.0
      %726 = vmatprep.subr.mxu0 0.0
      %727 = vmatpush1.xpose.msra.mxu0 0.0
      %728 = vmatprep.subr.mxu0 0.0
      %729 = vmatpush1.xpose.msra.mxu0 0.0
      %730 = vmatprep.subr.mxu0 0.0
      %731 = vmatpush1.xpose.msra.mxu0 0.0
      %732 = vmatprep.subr.mxu0 0.0
      %733 = vmatpush1.xpose.msra.mxu0 0.0
      %734 = vmatprep.subr.mxu0 0.0
      %735 = vmatpush1.xpose.msra.mxu0 0.0
      %736 = vmatprep.subr.mxu0 0.0
      %737 = vmatpush1.xpose.msra.mxu0 0.0
      %738 = vmatprep.subr.mxu0 0.0
      %739 = vmatpush1.xpose.msra.mxu0 0.0
      %740 = vmatprep.subr.mxu0 0.0
      %741 = vmatpush1.xpose.msra.mxu0 0.0
      %742 = vmatprep.subr.mxu0 0.0
      %743 = vmatpush1.xpose.msra.mxu0 0.0
      %744 = vmatprep.subr.mxu0 0.0
      %745 = vmatpush1.xpose.msra.mxu0 0.0
      %746 = vmatprep.mubr.f32.mxu0 0.0
      %747 = vmatmul.mubr.f32.gmra.mrb[0].mxu0 %v677
      %v748 = vpop.f32.mrb[0].mxu0
      %v749 = vadd.f32 0.0, %v748
      %v750 = vpop.f32.mrb[0].mxu0
      %751 = vdwg.mxu0
      %v752 = vmul.f32 %v749, 0.25
      %vm753 = vcmask 23552
      %v755 = vsel %vm753, %v658, 0
      %v758 = vsel %vm753, %v659, 0
      %760 = vmatprep.subr.mxu0 0.0
      %761 = vmatpush1.xpose.msra.mxu0 %v758
      %762 = vmatprep.subr.mxu0 0.0
      %763 = vmatpush1.xpose.msra.mxu0 0.0
      %764 = vmatprep.subr.mxu0 0.0
      %765 = vmatpush1.xpose.msra.mxu0 0.0
      %766 = vmatprep.subr.mxu0 0.0
      %767 = vmatpush1.xpose.msra.mxu0 0.0
      %768 = vmatprep.subr.mxu0 0.0
      %769 = vmatpush1.xpose.msra.mxu0 0.0
      %770 = vmatprep.subr.mxu0 0.0
      %771 = vmatpush1.xpose.msra.mxu0 0.0
      %772 = vmatprep.subr.mxu0 0.0
      %773 = vmatpush1.xpose.msra.mxu0 0.0
      %774 = vmatprep.subr.mxu0 0.0
      %775 = vmatpush1.xpose.msra.mxu0 0.0
      %776 = vmatprep.subr.mxu0 0.0
      %777 = vmatpush1.xpose.msra.mxu0 0.0
      %778 = vmatprep.subr.mxu0 0.0
      %779 = vmatpush1.xpose.msra.mxu0 0.0
      %780 = vmatprep.subr.mxu0 0.0
      %781 = vmatpush1.xpose.msra.mxu0 0.0
      %782 = vmatprep.subr.mxu0 0.0
      %783 = vmatpush1.xpose.msra.mxu0 0.0
      %784 = vmatprep.subr.mxu0 0.0
      %785 = vmatpush1.xpose.msra.mxu0 0.0
      %786 = vmatprep.subr.mxu0 0.0
      %787 = vmatpush1.xpose.msra.mxu0 0.0
      %788 = vmatprep.subr.mxu0 0.0
      %789 = vmatpush1.xpose.msra.mxu0 0.0
      %790 = vmatprep.subr.mxu0 0.0
      %791 = vmatpush1.xpose.msra.mxu0 0.0
      %792 = vmatprep.subr.mxu0 0.0
      %793 = vmatpush1.xpose.msra.mxu0 0.0
      %794 = vmatprep.subr.mxu0 0.0
      %795 = vmatpush1.xpose.msra.mxu0 0.0
      %796 = vmatprep.subr.mxu0 0.0
      %797 = vmatpush1.xpose.msra.mxu0 0.0
      %798 = vmatprep.subr.mxu0 0.0
      %799 = vmatpush1.xpose.msra.mxu0 0.0
      %800 = vmatprep.subr.mxu0 0.0
      %801 = vmatpush1.xpose.msra.mxu0 0.0
      %802 = vmatprep.subr.mxu0 0.0
      %803 = vmatpush1.xpose.msra.mxu0 0.0
      %804 = vmatprep.subr.mxu0 0.0
      %805 = vmatpush1.xpose.msra.mxu0 0.0
      %806 = vmatprep.subr.mxu0 0.0
      %807 = vmatpush1.xpose.msra.mxu0 0.0
      %808 = vmatprep.subr.mxu0 0.0
      %809 = vmatpush1.xpose.msra.mxu0 0.0
      %810 = vmatprep.subr.mxu0 0.0
      %811 = vmatpush1.xpose.msra.mxu0 0.0
      %812 = vmatprep.subr.mxu0 0.0
      %813 = vmatpush1.xpose.msra.mxu0 0.0
      %814 = vmatprep.subr.mxu0 0.0
      %815 = vmatpush1.xpose.msra.mxu0 0.0
      %816 = vmatprep.subr.mxu0 0.0
      %817 = vmatpush1.xpose.msra.mxu0 0.0
      %818 = vmatprep.subr.mxu0 0.0
      %819 = vmatpush1.xpose.msra.mxu0 0.0
      %820 = vmatprep.subr.mxu0 0.0
      %821 = vmatpush1.xpose.msra.mxu0 0.0
      %822 = vmatprep.subr.mxu0 0.0
      %823 = vmatpush1.xpose.msra.mxu0 0.0
      %824 = vmatprep.mubr.f32.mxu0 0.0
      %825 = vmatmul.mubr.f32.gmra.mrb[0].mxu0 %v755
      %v826 = vpop.f32.mrb[0].mxu0
      %v827 = vadd.f32 0.0, %v826
      %v828 = vpop.f32.mrb[0].mxu0
      %829 = vdwg.mxu0
      %831 = vset.pattern.permute.xlu0 0
      %832 = vperm.xlu0 %831, %v660
      %v833 = vpop.permute.xlu0 %832
      %v835 = vlaneseq
      %v836 = vshrl.u32 %v835, 7
      %v837 = vsub.s32 0, %v836
      %v838 = vrot.slane %v661, %v837
      %v839 = vadd.f32 %v833, %v838
      %v840 = vmul.f32 %v827, 2.0
      %v841 = vsub.f32 %v839, %v840
      %v842 = vmax.f32 %v841, 0.0
      %v843 = vrsqrt.pop %v842
      %v844 = vmul.f32 %v842, %v843
      %vm845 = vcmp.eq.f32.partialorder %v842, inf
      %v846 = vsel %vm845, %v842, %v844
      %vm847 = vcmp.eq.f32.partialorder %v842, 0.0
      %v848 = vand.u32 %v842, 2147483648
      %v849 = vsel %vm847, %v848, %v846
      %v850 = vadd.f32 %v849, 0.0
      %851 = vrot.lane.b32.xlu0 %v658, 125
      %v852 = vpop.permute.xlu0 %851
      %853 = vrot.lane.b32.xlu0 %v659, 125
      %v854 = vpop.permute.xlu0 %853
      %v855 = vsel %vm753, %v852, 0
      %v857 = vsel %vm753, %v854, 0
      %859 = vmatprep.subr.mxu0 0.0
      %860 = vmatpush1.xpose.msra.mxu0 %v857
      %861 = vmatprep.subr.mxu0 0.0
      %862 = vmatpush1.xpose.msra.mxu0 0.0
      %863 = vmatprep.subr.mxu0 0.0
      %864 = vmatpush1.xpose.msra.mxu0 0.0
      %865 = vmatprep.subr.mxu0 0.0
      %866 = vmatpush1.xpose.msra.mxu0 0.0
      %867 = vmatprep.subr.mxu0 0.0
      %868 = vmatpush1.xpose.msra.mxu0 0.0
      %869 = vmatprep.subr.mxu0 0.0
      %870 = vmatpush1.xpose.msra.mxu0 0.0
      %871 = vmatprep.subr.mxu0 0.0
      %872 = vmatpush1.xpose.msra.mxu0 0.0
      %873 = vmatprep.subr.mxu0 0.0
      %874 = vmatpush1.xpose.msra.mxu0 0.0
      %875 = vmatprep.subr.mxu0 0.0
      %876 = vmatpush1.xpose.msra.mxu0 0.0
      %877 = vmatprep.subr.mxu0 0.0
      %878 = vmatpush1.xpose.msra.mxu0 0.0
      %879 = vmatprep.subr.mxu0 0.0
      %880 = vmatpush1.xpose.msra.mxu0 0.0
      %881 = vmatprep.subr.mxu0 0.0
      %882 = vmatpush1.xpose.msra.mxu0 0.0
      %883 = vmatprep.subr.mxu0 0.0
      %884 = vmatpush1.xpose.msra.mxu0 0.0
      %885 = vmatprep.subr.mxu0 0.0
      %886 = vmatpush1.xpose.msra.mxu0 0.0
      %887 = vmatprep.subr.mxu0 0.0
      %888 = vmatpush1.xpose.msra.mxu0 0.0
      %889 = vmatprep.subr.mxu0 0.0
      %890 = vmatpush1.xpose.msra.mxu0 0.0
      %891 = vmatprep.subr.mxu0 0.0
      %892 = vmatpush1.xpose.msra.mxu0 0.0
      %893 = vmatprep.subr.mxu0 0.0
      %894 = vmatpush1.xpose.msra.mxu0 0.0
      %895 = vmatprep.subr.mxu0 0.0
      %896 = vmatpush1.xpose.msra.mxu0 0.0
      %897 = vmatprep.subr.mxu0 0.0
      %898 = vmatpush1.xpose.msra.mxu0 0.0
      %899 = vmatprep.subr.mxu0 0.0
      %900 = vmatpush1.xpose.msra.mxu0 0.0
      %901 = vmatprep.subr.mxu0 0.0
      %902 = vmatpush1.xpose.msra.mxu0 0.0
      %903 = vmatprep.subr.mxu0 0.0
      %904 = vmatpush1.xpose.msra.mxu0 0.0
      %905 = vmatprep.subr.mxu0 0.0
      %906 = vmatpush1.xpose.msra.mxu0 0.0
      %907 = vmatprep.subr.mxu0 0.0
      %908 = vmatpush1.xpose.msra.mxu0 0.0
      %909 = vmatprep.subr.mxu0 0.0
      %910 = vmatpush1.xpose.msra.mxu0 0.0
      %911 = vmatprep.subr.mxu0 0.0
      %912 = vmatpush1.xpose.msra.mxu0 0.0
      %913 = vmatprep.subr.mxu0 0.0
      %914 = vmatpush1.xpose.msra.mxu0 0.0
      %915 = vmatprep.subr.mxu0 0.0
      %916 = vmatpush1.xpose.msra.mxu0 0.0
      %917 = vmatprep.subr.mxu0 0.0
      %918 = vmatpush1.xpose.msra.mxu0 0.0
      %919 = vmatprep.subr.mxu0 0.0
      %920 = vmatpush1.xpose.msra.mxu0 0.0
      %921 = vmatprep.subr.mxu0 0.0
      %922 = vmatpush1.xpose.msra.mxu0 0.0
      %923 = vmatprep.mubr.f32.mxu0 0.0
      %924 = vmatmul.mubr.f32.gmra.mrb[0].mxu0 %v855
      %v925 = vpop.f32.mrb[0].mxu0
      %v926 = vadd.f32 0.0, %v925
      %v927 = vpop.f32.mrb[0].mxu0
      %928 = vdwg.mxu0
      %929 = vset.pattern.permute.xlu0 1
      %930 = vperm.xlu0 %929, %v660
      %v931 = vpop.permute.xlu0 %930
      %v933 = vlaneseq
      %v934 = vshrl.u32 %v933, 7
      %v935 = vsub.s32 1, %v934
      %v936 = vrot.slane %v661, %v935
      %v937 = vadd.f32 %v931, %v936
      %v938 = vmul.f32 %v926, 2.0
      %v939 = vsub.f32 %v937, %v938
      %v940 = vmax.f32 %v939, 0.0
      %v941 = vrsqrt.pop %v940
      %v942 = vmul.f32 %v940, %v941
      %vm943 = vcmp.eq.f32.partialorder %v940, inf
      %v944 = vsel %vm943, %v940, %v942
      %vm945 = vcmp.eq.f32.partialorder %v940, 0.0
      %v946 = vand.u32 %v940, 2147483648
      %v947 = vsel %vm945, %v946, %v944
      %v948 = vadd.f32 %v850, %v947
      %949 = vrot.lane.b32.xlu0 %v658, 122
      %v950 = vpop.permute.xlu0 %949
      %951 = vrot.lane.b32.xlu0 %v659, 122
      %v952 = vpop.permute.xlu0 %951
      %v953 = vsel %vm753, %v950, 0
      %v955 = vsel %vm753, %v952, 0
      %957 = vmatprep.subr.mxu0 0.0
      %958 = vmatpush1.xpose.msra.mxu0 %v955
      %959 = vmatprep.subr.mxu0 0.0
      %960 = vmatpush1.xpose.msra.mxu0 0.0
      %961 = vmatprep.subr.mxu0 0.0
      %962 = vmatpush1.xpose.msra.mxu0 0.0
      %963 = vmatprep.subr.mxu0 0.0
      %964 = vmatpush1.xpose.msra.mxu0 0.0
      %965 = vmatprep.subr.mxu0 0.0
      %966 = vmatpush1.xpose.msra.mxu0 0.0
      %967 = vmatprep.subr.mxu0 0.0
      %968 = vmatpush1.xpose.msra.mxu0 0.0
      %969 = vmatprep.subr.mxu0 0.0
      %970 = vmatpush1.xpose.msra.mxu0 0.0
      %971 = vmatprep.subr.mxu0 0.0
      %972 = vmatpush1.xpose.msra.mxu0 0.0
      %973 = vmatprep.subr.mxu0 0.0
      %974 = vmatpush1.xpose.msra.mxu0 0.0
      %975 = vmatprep.subr.mxu0 0.0
      %976 = vmatpush1.xpose.msra.mxu0 0.0
      %977 = vmatprep.subr.mxu0 0.0
      %978 = vmatpush1.xpose.msra.mxu0 0.0
      %979 = vmatprep.subr.mxu0 0.0
      %980 = vmatpush1.xpose.msra.mxu0 0.0
      %981 = vmatprep.subr.mxu0 0.0
      %982 = vmatpush1.xpose.msra.mxu0 0.0
      %983 = vmatprep.subr.mxu0 0.0
      %984 = vmatpush1.xpose.msra.mxu0 0.0
      %985 = vmatprep.subr.mxu0 0.0
      %986 = vmatpush1.xpose.msra.mxu0 0.0
      %987 = vmatprep.subr.mxu0 0.0
      %988 = vmatpush1.xpose.msra.mxu0 0.0
      %989 = vmatprep.subr.mxu0 0.0
      %990 = vmatpush1.xpose.msra.mxu0 0.0
      %991 = vmatprep.subr.mxu0 0.0
      %992 = vmatpush1.xpose.msra.mxu0 0.0
      %993 = vmatprep.subr.mxu0 0.0
      %994 = vmatpush1.xpose.msra.mxu0 0.0
      %995 = vmatprep.subr.mxu0 0.0
      %996 = vmatpush1.xpose.msra.mxu0 0.0
      %997 = vmatprep.subr.mxu0 0.0
      %998 = vmatpush1.xpose.msra.mxu0 0.0
      %999 = vmatprep.subr.mxu0 0.0
      %1000 = vmatpush1.xpose.msra.mxu0 0.0
      %1001 = vmatprep.subr.mxu0 0.0
      %1002 = vmatpush1.xpose.msra.mxu0 0.0
      %1003 = vmatprep.subr.mxu0 0.0
      %1004 = vmatpush1.xpose.msra.mxu0 0.0
      %1005 = vmatprep.subr.mxu0 0.0
      %1006 = vmatpush1.xpose.msra.mxu0 0.0
      %1007 = vmatprep.subr.mxu0 0.0
      %1008 = vmatpush1.xpose.msra.mxu0 0.0
      %1009 = vmatprep.subr.mxu0 0.0
      %1010 = vmatpush1.xpose.msra.mxu0 0.0
      %1011 = vmatprep.subr.mxu0 0.0
      %1012 = vmatpush1.xpose.msra.mxu0 0.0
      %1013 = vmatprep.subr.mxu0 0.0
      %1014 = vmatpush1.xpose.msra.mxu0 0.0
      %1015 = vmatprep.subr.mxu0 0.0
      %1016 = vmatpush1.xpose.msra.mxu0 0.0
      %1017 = vmatprep.subr.mxu0 0.0
      %1018 = vmatpush1.xpose.msra.mxu0 0.0
      %1019 = vmatprep.subr.mxu0 0.0
      %1020 = vmatpush1.xpose.msra.mxu0 0.0
      %1021 = vmatprep.mubr.f32.mxu0 0.0
      %1022 = vmatmul.mubr.f32.gmra.mrb[0].mxu0 %v953
      %v1023 = vpop.f32.mrb[0].mxu0
      %v1024 = vadd.f32 0.0, %v1023
      %v1025 = vpop.f32.mrb[0].mxu0
      %1026 = vdwg.mxu0
      %1027 = vset.pattern.permute.xlu0 2
      %1028 = vperm.xlu0 %1027, %v660
      %v1029 = vpop.permute.xlu0 %1028
      %v1031 = vlaneseq
      %v1032 = vshrl.u32 %v1031, 7
      %v1033 = vsub.s32 2, %v1032
      %v1034 = vrot.slane %v661, %v1033
      %v1035 = vadd.f32 %v1029, %v1034
      %v1036 = vmul.f32 %v1024, 2.0
      %v1037 = vsub.f32 %v1035, %v1036
      %v1038 = vmax.f32 %v1037, 0.0
      %v1039 = vrsqrt.pop %v1038
      %v1040 = vmul.f32 %v1038, %v1039
      %vm1041 = vcmp.eq.f32.partialorder %v1038, inf
      %v1042 = vsel %vm1041, %v1038, %v1040
      %vm1043 = vcmp.eq.f32.partialorder %v1038, 0.0
      %v1044 = vand.u32 %v1038, 2147483648
      %v1045 = vsel %vm1043, %v1044, %v1042
      %v1046 = vadd.f32 %v948, %v1045
      %1047 = vrot.lane.b32.xlu0 %v658, 119
      %v1048 = vpop.permute.xlu0 %1047
      %1049 = vrot.lane.b32.xlu0 %v659, 119
      %v1050 = vpop.permute.xlu0 %1049
      %v1051 = vsel %vm753, %v1048, 0
      %v1053 = vsel %vm753, %v1050, 0
      %1055 = vmatprep.subr.mxu0 0.0
      %1056 = vmatpush1.xpose.msra.mxu0 %v1053
      %1057 = vmatprep.subr.mxu0 0.0
      %1058 = vmatpush1.xpose.msra.mxu0 0.0
      %1059 = vmatprep.subr.mxu0 0.0
      %1060 = vmatpush1.xpose.msra.mxu0 0.0
      %1061 = vmatprep.subr.mxu0 0.0
      %1062 = vmatpush1.xpose.msra.mxu0 0.0
      %1063 = vmatprep.subr.mxu0 0.0
      %1064 = vmatpush1.xpose.msra.mxu0 0.0
      %1065 = vmatprep.subr.mxu0 0.0
      %1066 = vmatpush1.xpose.msra.mxu0 0.0
      %1067 = vmatprep.subr.mxu0 0.0
      %1068 = vmatpush1.xpose.msra.mxu0 0.0
      %1069 = vmatprep.subr.mxu0 0.0
      %1070 = vmatpush1.xpose.msra.mxu0 0.0
      %1071 = vmatprep.subr.mxu0 0.0
      %1072 = vmatpush1.xpose.msra.mxu0 0.0
      %1073 = vmatprep.subr.mxu0 0.0
      %1074 = vmatpush1.xpose.msra.mxu0 0.0
      %1075 = vmatprep.subr.mxu0 0.0
      %1076 = vmatpush1.xpose.msra.mxu0 0.0
      %1077 = vmatprep.subr.mxu0 0.0
      %1078 = vmatpush1.xpose.msra.mxu0 0.0
      %1079 = vmatprep.subr.mxu0 0.0
      %1080 = vmatpush1.xpose.msra.mxu0 0.0
      %1081 = vmatprep.subr.mxu0 0.0
      %1082 = vmatpush1.xpose.msra.mxu0 0.0
      %1083 = vmatprep.subr.mxu0 0.0
      %1084 = vmatpush1.xpose.msra.mxu0 0.0
      %1085 = vmatprep.subr.mxu0 0.0
      %1086 = vmatpush1.xpose.msra.mxu0 0.0
      %1087 = vmatprep.subr.mxu0 0.0
      %1088 = vmatpush1.xpose.msra.mxu0 0.0
      %1089 = vmatprep.subr.mxu0 0.0
      %1090 = vmatpush1.xpose.msra.mxu0 0.0
      %1091 = vmatprep.subr.mxu0 0.0
      %1092 = vmatpush1.xpose.msra.mxu0 0.0
      %1093 = vmatprep.subr.mxu0 0.0
      %1094 = vmatpush1.xpose.msra.mxu0 0.0
      %1095 = vmatprep.subr.mxu0 0.0
      %1096 = vmatpush1.xpose.msra.mxu0 0.0
      %1097 = vmatprep.subr.mxu0 0.0
      %1098 = vmatpush1.xpose.msra.mxu0 0.0
      %1099 = vmatprep.subr.mxu0 0.0
      %1100 = vmatpush1.xpose.msra.mxu0 0.0
      %1101 = vmatprep.subr.mxu0 0.0
      %1102 = vmatpush1.xpose.msra.mxu0 0.0
      %1103 = vmatprep.subr.mxu0 0.0
      %1104 = vmatpush1.xpose.msra.mxu0 0.0
      %1105 = vmatprep.subr.mxu0 0.0
      %1106 = vmatpush1.xpose.msra.mxu0 0.0
      %1107 = vmatprep.subr.mxu0 0.0
      %1108 = vmatpush1.xpose.msra.mxu0 0.0
      %1109 = vmatprep.subr.mxu0 0.0
      %1110 = vmatpush1.xpose.msra.mxu0 0.0
      %1111 = vmatprep.subr.mxu0 0.0
      %1112 = vmatpush1.xpose.msra.mxu0 0.0
      %1113 = vmatprep.subr.mxu0 0.0
      %1114 = vmatpush1.xpose.msra.mxu0 0.0
      %1115 = vmatprep.subr.mxu0 0.0
      %1116 = vmatpush1.xpose.msra.mxu0 0.0
      %1117 = vmatprep.subr.mxu0 0.0
      %1118 = vmatpush1.xpose.msra.mxu0 0.0
      %1119 = vmatprep.mubr.f32.mxu0 0.0
      %1120 = vmatmul.mubr.f32.gmra.mrb[0].mxu0 %v1051
      %v1121 = vpop.f32.mrb[0].mxu0
      %v1122 = vadd.f32 0.0, %v1121
      %v1123 = vpop.f32.mrb[0].mxu0
      %1124 = vdwg.mxu0
      %1125 = vset.pattern.permute.xlu0 3
      %1126 = vperm.xlu0 %1125, %v660
      %v1127 = vpop.permute.xlu0 %1126
      %v1129 = vlaneseq
      %v1130 = vshrl.u32 %v1129, 7
      %v1131 = vsub.s32 3, %v1130
      %v1132 = vrot.slane %v661, %v1131
      %v1133 = vadd.f32 %v1127, %v1132
      %v1134 = vmul.f32 %v1122, 2.0
      %v1135 = vsub.f32 %v1133, %v1134
      %v1136 = vmax.f32 %v1135, 0.0
      %v1137 = vrsqrt.pop %v1136
      %v1138 = vmul.f32 %v1136, %v1137
      %vm1139 = vcmp.eq.f32.partialorder %v1136, inf
      %v1140 = vsel %vm1139, %v1136, %v1138
      %vm1141 = vcmp.eq.f32.partialorder %v1136, 0.0
      %v1142 = vand.u32 %v1136, 2147483648
      %v1143 = vsel %vm1141, %v1142, %v1140
      %v1144 = vadd.f32 %v1046, %v1143
      %s1145 = sld [smem:[#allocation7]]
      %v1146 = vadd.f32 %v752, %v663
      %s1147 = smul.f32 %s1145, 0.11785113
      %v1148 = vstv %s1147
      %v1149 = vmul.f32 %v1148, %v1144
      %v1150 = vsub.f32 %v1146, %v1149
      %v1151 = vmul.f32 %v1150, 0.57735026
      %v1152 = vld [vmem:[#allocation2] sm:$0xff]
      %vm1153 = vcmask 64512
      %v1154 = vsel %vm1153, %v1151, -inf
      %1155 = vmax.xlane.f32.xlu0 %v1154
      %v1156 = vpop.xlane.xlu0 %1155
      %v1157 = vmax.f32 %v1152, %v1156
      %v1158 = vsub.f32 %v1152, %v1157
      %v1159 = vmul.f32 %v1158, 1.442695
      %v1160 = vpow.pop %v1159
      %1162 = vset.pattern.permute.xlu0 0
      %1163 = vperm.xlu0 %1162, %v1157
      %v1164 = vpop.permute.xlu0 %1163
      %v1166 = vsub.f32 %v1151, %v1164
      %v1167 = vmul.f32 %v1166, 1.442695
      %v1168 = vpow.pop %v1167
      %v1169 = vld [vmem:[#allocation3] sm:$0xff]
      %v1170 = vmul.f32 %v1160, %v1169
      %v1171 = vsel %vm1153, %v1168, 0.0
      %1172 = vadd.xlane.f32.xlu0 %v1171
      %v1173 = vpop.xlane.xlu0 %1172
      %v1174 = vadd.f32 %v1170, %v1173
      %vm1175 = vcmask 7168
      %1176 = vst.msk [vmem:[#allocation3] sm:$0xff] %vm1175, %v1174
      %1177 = vst.msk [vmem:[#allocation2] sm:$0xff] %vm1175, %v1157
      %v1178 = vld [vmem:[#allocation4] sm:$0xff]
      %1180 = vset.pattern.permute.xlu0 0
      %1181 = vperm.xlu0 %1180, %v1160
      %v1182 = vpop.permute.xlu0 %1181
      %v1184 = vmul.f32 %v1182, %v1178
      %v1186 = vsel %vm1153, %v1168, 0
      %1188 = vmatprep.subr.mxu0 0.0
      %1189 = vmatpush1.msra.mxu0 %v656
      %1190 = vmatprep.subr.mxu0 0.0
      %1191 = vmatpush1.msra.mxu0 0.0
      %1192 = vmatprep.subr.mxu0 0.0
      %1193 = vmatpush1.msra.mxu0 0.0
      %1194 = vmatprep.subr.mxu0 0.0
      %1195 = vmatpush1.msra.mxu0 0.0
      %1196 = vmatprep.subr.mxu0 0.0
      %1197 = vmatpush1.msra.mxu0 0.0
      %1198 = vmatprep.subr.mxu0 0.0
      %1199 = vmatpush1.msra.mxu0 0.0
      %1200 = vmatprep.subr.mxu0 0.0
      %1201 = vmatpush1.msra.mxu0 0.0
      %1202 = vmatprep.subr.mxu0 0.0
      %1203 = vmatpush1.msra.mxu0 0.0
      %1204 = vmatprep.subr.mxu0 0.0
      %1205 = vmatpush1.msra.mxu0 0.0
      %1206 = vmatprep.subr.mxu0 0.0
      %1207 = vmatpush1.msra.mxu0 0.0
      %1208 = vmatprep.subr.mxu0 0.0
      %1209 = vmatpush1.msra.mxu0 0.0
      %1210 = vmatprep.subr.mxu0 0.0
      %1211 = vmatpush1.msra.mxu0 0.0
      %1212 = vmatprep.subr.mxu0 0.0
      %1213 = vmatpush1.msra.mxu0 0.0
      %1214 = vmatprep.subr.mxu0 0.0
      %1215 = vmatpush1.msra.mxu0 0.0
      %1216 = vmatprep.subr.mxu0 0.0
      %1217 = vmatpush1.msra.mxu0 0.0
      %1218 = vmatprep.subr.mxu0 0.0
      %1219 = vmatpush1.msra.mxu0 0.0
      %1220 = vmatprep.subr.mxu0 0.0
      %1221 = vmatpush1.msra.mxu0 0.0
      %1222 = vmatprep.subr.mxu0 0.0
      %1223 = vmatpush1.msra.mxu0 0.0
      %1224 = vmatprep.subr.mxu0 0.0
      %1225 = vmatpush1.msra.mxu0 0.0
      %1226 = vmatprep.subr.mxu0 0.0
      %1227 = vmatpush1.msra.mxu0 0.0
      %1228 = vmatprep.subr.mxu0 0.0
      %1229 = vmatpush1.msra.mxu0 0.0
      %1230 = vmatprep.subr.mxu0 0.0
      %1231 = vmatpush1.msra.mxu0 0.0
      %1232 = vmatprep.subr.mxu0 0.0
      %1233 = vmatpush1.msra.mxu0 0.0
      %1234 = vmatprep.subr.mxu0 0.0
      %1235 = vmatpush1.msra.mxu0 0.0
      %1236 = vmatprep.subr.mxu0 0.0
      %1237 = vmatpush1.msra.mxu0 0.0
      %1238 = vmatprep.subr.mxu0 0.0
      %1239 = vmatpush1.msra.mxu0 0.0
      %1240 = vmatprep.subr.mxu0 0.0
      %1241 = vmatpush1.msra.mxu0 0.0
      %1242 = vmatprep.subr.mxu0 0.0
      %1243 = vmatpush1.msra.mxu0 0.0
      %1244 = vmatprep.subr.mxu0 0.0
      %1245 = vmatpush1.msra.mxu0 0.0
      %1246 = vmatprep.subr.mxu0 0.0
      %1247 = vmatpush1.msra.mxu0 0.0
      %1248 = vmatprep.subr.mxu0 0.0
      %1249 = vmatpush1.msra.mxu0 0.0
      %1250 = vmatprep.subr.mxu0 0.0
      %1251 = vmatpush1.msra.mxu0 0.0
      %1252 = vmatprep.mubr.f32.mxu0 0.0
      %1253 = vmatmul.mubr.f32.gmra.mrb[0].mxu0 %v1186
      %v1254 = vpop.f32.mrb[0].mxu0
      %v1255 = vadd.f32 0.0, %v1254
      %v1256 = vpop.f32.mrb[0].mxu0
      %1257 = vdwg.mxu0
      %v1258 = vadd.f32 %v1184, %v1255
      %vm1259 = vcmask 326656
      %1260 = vst.msk [vmem:[#allocation4] sm:$0xff] %vm1259, %v1258
      %1261 = vrot.lane.b32.xlu0 %v654, 112
      %v1262 = vpop.permute.xlu0 %1261
      %1263 = vrot.lane.b32.xlu0 %v655, 112
      %v1264 = vpop.permute.xlu0 %1263
      %v1265 = vsel %vm675, %v1262, 0
      %v1267 = vsel %vm675, %v1264, 0
      %1269 = vmatprep.subr.mxu0 0.0
      %1270 = vmatpush1.xpose.msra.mxu0 %v1267
      %1271 = vmatprep.subr.mxu0 0.0
      %1272 = vmatpush1.xpose.msra.mxu0 0.0
      %1273 = vmatprep.subr.mxu0 0.0
      %1274 = vmatpush1.xpose.msra.mxu0 0.0
      %1275 = vmatprep.subr.mxu0 0.0
      %1276 = vmatpush1.xpose.msra.mxu0 0.0
      %1277 = vmatprep.subr.mxu0 0.0
      %1278 = vmatpush1.xpose.msra.mxu0 0.0
      %1279 = vmatprep.subr.mxu0 0.0
      %1280 = vmatpush1.xpose.msra.mxu0 0.0
      %1281 = vmatprep.subr.mxu0 0.0
      %1282 = vmatpush1.xpose.msra.mxu0 0.0
      %1283 = vmatprep.subr.mxu0 0.0
      %1284 = vmatpush1.xpose.msra.mxu0 0.0
      %1285 = vmatprep.subr.mxu0 0.0
      %1286 = vmatpush1.xpose.msra.mxu0 0.0
      %1287 = vmatprep.subr.mxu0 0.0
      %1288 = vmatpush1.xpose.msra.mxu0 0.0
      %1289 = vmatprep.subr.mxu0 0.0
      %1290 = vmatpush1.xpose.msra.mxu0 0.0
      %1291 = vmatprep.subr.mxu0 0.0
      %1292 = vmatpush1.xpose.msra.mxu0 0.0
      %1293 = vmatprep.subr.mxu0 0.0
      %1294 = vmatpush1.xpose.msra.mxu0 0.0
      %1295 = vmatprep.subr.mxu0 0.0
      %1296 = vmatpush1.xpose.msra.mxu0 0.0
      %1297 = vmatprep.subr.mxu0 0.0
      %1298 = vmatpush1.xpose.msra.mxu0 0.0
      %1299 = vmatprep.subr.mxu0 0.0
      %1300 = vmatpush1.xpose.msra.mxu0 0.0
      %1301 = vmatprep.subr.mxu0 0.0
      %1302 = vmatpush1.xpose.msra.mxu0 0.0
      %1303 = vmatprep.subr.mxu0 0.0
      %1304 = vmatpush1.xpose.msra.mxu0 0.0
      %1305 = vmatprep.subr.mxu0 0.0
      %1306 = vmatpush1.xpose.msra.mxu0 0.0
      %1307 = vmatprep.subr.mxu0 0.0
      %1308 = vmatpush1.xpose.msra.mxu0 0.0
      %1309 = vmatprep.subr.mxu0 0.0
      %1310 = vmatpush1.xpose.msra.mxu0 0.0
      %1311 = vmatprep.subr.mxu0 0.0
      %1312 = vmatpush1.xpose.msra.mxu0 0.0
      %1313 = vmatprep.subr.mxu0 0.0
      %1314 = vmatpush1.xpose.msra.mxu0 0.0
      %1315 = vmatprep.subr.mxu0 0.0
      %1316 = vmatpush1.xpose.msra.mxu0 0.0
      %1317 = vmatprep.subr.mxu0 0.0
      %1318 = vmatpush1.xpose.msra.mxu0 0.0
      %1319 = vmatprep.subr.mxu0 0.0
      %1320 = vmatpush1.xpose.msra.mxu0 0.0
      %1321 = vmatprep.subr.mxu0 0.0
      %1322 = vmatpush1.xpose.msra.mxu0 0.0
      %1323 = vmatprep.subr.mxu0 0.0
      %1324 = vmatpush1.xpose.msra.mxu0 0.0
      %1325 = vmatprep.subr.mxu0 0.0
      %1326 = vmatpush1.xpose.msra.mxu0 0.0
      %1327 = vmatprep.subr.mxu0 0.0
      %1328 = vmatpush1.xpose.msra.mxu0 0.0
      %1329 = vmatprep.subr.mxu0 0.0
      %1330 = vmatpush1.xpose.msra.mxu0 0.0
      %1331 = vmatprep.subr.mxu0 0.0
      %1332 = vmatpush1.xpose.msra.mxu0 0.0
      %1333 = vmatprep.mubr.f32.mxu0 0.0
      %1334 = vmatmul.mubr.f32.gmra.mrb[0].mxu0 %v1265
      %v1335 = vpop.f32.mrb[0].mxu0
      %v1336 = vadd.f32 0.0, %v1335
      %v1337 = vpop.f32.mrb[0].mxu0
      %1338 = vdwg.mxu0
      %v1339 = vmul.f32 %v1336, 0.25
      %1340 = vrot.lane.b32.xlu0 %v658, 116
      %v1341 = vpop.permute.xlu0 %1340
      %1342 = vrot.lane.b32.xlu0 %v659, 116
      %v1343 = vpop.permute.xlu0 %1342
      %v1344 = vsel %vm753, %v1341, 0
      %v1346 = vsel %vm753, %v1343, 0
      %1348 = vmatprep.subr.mxu0 0.0
      %1349 = vmatpush1.xpose.msra.mxu0 %v1346
      %1350 = vmatprep.subr.mxu0 0.0
      %1351 = vmatpush1.xpose.msra.mxu0 0.0
      %1352 = vmatprep.subr.mxu0 0.0
      %1353 = vmatpush1.xpose.msra.mxu0 0.0
      %1354 = vmatprep.subr.mxu0 0.0
      %1355 = vmatpush1.xpose.msra.mxu0 0.0
      %1356 = vmatprep.subr.mxu0 0.0
      %1357 = vmatpush1.xpose.msra.mxu0 0.0
      %1358 = vmatprep.subr.mxu0 0.0
      %1359 = vmatpush1.xpose.msra.mxu0 0.0
      %1360 = vmatprep.subr.mxu0 0.0
      %1361 = vmatpush1.xpose.msra.mxu0 0.0
      %1362 = vmatprep.subr.mxu0 0.0
      %1363 = vmatpush1.xpose.msra.mxu0 0.0
      %1364 = vmatprep.subr.mxu0 0.0
      %1365 = vmatpush1.xpose.msra.mxu0 0.0
      %1366 = vmatprep.subr.mxu0 0.0
      %1367 = vmatpush1.xpose.msra.mxu0 0.0
      %1368 = vmatprep.subr.mxu0 0.0
      %1369 = vmatpush1.xpose.msra.mxu0 0.0
      %1370 = vmatprep.subr.mxu0 0.0
      %1371 = vmatpush1.xpose.msra.mxu0 0.0
      %1372 = vmatprep.subr.mxu0 0.0
      %1373 = vmatpush1.xpose.msra.mxu0 0.0
      %1374 = vmatprep.subr.mxu0 0.0
      %1375 = vmatpush1.xpose.msra.mxu0 0.0
      %1376 = vmatprep.subr.mxu0 0.0
      %1377 = vmatpush1.xpose.msra.mxu0 0.0
      %1378 = vmatprep.subr.mxu0 0.0
      %1379 = vmatpush1.xpose.msra.mxu0 0.0
      %1380 = vmatprep.subr.mxu0 0.0
      %1381 = vmatpush1.xpose.msra.mxu0 0.0
      %1382 = vmatprep.subr.mxu0 0.0
      %1383 = vmatpush1.xpose.msra.mxu0 0.0
      %1384 = vmatprep.subr.mxu0 0.0
      %1385 = vmatpush1.xpose.msra.mxu0 0.0
      %1386 = vmatprep.subr.mxu0 0.0
      %1387 = vmatpush1.xpose.msra.mxu0 0.0
      %1388 = vmatprep.subr.mxu0 0.0
      %1389 = vmatpush1.xpose.msra.mxu0 0.0
      %1390 = vmatprep.subr.mxu0 0.0
      %1391 = vmatpush1.xpose.msra.mxu0 0.0
      %1392 = vmatprep.subr.mxu0 0.0
      %1393 = vmatpush1.xpose.msra.mxu0 0.0
      %1394 = vmatprep.subr.mxu0 0.0
      %1395 = vmatpush1.xpose.msra.mxu0 0.0
      %1396 = vmatprep.subr.mxu0 0.0
      %1397 = vmatpush1.xpose.msra.mxu0 0.0
      %1398 = vmatprep.subr.mxu0 0.0
      %1399 = vmatpush1.xpose.msra.mxu0 0.0
      %1400 = vmatprep.subr.mxu0 0.0
      %1401 = vmatpush1.xpose.msra.mxu0 0.0
      %1402 = vmatprep.subr.mxu0 0.0
      %1403 = vmatpush1.xpose.msra.mxu0 0.0
      %1404 = vmatprep.subr.mxu0 0.0
      %1405 = vmatpush1.xpose.msra.mxu0 0.0
      %1406 = vmatprep.subr.mxu0 0.0
      %1407 = vmatpush1.xpose.msra.mxu0 0.0
      %1408 = vmatprep.subr.mxu0 0.0
      %1409 = vmatpush1.xpose.msra.mxu0 0.0
      %1410 = vmatprep.subr.mxu0 0.0
      %1411 = vmatpush1.xpose.msra.mxu0 0.0
      %1412 = vmatprep.mubr.f32.mxu0 0.0
      %1413 = vmatmul.mubr.f32.gmra.mrb[0].mxu0 %v1344
      %v1414 = vpop.f32.mrb[0].mxu0
      %v1415 = vadd.f32 0.0, %v1414
      %v1416 = vpop.f32.mrb[0].mxu0
      %1417 = vdwg.mxu0
      %1418 = vset.pattern.permute.xlu0 4
      %1419 = vperm.xlu0 %1418, %v660
      %v1420 = vpop.permute.xlu0 %1419
      %v1422 = vlaneseq
      %v1423 = vshrl.u32 %v1422, 7
      %v1424 = vsub.s32 4, %v1423
      %v1425 = vrot.slane %v661, %v1424
      %v1426 = vadd.f32 %v1420, %v1425
      %v1427 = vmul.f32 %v1415, 2.0
      %v1428 = vsub.f32 %v1426, %v1427
      %v1429 = vmax.f32 %v1428, 0.0
      %v1430 = vrsqrt.pop %v1429
      %v1431 = vmul.f32 %v1429, %v1430
      %vm1432 = vcmp.eq.f32.partialorder %v1429, inf
      %v1433 = vsel %vm1432, %v1429, %v1431
      %vm1434 = vcmp.eq.f32.partialorder %v1429, 0.0
      %v1435 = vand.u32 %v1429, 2147483648
      %v1436 = vsel %vm1434, %v1435, %v1433
      %v1437 = vadd.f32 %v1436, 0.0
      %1438 = vrot.lane.b32.xlu0 %v658, 113
      %v1439 = vpop.permute.xlu0 %1438
      %1440 = vrot.lane.b32.xlu0 %v659, 113
      %v1441 = vpop.permute.xlu0 %1440
      %v1442 = vsel %vm753, %v1439, 0
      %v1444 = vsel %vm753, %v1441, 0
      %1446 = vmatprep.subr.mxu0 0.0
      %1447 = vmatpush1.xpose.msra.mxu0 %v1444
      %1448 = vmatprep.subr.mxu0 0.0
      %1449 = vmatpush1.xpose.msra.mxu0 0.0
      %1450 = vmatprep.subr.mxu0 0.0
      %1451 = vmatpush1.xpose.msra.mxu0 0.0
      %1452 = vmatprep.subr.mxu0 0.0
      %1453 = vmatpush1.xpose.msra.mxu0 0.0
      %1454 = vmatprep.subr.mxu0 0.0
      %1455 = vmatpush1.xpose.msra.mxu0 0.0
      %1456 = vmatprep.subr.mxu0 0.0
      %1457 = vmatpush1.xpose.msra.mxu0 0.0
      %1458 = vmatprep.subr.mxu0 0.0
      %1459 = vmatpush1.xpose.msra.mxu0 0.0
      %1460 = vmatprep.subr.mxu0 0.0
      %1461 = vmatpush1.xpose.msra.mxu0 0.0
      %1462 = vmatprep.subr.mxu0 0.0
      %1463 = vmatpush1.xpose.msra.mxu0 0.0
      %1464 = vmatprep.subr.mxu0 0.0
      %1465 = vmatpush1.xpose.msra.mxu0 0.0
      %1466 = vmatprep.subr.mxu0 0.0
      %1467 = vmatpush1.xpose.msra.mxu0 0.0
      %1468 = vmatprep.subr.mxu0 0.0
      %1469 = vmatpush1.xpose.msra.mxu0 0.0
      %1470 = vmatprep.subr.mxu0 0.0
      %1471 = vmatpush1.xpose.msra.mxu0 0.0
      %1472 = vmatprep.subr.mxu0 0.0
      %1473 = vmatpush1.xpose.msra.mxu0 0.0
      %1474 = vmatprep.subr.mxu0 0.0
      %1475 = vmatpush1.xpose.msra.mxu0 0.0
      %1476 = vmatprep.subr.mxu0 0.0
      %1477 = vmatpush1.xpose.msra.mxu0 0.0
      %1478 = vmatprep.subr.mxu0 0.0
      %1479 = vmatpush1.xpose.msra.mxu0 0.0
      %1480 = vmatprep.subr.mxu0 0.0
      %1481 = vmatpush1.xpose.msra.mxu0 0.0
      %1482 = vmatprep.subr.mxu0 0.0
      %1483 = vmatpush1.xpose.msra.mxu0 0.0
      %1484 = vmatprep.subr.mxu0 0.0
      %1485 = vmatpush1.xpose.msra.mxu0 0.0
      %1486 = vmatprep.subr.mxu0 0.0
      %1487 = vmatpush1.xpose.msra.mxu0 0.0
      %1488 = vmatprep.subr.mxu0 0.0
      %1489 = vmatpush1.xpose.msra.mxu0 0.0
      %1490 = vmatprep.subr.mxu0 0.0
      %1491 = vmatpush1.xpose.msra.mxu0 0.0
      %1492 = vmatprep.subr.mxu0 0.0
      %1493 = vmatpush1.xpose.msra.mxu0 0.0
      %1494 = vmatprep.subr.mxu0 0.0
      %1495 = vmatpush1.xpose.msra.mxu0 0.0
      %1496 = vmatprep.subr.mxu0 0.0
      %1497 = vmatpush1.xpose.msra.mxu0 0.0
      %1498 = vmatprep.subr.mxu0 0.0
      %1499 = vmatpush1.xpose.msra.mxu0 0.0
      %1500 = vmatprep.subr.mxu0 0.0
      %1501 = vmatpush1.xpose.msra.mxu0 0.0
      %1502 = vmatprep.subr.mxu0 0.0
      %1503 = vmatpush1.xpose.msra.mxu0 0.0
      %1504 = vmatprep.subr.mxu0 0.0
      %1505 = vmatpush1.xpose.msra.mxu0 0.0
      %1506 = vmatprep.subr.mxu0 0.0
      %1507 = vmatpush1.xpose.msra.mxu0 0.0
      %1508 = vmatprep.subr.mxu0 0.0
      %1509 = vmatpush1.xpose.msra.mxu0 0.0
      %1510 = vmatprep.mubr.f32.mxu0 0.0
      %1511 = vmatmul.mubr.f32.gmra.mrb[0].mxu0 %v1442
      %v1512 = vpop.f32.mrb[0].mxu0
      %v1513 = vadd.f32 0.0, %v1512
      %v1514 = vpop.f32.mrb[0].mxu0
      %1515 = vdwg.mxu0
      %1516 = vset.pattern.permute.xlu0 5
      %1517 = vperm.xlu0 %1516, %v660
      %v1518 = vpop.permute.xlu0 %1517
      %v1520 = vlaneseq
      %v1521 = vshrl.u32 %v1520, 7
      %v1522 = vsub.s32 5, %v1521
      %v1523 = vrot.slane %v661, %v1522
      %v1524 = vadd.f32 %v1518, %v1523
      %v1525 = vmul.f32 %v1513, 2.0
      %v1526 = vsub.f32 %v1524, %v1525
      %v1527 = vmax.f32 %v1526, 0.0
      %v1528 = vrsqrt.pop %v1527
      %v1529 = vmul.f32 %v1527, %v1528
      %vm1530 = vcmp.eq.f32.partialorder %v1527, inf
      %v1531 = vsel %vm1530, %v1527, %v1529
      %vm1532 = vcmp.eq.f32.partialorder %v1527, 0.0
      %v1533 = vand.u32 %v1527, 2147483648
      %v1534 = vsel %vm1532, %v1533, %v1531
      %v1535 = vadd.f32 %v1437, %v1534
      %1536 = vrot.lane.b32.xlu0 %v658, 110
      %v1537 = vpop.permute.xlu0 %1536
      %1538 = vrot.lane.b32.xlu0 %v659, 110
      %v1539 = vpop.permute.xlu0 %1538
      %v1540 = vsel %vm753, %v1537, 0
      %v1542 = vsel %vm753, %v1539, 0
      %1544 = vmatprep.subr.mxu0 0.0
      %1545 = vmatpush1.xpose.msra.mxu0 %v1542
      %1546 = vmatprep.subr.mxu0 0.0
      %1547 = vmatpush1.xpose.msra.mxu0 0.0
      %1548 = vmatprep.subr.mxu0 0.0
      %1549 = vmatpush1.xpose.msra.mxu0 0.0
      %1550 = vmatprep.subr.mxu0 0.0
      %1551 = vmatpush1.xpose.msra.mxu0 0.0
      %1552 = vmatprep.subr.mxu0 0.0
      %1553 = vmatpush1.xpose.msra.mxu0 0.0
      %1554 = vmatprep.subr.mxu0 0.0
      %1555 = vmatpush1.xpose.msra.mxu0 0.0
      %1556 = vmatprep.subr.mxu0 0.0
      %1557 = vmatpush1.xpose.msra.mxu0 0.0
      %1558 = vmatprep.subr.mxu0 0.0
      %1559 = vmatpush1.xpose.msra.mxu0 0.0
      %1560 = vmatprep.subr.mxu0 0.0
      %1561 = vmatpush1.xpose.msra.mxu0 0.0
      %1562 = vmatprep.subr.mxu0 0.0
      %1563 = vmatpush1.xpose.msra.mxu0 0.0
      %1564 = vmatprep.subr.mxu0 0.0
      %1565 = vmatpush1.xpose.msra.mxu0 0.0
      %1566 = vmatprep.subr.mxu0 0.0
      %1567 = vmatpush1.xpose.msra.mxu0 0.0
      %1568 = vmatprep.subr.mxu0 0.0
      %1569 = vmatpush1.xpose.msra.mxu0 0.0
      %1570 = vmatprep.subr.mxu0 0.0
      %1571 = vmatpush1.xpose.msra.mxu0 0.0
      %1572 = vmatprep.subr.mxu0 0.0
      %1573 = vmatpush1.xpose.msra.mxu0 0.0
      %1574 = vmatprep.subr.mxu0 0.0
      %1575 = vmatpush1.xpose.msra.mxu0 0.0
      %1576 = vmatprep.subr.mxu0 0.0
      %1577 = vmatpush1.xpose.msra.mxu0 0.0
      %1578 = vmatprep.subr.mxu0 0.0
      %1579 = vmatpush1.xpose.msra.mxu0 0.0
      %1580 = vmatprep.subr.mxu0 0.0
      %1581 = vmatpush1.xpose.msra.mxu0 0.0
      %1582 = vmatprep.subr.mxu0 0.0
      %1583 = vmatpush1.xpose.msra.mxu0 0.0
      %1584 = vmatprep.subr.mxu0 0.0
      %1585 = vmatpush1.xpose.msra.mxu0 0.0
      %1586 = vmatprep.subr.mxu0 0.0
      %1587 = vmatpush1.xpose.msra.mxu0 0.0
      %1588 = vmatprep.subr.mxu0 0.0
      %1589 = vmatpush1.xpose.msra.mxu0 0.0
      %1590 = vmatprep.subr.mxu0 0.0
      %1591 = vmatpush1.xpose.msra.mxu0 0.0
      %1592 = vmatprep.subr.mxu0 0.0
      %1593 = vmatpush1.xpose.msra.mxu0 0.0
      %1594 = vmatprep.subr.mxu0 0.0
      %1595 = vmatpush1.xpose.msra.mxu0 0.0
      %1596 = vmatprep.subr.mxu0 0.0
      %1597 = vmatpush1.xpose.msra.mxu0 0.0
      %1598 = vmatprep.subr.mxu0 0.0
      %1599 = vmatpush1.xpose.msra.mxu0 0.0
      %1600 = vmatprep.subr.mxu0 0.0
      %1601 = vmatpush1.xpose.msra.mxu0 0.0
      %1602 = vmatprep.subr.mxu0 0.0
      %1603 = vmatpush1.xpose.msra.mxu0 0.0
      %1604 = vmatprep.subr.mxu0 0.0
      %1605 = vmatpush1.xpose.msra.mxu0 0.0
      %1606 = vmatprep.subr.mxu0 0.0
      %1607 = vmatpush1.xpose.msra.mxu0 0.0
      %1608 = vmatprep.mubr.f32.mxu0 0.0
      %1609 = vmatmul.mubr.f32.gmra.mrb[0].mxu0 %v1540
      %v1610 = vpop.f32.mrb[0].mxu0
      %v1611 = vadd.f32 0.0, %v1610
      %v1612 = vpop.f32.mrb[0].mxu0
      %1613 = vdwg.mxu0
      %1614 = vset.pattern.permute.xlu0 6
      %1615 = vperm.xlu0 %1614, %v660
      %v1616 = vpop.permute.xlu0 %1615
      %v1618 = vlaneseq
      %v1619 = vshrl.u32 %v1618, 7
      %v1620 = vsub.s32 6, %v1619
      %v1621 = vrot.slane %v661, %v1620
      %v1622 = vadd.f32 %v1616, %v1621
      %v1623 = vmul.f32 %v1611, 2.0
      %v1624 = vsub.f32 %v1622, %v1623
      %v1625 = vmax.f32 %v1624, 0.0
      %v1626 = vrsqrt.pop %v1625
      %v1627 = vmul.f32 %v1625, %v1626
      %vm1628 = vcmp.eq.f32.partialorder %v1625, inf
      %v1629 = vsel %vm1628, %v1625, %v1627
      %vm1630 = vcmp.eq.f32.partialorder %v1625, 0.0
      %v1631 = vand.u32 %v1625, 2147483648
      %v1632 = vsel %vm1630, %v1631, %v1629
      %v1633 = vadd.f32 %v1535, %v1632
      %1634 = vrot.lane.b32.xlu0 %v658, 107
      %v1635 = vpop.permute.xlu0 %1634
      %1636 = vrot.lane.b32.xlu0 %v659, 107
      %v1637 = vpop.permute.xlu0 %1636
      %v1638 = vsel %vm753, %v1635, 0
      %v1640 = vsel %vm753, %v1637, 0
      %1642 = vmatprep.subr.mxu0 0.0
      %1643 = vmatpush1.xpose.msra.mxu0 %v1640
      %1644 = vmatprep.subr.mxu0 0.0
      %1645 = vmatpush1.xpose.msra.mxu0 0.0
      %1646 = vmatprep.subr.mxu0 0.0
      %1647 = vmatpush1.xpose.msra.mxu0 0.0
      %1648 = vmatprep.subr.mxu0 0.0
      %1649 = vmatpush1.xpose.msra.mxu0 0.0
      %1650 = vmatprep.subr.mxu0 0.0
      %1651 = vmatpush1.xpose.msra.mxu0 0.0
      %1652 = vmatprep.subr.mxu0 0.0
      %1653 = vmatpush1.xpose.msra.mxu0 0.0
      %1654 = vmatprep.subr.mxu0 0.0
      %1655 = vmatpush1.xpose.msra.mxu0 0.0
      %1656 = vmatprep.subr.mxu0 0.0
      %1657 = vmatpush1.xpose.msra.mxu0 0.0
      %1658 = vmatprep.subr.mxu0 0.0
      %1659 = vmatpush1.xpose.msra.mxu0 0.0
      %1660 = vmatprep.subr.mxu0 0.0
      %1661 = vmatpush1.xpose.msra.mxu0 0.0
      %1662 = vmatprep.subr.mxu0 0.0
      %1663 = vmatpush1.xpose.msra.mxu0 0.0
      %1664 = vmatprep.subr.mxu0 0.0
      %1665 = vmatpush1.xpose.msra.mxu0 0.0
      %1666 = vmatprep.subr.mxu0 0.0
      %1667 = vmatpush1.xpose.msra.mxu0 0.0
      %1668 = vmatprep.subr.mxu0 0.0
      %1669 = vmatpush1.xpose.msra.mxu0 0.0
      %1670 = vmatprep.subr.mxu0 0.0
      %1671 = vmatpush1.xpose.msra.mxu0 0.0
      %1672 = vmatprep.subr.mxu0 0.0
      %1673 = vmatpush1.xpose.msra.mxu0 0.0
      %1674 = vmatprep.subr.mxu0 0.0
      %1675 = vmatpush1.xpose.msra.mxu0 0.0
      %1676 = vmatprep.subr.mxu0 0.0
      %1677 = vmatpush1.xpose.msra.mxu0 0.0
      %1678 = vmatprep.subr.mxu0 0.0
      %1679 = vmatpush1.xpose.msra.mxu0 0.0
      %1680 = vmatprep.subr.mxu0 0.0
      %1681 = vmatpush1.xpose.msra.mxu0 0.0
      %1682 = vmatprep.subr.mxu0 0.0
      %1683 = vmatpush1.xpose.msra.mxu0 0.0
      %1684 = vmatprep.subr.mxu0 0.0
      %1685 = vmatpush1.xpose.msra.mxu0 0.0
      %1686 = vmatprep.subr.mxu0 0.0
      %1687 = vmatpush1.xpose.msra.mxu0 0.0
      %1688 = vmatprep.subr.mxu0 0.0
      %1689 = vmatpush1.xpose.msra.mxu0 0.0
      %1690 = vmatprep.subr.mxu0 0.0
      %1691 = vmatpush1.xpose.msra.mxu0 0.0
      %1692 = vmatprep.subr.mxu0 0.0
      %1693 = vmatpush1.xpose.msra.mxu0 0.0
      %1694 = vmatprep.subr.mxu0 0.0
      %1695 = vmatpush1.xpose.msra.mxu0 0.0
      %1696 = vmatprep.subr.mxu0 0.0
      %1697 = vmatpush1.xpose.msra.mxu0 0.0
      %1698 = vmatprep.subr.mxu0 0.0
      %1699 = vmatpush1.xpose.msra.mxu0 0.0
      %1700 = vmatprep.subr.mxu0 0.0
      %1701 = vmatpush1.xpose.msra.mxu0 0.0
      %1702 = vmatprep.subr.mxu0 0.0
      %1703 = vmatpush1.xpose.msra.mxu0 0.0
      %1704 = vmatprep.subr.mxu0 0.0
      %1705 = vmatpush1.xpose.msra.mxu0 0.0
      %1706 = vmatprep.mubr.f32.mxu0 0.0
      %1707 = vmatmul.mubr.f32.gmra.mrb[0].mxu0 %v1638
      %v1708 = vpop.f32.mrb[0].mxu0
      %v1709 = vadd.f32 0.0, %v1708
      %v1710 = vpop.f32.mrb[0].mxu0
      %1711 = vdwg.mxu0
      %1712 = vset.pattern.permute.xlu0 7
      %1713 = vperm.xlu0 %1712, %v660
      %v1714 = vpop.permute.xlu0 %1713
      %v1716 = vlaneseq
      %v1717 = vshrl.u32 %v1716, 7
      %v1718 = vsub.s32 7, %v1717
      %v1719 = vrot.slane %v661, %v1718
      %v1720 = vadd.f32 %v1714, %v1719
      %v1721 = vmul.f32 %v1709, 2.0
      %v1722 = vsub.f32 %v1720, %v1721
      %v1723 = vmax.f32 %v1722, 0.0
      %v1724 = vrsqrt.pop %v1723
      %v1725 = vmul.f32 %v1723, %v1724
      %vm1726 = vcmp.eq.f32.partialorder %v1723, inf
      %v1727 = vsel %vm1726, %v1723, %v1725
      %vm1728 = vcmp.eq.f32.partialorder %v1723, 0.0
      %v1729 = vand.u32 %v1723, 2147483648
      %v1730 = vsel %vm1728, %v1729, %v1727
      %v1731 = vadd.f32 %v1633, %v1730
      %s1732 = sld [smem:[#allocation7 + $0x1]]
      %v1733 = vadd.f32 %v1339, %v664
      %s1734 = smul.f32 %s1732, 0.11785113
      %v1735 = vstv %s1734
      %v1736 = vmul.f32 %v1735, %v1731
      %v1737 = vsub.f32 %v1733, %v1736
      %v1738 = vmul.f32 %v1737, 0.57735026
      %v1739 = vld [vmem:[#allocation2] sm:$0xff]
      %v1740 = vsel %vm1153, %v1738, -inf
      %1741 = vmax.xlane.f32.xlu0 %v1740
      %v1742 = vpop.xlane.xlu0 %1741
      %v1743 = vmax.f32 %v1739, %v1742
      %v1744 = vsub.f32 %v1739, %v1743
      %v1745 = vmul.f32 %v1744, 1.442695
      %v1746 = vpow.pop %v1745
      %1748 = vset.pattern.permute.xlu0 1
      %1749 = vperm.xlu0 %1748, %v1743
      %v1750 = vpop.permute.xlu0 %1749
      %v1752 = vsub.f32 %v1738, %v1750
      %v1753 = vmul.f32 %v1752, 1.442695
      %v1754 = vpow.pop %v1753
      %v1755 = vld [vmem:[#allocation3] sm:$0xff]
      %v1756 = vmul.f32 %v1746, %v1755
      %v1757 = vsel %vm1153, %v1754, 0.0
      %1758 = vadd.xlane.f32.xlu0 %v1757
      %v1759 = vpop.xlane.xlu0 %1758
      %v1760 = vadd.f32 %v1756, %v1759
      %vm1761 = vcmask 15368
      %1762 = vst.msk [vmem:[#allocation3] sm:$0xff] %vm1761, %v1760
      %1763 = vst.msk [vmem:[#allocation2] sm:$0xff] %vm1761, %v1743
      %v1764 = vld [vmem:[#allocation4] sm:$0xff]
      %1766 = vset.pattern.permute.xlu0 1
      %1767 = vperm.xlu0 %1766, %v1746
      %v1768 = vpop.permute.xlu0 %1767
      %v1770 = vmul.f32 %v1768, %v1764
      %1772 = vrot.lane.b32.xlu0 %v656, 88
      %v1773 = vpop.permute.xlu0 %1772
      %v1776 = vsel %vm1153, %v1754, 0
      %1778 = vmatprep.subr.mxu0 0.0
      %1779 = vmatpush1.msra.mxu0 %v1773
      %1780 = vmatprep.subr.mxu0 0.0
      %1781 = vmatpush1.msra.mxu0 0.0
      %1782 = vmatprep.subr.mxu0 0.0
      %1783 = vmatpush1.msra.mxu0 0.0
      %1784 = vmatprep.subr.mxu0 0.0
      %1785 = vmatpush1.msra.mxu0 0.0
      %1786 = vmatprep.subr.mxu0 0.0
      %1787 = vmatpush1.msra.mxu0 0.0
      %1788 = vmatprep.subr.mxu0 0.0
      %1789 = vmatpush1.msra.mxu0 0.0
      %1790 = vmatprep.subr.mxu0 0.0
      %1791 = vmatpush1.msra.mxu0 0.0
      %1792 = vmatprep.subr.mxu0 0.0
      %1793 = vmatpush1.msra.mxu0 0.0
      %1794 = vmatprep.subr.mxu0 0.0
      %1795 = vmatpush1.msra.mxu0 0.0
      %1796 = vmatprep.subr.mxu0 0.0
      %1797 = vmatpush1.msra.mxu0 0.0
      %1798 = vmatprep.subr.mxu0 0.0
      %1799 = vmatpush1.msra.mxu0 0.0
      %1800 = vmatprep.subr.mxu0 0.0
      %1801 = vmatpush1.msra.mxu0 0.0
      %1802 = vmatprep.subr.mxu0 0.0
      %1803 = vmatpush1.msra.mxu0 0.0
      %1804 = vmatprep.subr.mxu0 0.0
      %1805 = vmatpush1.msra.mxu0 0.0
      %1806 = vmatprep.subr.mxu0 0.0
      %1807 = vmatpush1.msra.mxu0 0.0
      %1808 = vmatprep.subr.mxu0 0.0
      %1809 = vmatpush1.msra.mxu0 0.0
      %1810 = vmatprep.subr.mxu0 0.0
      %1811 = vmatpush1.msra.mxu0 0.0
      %1812 = vmatprep.subr.mxu0 0.0
      %1813 = vmatpush1.msra.mxu0 0.0
      %1814 = vmatprep.subr.mxu0 0.0
      %1815 = vmatpush1.msra.mxu0 0.0
      %1816 = vmatprep.subr.mxu0 0.0
      %1817 = vmatpush1.msra.mxu0 0.0
      %1818 = vmatprep.subr.mxu0 0.0
      %1819 = vmatpush1.msra.mxu0 0.0
      %1820 = vmatprep.subr.mxu0 0.0
      %1821 = vmatpush1.msra.mxu0 0.0
      %1822 = vmatprep.subr.mxu0 0.0
      %1823 = vmatpush1.msra.mxu0 0.0
      %1824 = vmatprep.subr.mxu0 0.0
      %1825 = vmatpush1.msra.mxu0 0.0
      %1826 = vmatprep.subr.mxu0 0.0
      %1827 = vmatpush1.msra.mxu0 0.0
      %1828 = vmatprep.subr.mxu0 0.0
      %1829 = vmatpush1.msra.mxu0 0.0
      %1830 = vmatprep.subr.mxu0 0.0
      %1831 = vmatpush1.msra.mxu0 0.0
      %1832 = vmatprep.subr.mxu0 0.0
      %1833 = vmatpush1.msra.mxu0 0.0
      %1834 = vmatprep.subr.mxu0 0.0
      %1835 = vmatpush1.msra.mxu0 0.0
      %1836 = vmatprep.subr.mxu0 0.0
      %1837 = vmatpush1.msra.mxu0 0.0
      %1838 = vmatprep.subr.mxu0 0.0
      %1839 = vmatpush1.msra.mxu0 0.0
      %1840 = vmatprep.subr.mxu0 0.0
      %1841 = vmatpush1.msra.mxu0 0.0
      %1842 = vmatprep.mubr.f32.mxu0 0.0
      %1843 = vmatmul.mubr.f32.gmra.mrb[0].mxu0 %v1776
      %v1844 = vpop.f32.mrb[0].mxu0
      %v1845 = vadd.f32 0.0, %v1844
      %v1846 = vpop.f32.mrb[0].mxu0
      %1847 = vdwg.mxu0
      %1849 = vrot.lane.b32.xlu0 %v1845, 40
      %v1850 = vpop.permute.xlu0 %1849
      %v1852 = vadd.f32 %v1770, %v1850
      %vm1853 = vcmask 654656
      %1854 = vst.msk [vmem:[#allocation4] sm:$0xff] %vm1853, %v1852
      %1855 = vrot.lane.b32.xlu0 %v654, 96
      %v1856 = vpop.permute.xlu0 %1855
      %1857 = vrot.lane.b32.xlu0 %v655, 96
      %v1858 = vpop.permute.xlu0 %1857
      %v1859 = vsel %vm675, %v1856, 0
      %v1861 = vsel %vm675, %v1858, 0
      %1863 = vmatprep.subr.mxu0 0.0
      %1864 = vmatpush1.xpose.msra.mxu0 %v1861
      %1865 = vmatprep.subr.mxu0 0.0
      %1866 = vmatpush1.xpose.msra.mxu0 0.0
      %1867 = vmatprep.subr.mxu0 0.0
      %1868 = vmatpush1.xpose.msra.mxu0 0.0
      %1869 = vmatprep.subr.mxu0 0.0
      %1870 = vmatpush1.xpose.msra.mxu0 0.0
      %1871 = vmatprep.subr.mxu0 0.0
      %1872 = vmatpush1.xpose.msra.mxu0 0.0
      %1873 = vmatprep.subr.mxu0 0.0
      %1874 = vmatpush1.xpose.msra.mxu0 0.0
      %1875 = vmatprep.subr.mxu0 0.0
      %1876 = vmatpush1.xpose.msra.mxu0 0.0
      %1877 = vmatprep.subr.mxu0 0.0
      %1878 = vmatpush1.xpose.msra.mxu0 0.0
      %1879 = vmatprep.subr.mxu0 0.0
      %1880 = vmatpush1.xpose.msra.mxu0 0.0
      %1881 = vmatprep.subr.mxu0 0.0
      %1882 = vmatpush1.xpose.msra.mxu0 0.0
      %1883 = vmatprep.subr.mxu0 0.0
      %1884 = vmatpush1.xpose.msra.mxu0 0.0
      %1885 = vmatprep.subr.mxu0 0.0
      %1886 = vmatpush1.xpose.msra.mxu0 0.0
      %1887 = vmatprep.subr.mxu0 0.0
      %1888 = vmatpush1.xpose.msra.mxu0 0.0
      %1889 = vmatprep.subr.mxu0 0.0
      %1890 = vmatpush1.xpose.msra.mxu0 0.0
      %1891 = vmatprep.subr.mxu0 0.0
      %1892 = vmatpush1.xpose.msra.mxu0 0.0
      %1893 = vmatprep.subr.mxu0 0.0
      %1894 = vmatpush1.xpose.msra.mxu0 0.0
      %1895 = vmatprep.subr.mxu0 0.0
      %1896 = vmatpush1.xpose.msra.mxu0 0.0
      %1897 = vmatprep.subr.mxu0 0.0
      %1898 = vmatpush1.xpose.msra.mxu0 0.0
      %1899 = vmatprep.subr.mxu0 0.0
      %1900 = vmatpush1.xpose.msra.mxu0 0.0
      %1901 = vmatprep.subr.mxu0 0.0
      %1902 = vmatpush1.xpose.msra.mxu0 0.0
      %1903 = vmatprep.subr.mxu0 0.0
      %1904 = vmatpush1.xpose.msra.mxu0 0.0
      %1905 = vmatprep.subr.mxu0 0.0
      %1906 = vmatpush1.xpose.msra.mxu0 0.0
      %1907 = vmatprep.subr.mxu0 0.0
      %1908 = vmatpush1.xpose.msra.mxu0 0.0
      %1909 = vmatprep.subr.mxu0 0.0
      %1910 = vmatpush1.xpose.msra.mxu0 0.0
      %1911 = vmatprep.subr.mxu0 0.0
      %1912 = vmatpush1.xpose.msra.mxu0 0.0
      %1913 = vmatprep.subr.mxu0 0.0
      %1914 = vmatpush1.xpose.msra.mxu0 0.0
      %1915 = vmatprep.subr.mxu0 0.0
      %1916 = vmatpush1.xpose.msra.mxu0 0.0
      %1917 = vmatprep.subr.mxu0 0.0
      %1918 = vmatpush1.xpose.msra.mxu0 0.0
      %1919 = vmatprep.subr.mxu0 0.0
      %1920 = vmatpush1.xpose.msra.mxu0 0.0
      %1921 = vmatprep.subr.mxu0 0.0
      %1922 = vmatpush1.xpose.msra.mxu0 0.0
      %1923 = vmatprep.subr.mxu0 0.0
      %1924 = vmatpush1.xpose.msra.mxu0 0.0
      %1925 = vmatprep.subr.mxu0 0.0
      %1926 = vmatpush1.xpose.msra.mxu0 0.0
      %1927 = vmatprep.mubr.f32.mxu0 0.0
      %1928 = vmatmul.mubr.f32.gmra.mrb[0].mxu0 %v1859
      %v1929 = vpop.f32.mrb[0].mxu0
      %v1930 = vadd.f32 0.0, %v1929
      %v1931 = vpop.f32.mrb[0].mxu0
      %1932 = vdwg.mxu0
      %v1933 = vmul.f32 %v1930, 0.25
      %1934 = vrot.lane.b32.xlu0 %v658, 104
      %v1935 = vpop.permute.xlu0 %1934
      %1936 = vrot.lane.b32.xlu0 %v659, 104
      %v1937 = vpop.permute.xlu0 %1936
      %v1938 = vsel %vm753, %v1935, 0
      %v1940 = vsel %vm753, %v1937, 0
      %1942 = vmatprep.subr.mxu0 0.0
      %1943 = vmatpush1.xpose.msra.mxu0 %v1940
      %1944 = vmatprep.subr.mxu0 0.0
      %1945 = vmatpush1.xpose.msra.mxu0 0.0
      %1946 = vmatprep.subr.mxu0 0.0
      %1947 = vmatpush1.xpose.msra.mxu0 0.0
      %1948 = vmatprep.subr.mxu0 0.0
      %1949 = vmatpush1.xpose.msra.mxu0 0.0
      %1950 = vmatprep.subr.mxu0 0.0
      %1951 = vmatpush1.xpose.msra.mxu0 0.0
      %1952 = vmatprep.subr.mxu0 0.0
      %1953 = vmatpush1.xpose.msra.mxu0 0.0
      %1954 = vmatprep.subr.mxu0 0.0
      %1955 = vmatpush1.xpose.msra.mxu0 0.0
      %1956 = vmatprep.subr.mxu0 0.0
      %1957 = vmatpush1.xpose.msra.mxu0 0.0
      %1958 = vmatprep.subr.mxu0 0.0
      %1959 = vmatpush1.xpose.msra.mxu0 0.0
      %1960 = vmatprep.subr.mxu0 0.0
      %1961 = vmatpush1.xpose.msra.mxu0 0.0
      %1962 = vmatprep.subr.mxu0 0.0
      %1963 = vmatpush1.xpose.msra.mxu0 0.0
      %1964 = vmatprep.subr.mxu0 0.0
      %1965 = vmatpush1.xpose.msra.mxu0 0.0
      %1966 = vmatprep.subr.mxu0 0.0
      %1967 = vmatpush1.xpose.msra.mxu0 0.0
      %1968 = vmatprep.subr.mxu0 0.0
      %1969 = vmatpush1.xpose.msra.mxu0 0.0
      %1970 = vmatprep.subr.mxu0 0.0
      %1971 = vmatpush1.xpose.msra.mxu0 0.0
      %1972 = vmatprep.subr.mxu0 0.0
      %1973 = vmatpush1.xpose.msra.mxu0 0.0
      %1974 = vmatprep.subr.mxu0 0.0
      %1975 = vmatpush1.xpose.msra.mxu0 0.0
      %1976 = vmatprep.subr.mxu0 0.0
      %1977 = vmatpush1.xpose.msra.mxu0 0.0
      %1978 = vmatprep.subr.mxu0 0.0
      %1979 = vmatpush1.xpose.msra.mxu0 0.0
      %1980 = vmatprep.subr.mxu0 0.0
      %1981 = vmatpush1.xpose.msra.mxu0 0.0
      %1982 = vmatprep.subr.mxu0 0.0
      %1983 = vmatpush1.xpose.msra.mxu0 0.0
      %1984 = vmatprep.subr.mxu0 0.0
      %1985 = vmatpush1.xpose.msra.mxu0 0.0
      %1986 = vmatprep.subr.mxu0 0.0
      %1987 = vmatpush1.xpose.msra.mxu0 0.0
      %1988 = vmatprep.subr.mxu0 0.0
      %1989 = vmatpush1.xpose.msra.mxu0 0.0
      %1990 = vmatprep.subr.mxu0 0.0
      %1991 = vmatpush1.xpose.msra.mxu0 0.0
      %1992 = vmatprep.subr.mxu0 0.0
      %1993 = vmatpush1.xpose.msra.mxu0 0.0
      %1994 = vmatprep.subr.mxu0 0.0
      %1995 = vmatpush1.xpose.msra.mxu0 0.0
      %1996 = vmatprep.subr.mxu0 0.0
      %1997 = vmatpush1.xpose.msra.mxu0 0.0
      %1998 = vmatprep.subr.mxu0 0.0
      %1999 = vmatpush1.xpose.msra.mxu0 0.0
      %2000 = vmatprep.subr.mxu0 0.0
      %2001 = vmatpush1.xpose.msra.mxu0 0.0
      %2002 = vmatprep.subr.mxu0 0.0
      %2003 = vmatpush1.xpose.msra.mxu0 0.0
      %2004 = vmatprep.subr.mxu0 0.0
      %2005 = vmatpush1.xpose.msra.mxu0 0.0
      %2006 = vmatprep.mubr.f32.mxu0 0.0
      %2007 = vmatmul.mubr.f32.gmra.mrb[0].mxu0 %v1938
      %v2008 = vpop.f32.mrb[0].mxu0
      %v2009 = vadd.f32 0.0, %v2008
      %v2010 = vpop.f32.mrb[0].mxu0
      %2011 = vdwg.mxu0
      %2012 = vset.pattern.permute.xlu0 8
      %2013 = vperm.xlu0 %2012, %v660
      %v2014 = vpop.permute.xlu0 %2013
      %v2016 = vlaneseq
      %v2017 = vshrl.u32 %v2016, 7
      %v2018 = vsub.s32 0, %v2017
      %v2019 = vrot.slane %v662, %v2018
      %v2020 = vadd.f32 %v2014, %v2019
      %v2021 = vmul.f32 %v2009, 2.0
      %v2022 = vsub.f32 %v2020, %v2021
      %v2023 = vmax.f32 %v2022, 0.0
      %v2024 = vrsqrt.pop %v2023
      %v2025 = vmul.f32 %v2023, %v2024
      %vm2026 = vcmp.eq.f32.partialorder %v2023, inf
      %v2027 = vsel %vm2026, %v2023, %v2025
      %vm2028 = vcmp.eq.f32.partialorder %v2023, 0.0
      %v2029 = vand.u32 %v2023, 2147483648
      %v2030 = vsel %vm2028, %v2029, %v2027
      %v2031 = vadd.f32 %v2030, 0.0
      %2032 = vrot.lane.b32.xlu0 %v658, 101
      %v2033 = vpop.permute.xlu0 %2032
      %2034 = vrot.lane.b32.xlu0 %v659, 101
      %v2035 = vpop.permute.xlu0 %2034
      %v2036 = vsel %vm753, %v2033, 0
      %v2038 = vsel %vm753, %v2035, 0
      %2040 = vmatprep.subr.mxu0 0.0
      %2041 = vmatpush1.xpose.msra.mxu0 %v2038
      %2042 = vmatprep.subr.mxu0 0.0
      %2043 = vmatpush1.xpose.msra.mxu0 0.0
      %2044 = vmatprep.subr.mxu0 0.0
      %2045 = vmatpush1.xpose.msra.mxu0 0.0
      %2046 = vmatprep.subr.mxu0 0.0
      %2047 = vmatpush1.xpose.msra.mxu0 0.0
      %2048 = vmatprep.subr.mxu0 0.0
      %2049 = vmatpush1.xpose.msra.mxu0 0.0
      %2050 = vmatprep.subr.mxu0 0.0
      %2051 = vmatpush1.xpose.msra.mxu0 0.0
      %2052 = vmatprep.subr.mxu0 0.0
      %2053 = vmatpush1.xpose.msra.mxu0 0.0
      %2054 = vmatprep.subr.mxu0 0.0
      %2055 = vmatpush1.xpose.msra.mxu0 0.0
      %2056 = vmatprep.subr.mxu0 0.0
      %2057 = vmatpush1.xpose.msra.mxu0 0.0
      %2058 = vmatprep.subr.mxu0 0.0
      %2059 = vmatpush1.xpose.msra.mxu0 0.0
      %2060 = vmatprep.subr.mxu0 0.0
      %2061 = vmatpush1.xpose.msra.mxu0 0.0
      %2062 = vmatprep.subr.mxu0 0.0
      %2063 = vmatpush1.xpose.msra.mxu0 0.0
      %2064 = vmatprep.subr.mxu0 0.0
      %2065 = vmatpush1.xpose.msra.mxu0 0.0
      %2066 = vmatprep.subr.mxu0 0.0
      %2067 = vmatpush1.xpose.msra.mxu0 0.0
      %2068 = vmatprep.subr.mxu0 0.0
      %2069 = vmatpush1.xpose.msra.mxu0 0.0
      %2070 = vmatprep.subr.mxu0 0.0
      %2071 = vmatpush1.xpose.msra.mxu0 0.0
      %2072 = vmatprep.subr.mxu0 0.0
      %2073 = vmatpush1.xpose.msra.mxu0 0.0
      %2074 = vmatprep.subr.mxu0 0.0
      %2075 = vmatpush1.xpose.msra.mxu0 0.0
      %2076 = vmatprep.subr.mxu0 0.0
      %2077 = vmatpush1.xpose.msra.mxu0 0.0
      %2078 = vmatprep.subr.mxu0 0.0
      %2079 = vmatpush1.xpose.msra.mxu0 0.0
      %2080 = vmatprep.subr.mxu0 0.0
      %2081 = vmatpush1.xpose.msra.mxu0 0.0
      %2082 = vmatprep.subr.mxu0 0.0
      %2083 = vmatpush1.xpose.msra.mxu0 0.0
      %2084 = vmatprep.subr.mxu0 0.0
      %2085 = vmatpush1.xpose.msra.mxu0 0.0
      %2086 = vmatprep.subr.mxu0 0.0
      %2087 = vmatpush1.xpose.msra.mxu0 0.0
      %2088 = vmatprep.subr.mxu0 0.0
      %2089 = vmatpush1.xpose.msra.mxu0 0.0
      %2090 = vmatprep.subr.mxu0 0.0
      %2091 = vmatpush1.xpose.msra.mxu0 0.0
      %2092 = vmatprep.subr.mxu0 0.0
      %2093 = vmatpush1.xpose.msra.mxu0 0.0
      %2094 = vmatprep.subr.mxu0 0.0
      %2095 = vmatpush1.xpose.msra.mxu0 0.0
      %2096 = vmatprep.subr.mxu0 0.0
      %2097 = vmatpush1.xpose.msra.mxu0 0.0
      %2098 = vmatprep.subr.mxu0 0.0
      %2099 = vmatpush1.xpose.msra.mxu0 0.0
      %2100 = vmatprep.subr.mxu0 0.0
      %2101 = vmatpush1.xpose.msra.mxu0 0.0
      %2102 = vmatprep.subr.mxu0 0.0
      %2103 = vmatpush1.xpose.msra.mxu0 0.0
      %2104 = vmatprep.mubr.f32.mxu0 0.0
      %2105 = vmatmul.mubr.f32.gmra.mrb[0].mxu0 %v2036
      %v2106 = vpop.f32.mrb[0].mxu0
      %v2107 = vadd.f32 0.0, %v2106
      %v2108 = vpop.f32.mrb[0].mxu0
      %2109 = vdwg.mxu0
      %2110 = vset.pattern.permute.xlu0 9
      %2111 = vperm.xlu0 %2110, %v660
      %v2112 = vpop.permute.xlu0 %2111
      %v2114 = vlaneseq
      %v2115 = vshrl.u32 %v2114, 7
      %v2116 = vsub.s32 1, %v2115
      %v2117 = vrot.slane %v662, %v2116
      %v2118 = vadd.f32 %v2112, %v2117
      %v2119 = vmul.f32 %v2107, 2.0
      %v2120 = vsub.f32 %v2118, %v2119
      %v2121 = vmax.f32 %v2120, 0.0
      %v2122 = vrsqrt.pop %v2121
      %v2123 = vmul.f32 %v2121, %v2122
      %vm2124 = vcmp.eq.f32.partialorder %v2121, inf
      %v2125 = vsel %vm2124, %v2121, %v2123
      %vm2126 = vcmp.eq.f32.partialorder %v2121, 0.0
      %v2127 = vand.u32 %v2121, 2147483648
      %v2128 = vsel %vm2126, %v2127, %v2125
      %v2129 = vadd.f32 %v2031, %v2128
      %2130 = vrot.lane.b32.xlu0 %v658, 98
      %v2131 = vpop.permute.xlu0 %2130
      %2132 = vrot.lane.b32.xlu0 %v659, 98
      %v2133 = vpop.permute.xlu0 %2132
      %v2134 = vsel %vm753, %v2131, 0
      %v2136 = vsel %vm753, %v2133, 0
      %2138 = vmatprep.subr.mxu0 0.0
      %2139 = vmatpush1.xpose.msra.mxu0 %v2136
      %2140 = vmatprep.subr.mxu0 0.0
      %2141 = vmatpush1.xpose.msra.mxu0 0.0
      %2142 = vmatprep.subr.mxu0 0.0
      %2143 = vmatpush1.xpose.msra.mxu0 0.0
      %2144 = vmatprep.subr.mxu0 0.0
      %2145 = vmatpush1.xpose.msra.mxu0 0.0
      %2146 = vmatprep.subr.mxu0 0.0
      %2147 = vmatpush1.xpose.msra.mxu0 0.0
      %2148 = vmatprep.subr.mxu0 0.0
      %2149 = vmatpush1.xpose.msra.mxu0 0.0
      %2150 = vmatprep.subr.mxu0 0.0
      %2151 = vmatpush1.xpose.msra.mxu0 0.0
      %2152 = vmatprep.subr.mxu0 0.0
      %2153 = vmatpush1.xpose.msra.mxu0 0.0
      %2154 = vmatprep.subr.mxu0 0.0
      %2155 = vmatpush1.xpose.msra.mxu0 0.0
      %2156 = vmatprep.subr.mxu0 0.0
      %2157 = vmatpush1.xpose.msra.mxu0 0.0
      %2158 = vmatprep.subr.mxu0 0.0
      %2159 = vmatpush1.xpose.msra.mxu0 0.0
      %2160 = vmatprep.subr.mxu0 0.0
      %2161 = vmatpush1.xpose.msra.mxu0 0.0
      %2162 = vmatprep.subr.mxu0 0.0
      %2163 = vmatpush1.xpose.msra.mxu0 0.0
      %2164 = vmatprep.subr.mxu0 0.0
      %2165 = vmatpush1.xpose.msra.mxu0 0.0
      %2166 = vmatprep.subr.mxu0 0.0
      %2167 = vmatpush1.xpose.msra.mxu0 0.0
      %2168 = vmatprep.subr.mxu0 0.0
      %2169 = vmatpush1.xpose.msra.mxu0 0.0
      %2170 = vmatprep.subr.mxu0 0.0
      %2171 = vmatpush1.xpose.msra.mxu0 0.0
      %2172 = vmatprep.subr.mxu0 0.0
      %2173 = vmatpush1.xpose.msra.mxu0 0.0
      %2174 = vmatprep.subr.mxu0 0.0
      %2175 = vmatpush1.xpose.msra.mxu0 0.0
      %2176 = vmatprep.subr.mxu0 0.0
      %2177 = vmatpush1.xpose.msra.mxu0 0.0
      %2178 = vmatprep.subr.mxu0 0.0
      %2179 = vmatpush1.xpose.msra.mxu0 0.0
      %2180 = vmatprep.subr.mxu0 0.0
      %2181 = vmatpush1.xpose.msra.mxu0 0.0
      %2182 = vmatprep.subr.mxu0 0.0
      %2183 = vmatpush1.xpose.msra.mxu0 0.0
      %2184 = vmatprep.subr.mxu0 0.0
      %2185 = vmatpush1.xpose.msra.mxu0 0.0
      %2186 = vmatprep.subr.mxu0 0.0
      %2187 = vmatpush1.xpose.msra.mxu0 0.0
      %2188 = vmatprep.subr.mxu0 0.0
      %2189 = vmatpush1.xpose.msra.mxu0 0.0
      %2190 = vmatprep.subr.mxu0 0.0
      %2191 = vmatpush1.xpose.msra.mxu0 0.0
      %2192 = vmatprep.subr.mxu0 0.0
      %2193 = vmatpush1.xpose.msra.mxu0 0.0
      %2194 = vmatprep.subr.mxu0 0.0
      %2195 = vmatpush1.xpose.msra.mxu0 0.0
      %2196 = vmatprep.subr.mxu0 0.0
      %2197 = vmatpush1.xpose.msra.mxu0 0.0
      %2198 = vmatprep.subr.mxu0 0.0
      %2199 = vmatpush1.xpose.msra.mxu0 0.0
      %2200 = vmatprep.subr.mxu0 0.0
      %2201 = vmatpush1.xpose.msra.mxu0 0.0
      %2202 = vmatprep.mubr.f32.mxu0 0.0
      %2203 = vmatmul.mubr.f32.gmra.mrb[0].mxu0 %v2134
      %v2204 = vpop.f32.mrb[0].mxu0
      %v2205 = vadd.f32 0.0, %v2204
      %v2206 = vpop.f32.mrb[0].mxu0
      %2207 = vdwg.mxu0
      %2208 = vset.pattern.permute.xlu0 10
      %2209 = vperm.xlu0 %2208, %v660
      %v2210 = vpop.permute.xlu0 %2209
      %v2212 = vlaneseq
      %v2213 = vshrl.u32 %v2212, 7
      %v2214 = vsub.s32 2, %v2213
      %v2215 = vrot.slane %v662, %v2214
      %v2216 = vadd.f32 %v2210, %v2215
      %v2217 = vmul.f32 %v2205, 2.0
      %v2218 = vsub.f32 %v2216, %v2217
      %v2219 = vmax.f32 %v2218, 0.0
      %v2220 = vrsqrt.pop %v2219
      %v2221 = vmul.f32 %v2219, %v2220
      %vm2222 = vcmp.eq.f32.partialorder %v2219, inf
      %v2223 = vsel %vm2222, %v2219, %v2221
      %vm2224 = vcmp.eq.f32.partialorder %v2219, 0.0
      %v2225 = vand.u32 %v2219, 2147483648
      %v2226 = vsel %vm2224, %v2225, %v2223
      %v2227 = vadd.f32 %v2129, %v2226
      %2228 = vrot.lane.b32.xlu0 %v658, 95
      %v2229 = vpop.permute.xlu0 %2228
      %2230 = vrot.lane.b32.xlu0 %v659, 95
      %v2231 = vpop.permute.xlu0 %2230
      %v2232 = vsel %vm753, %v2229, 0
      %v2234 = vsel %vm753, %v2231, 0
      %2236 = vmatprep.subr.mxu0 0.0
      %2237 = vmatpush1.xpose.msra.mxu0 %v2234
      %2238 = vmatprep.subr.mxu0 0.0
      %2239 = vmatpush1.xpose.msra.mxu0 0.0
      %2240 = vmatprep.subr.mxu0 0.0
      %2241 = vmatpush1.xpose.msra.mxu0 0.0
      %2242 = vmatprep.subr.mxu0 0.0
      %2243 = vmatpush1.xpose.msra.mxu0 0.0
      %2244 = vmatprep.subr.mxu0 0.0
      %2245 = vmatpush1.xpose.msra.mxu0 0.0
      %2246 = vmatprep.subr.mxu0 0.0
      %2247 = vmatpush1.xpose.msra.mxu0 0.0
      %2248 = vmatprep.subr.mxu0 0.0
      %2249 = vmatpush1.xpose.msra.mxu0 0.0
      %2250 = vmatprep.subr.mxu0 0.0
      %2251 = vmatpush1.xpose.msra.mxu0 0.0
      %2252 = vmatprep.subr.mxu0 0.0
      %2253 = vmatpush1.xpose.msra.mxu0 0.0
      %2254 = vmatprep.subr.mxu0 0.0
      %2255 = vmatpush1.xpose.msra.mxu0 0.0
      %2256 = vmatprep.subr.mxu0 0.0
      %2257 = vmatpush1.xpose.msra.mxu0 0.0
      %2258 = vmatprep.subr.mxu0 0.0
      %2259 = vmatpush1.xpose.msra.mxu0 0.0
      %2260 = vmatprep.subr.mxu0 0.0
      %2261 = vmatpush1.xpose.msra.mxu0 0.0
      %2262 = vmatprep.subr.mxu0 0.0
      %2263 = vmatpush1.xpose.msra.mxu0 0.0
      %2264 = vmatprep.subr.mxu0 0.0
      %2265 = vmatpush1.xpose.msra.mxu0 0.0
      %2266 = vmatprep.subr.mxu0 0.0
      %2267 = vmatpush1.xpose.msra.mxu0 0.0
      %2268 = vmatprep.subr.mxu0 0.0
      %2269 = vmatpush1.xpose.msra.mxu0 0.0
      %2270 = vmatprep.subr.mxu0 0.0
      %2271 = vmatpush1.xpose.msra.mxu0 0.0
      %2272 = vmatprep.subr.mxu0 0.0
      %2273 = vmatpush1.xpose.msra.mxu0 0.0
      %2274 = vmatprep.subr.mxu0 0.0
      %2275 = vmatpush1.xpose.msra.mxu0 0.0
      %2276 = vmatprep.subr.mxu0 0.0
      %2277 = vmatpush1.xpose.msra.mxu0 0.0
      %2278 = vmatprep.subr.mxu0 0.0
      %2279 = vmatpush1.xpose.msra.mxu0 0.0
      %2280 = vmatprep.subr.mxu0 0.0
      %2281 = vmatpush1.xpose.msra.mxu0 0.0
      %2282 = vmatprep.subr.mxu0 0.0
      %2283 = vmatpush1.xpose.msra.mxu0 0.0
      %2284 = vmatprep.subr.mxu0 0.0
      %2285 = vmatpush1.xpose.msra.mxu0 0.0
      %2286 = vmatprep.subr.mxu0 0.0
      %2287 = vmatpush1.xpose.msra.mxu0 0.0
      %2288 = vmatprep.subr.mxu0 0.0
      %2289 = vmatpush1.xpose.msra.mxu0 0.0
      %2290 = vmatprep.subr.mxu0 0.0
      %2291 = vmatpush1.xpose.msra.mxu0 0.0
      %2292 = vmatprep.subr.mxu0 0.0
      %2293 = vmatpush1.xpose.msra.mxu0 0.0
      %2294 = vmatprep.subr.mxu0 0.0
      %2295 = vmatpush1.xpose.msra.mxu0 0.0
      %2296 = vmatprep.subr.mxu0 0.0
      %2297 = vmatpush1.xpose.msra.mxu0 0.0
      %2298 = vmatprep.subr.mxu0 0.0
      %2299 = vmatpush1.xpose.msra.mxu0 0.0
      %2300 = vmatprep.mubr.f32.mxu0 0.0
      %2301 = vmatmul.mubr.f32.gmra.mrb[0].mxu0 %v2232
      %v2302 = vpop.f32.mrb[0].mxu0
      %v2303 = vadd.f32 0.0, %v2302
      %v2304 = vpop.f32.mrb[0].mxu0
      %2305 = vdwg.mxu0
      %2306 = vset.pattern.permute.xlu0 11
      %2307 = vperm.xlu0 %2306, %v660
      %v2308 = vpop.permute.xlu0 %2307
      %v2310 = vlaneseq
      %v2311 = vshrl.u32 %v2310, 7
      %v2312 = vsub.s32 3, %v2311
      %v2313 = vrot.slane %v662, %v2312
      %v2314 = vadd.f32 %v2308, %v2313
      %v2315 = vmul.f32 %v2303, 2.0
      %v2316 = vsub.f32 %v2314, %v2315
      %v2317 = vmax.f32 %v2316, 0.0
      %v2318 = vrsqrt.pop %v2317
      %v2319 = vmul.f32 %v2317, %v2318
      %vm2320 = vcmp.eq.f32.partialorder %v2317, inf
      %v2321 = vsel %vm2320, %v2317, %v2319
      %vm2322 = vcmp.eq.f32.partialorder %v2317, 0.0
      %v2323 = vand.u32 %v2317, 2147483648
      %v2324 = vsel %vm2322, %v2323, %v2321
      %v2325 = vadd.f32 %v2227, %v2324
      %s2326 = sld [smem:[#allocation7 + $0x2]]
      %v2327 = vadd.f32 %v1933, %v665
      %s2328 = smul.f32 %s2326, 0.11785113
      %v2329 = vstv %s2328
      %v2330 = vmul.f32 %v2329, %v2325
      %v2331 = vsub.f32 %v2327, %v2330
      %v2332 = vmul.f32 %v2331, 0.57735026
      %v2333 = vld [vmem:[#allocation2] sm:$0xff]
      %v2334 = vsel %vm1153, %v2332, -inf
      %2335 = vmax.xlane.f32.xlu0 %v2334
      %v2336 = vpop.xlane.xlu0 %2335
      %v2337 = vmax.f32 %v2333, %v2336
      %v2338 = vsub.f32 %v2333, %v2337
      %v2339 = vmul.f32 %v2338, 1.442695
      %v2340 = vpow.pop %v2339
      %2342 = vset.pattern.permute.xlu0 2
      %2343 = vperm.xlu0 %2342, %v2337
      %v2344 = vpop.permute.xlu0 %2343
      %v2346 = vsub.f32 %v2332, %v2344
      %v2347 = vmul.f32 %v2346, 1.442695
      %v2348 = vpow.pop %v2347
      %v2349 = vld [vmem:[#allocation3] sm:$0xff]
      %v2350 = vmul.f32 %v2340, %v2349
      %v2351 = vsel %vm1153, %v2348, 0.0
      %2352 = vadd.xlane.f32.xlu0 %v2351
      %v2353 = vpop.xlane.xlu0 %2352
      %v2354 = vadd.f32 %v2350, %v2353
      %vm2355 = vcmask 23568
      %2356 = vst.msk [vmem:[#allocation3] sm:$0xff] %vm2355, %v2354
      %2357 = vst.msk [vmem:[#allocation2] sm:$0xff] %vm2355, %v2337
      %v2358 = vld [vmem:[#allocation4] sm:$0xff]
      %2360 = vset.pattern.permute.xlu0 2
      %2361 = vperm.xlu0 %2360, %v2340
      %v2362 = vpop.permute.xlu0 %2361
      %v2364 = vmul.f32 %v2362, %v2358
      %2365 = vrot.lane.b32.xlu0 %v656, 48
      %v2366 = vpop.permute.xlu0 %2365
      %v2369 = vsel %vm1153, %v2348, 0
      %2371 = vmatprep.subr.mxu0 0.0
      %2372 = vmatpush1.msra.mxu0 %v2366
      %2373 = vmatprep.subr.mxu0 0.0
      %2374 = vmatpush1.msra.mxu0 0.0
      %2375 = vmatprep.subr.mxu0 0.0
      %2376 = vmatpush1.msra.mxu0 0.0
      %2377 = vmatprep.subr.mxu0 0.0
      %2378 = vmatpush1.msra.mxu0 0.0
      %2379 = vmatprep.subr.mxu0 0.0
      %2380 = vmatpush1.msra.mxu0 0.0
      %2381 = vmatprep.subr.mxu0 0.0
      %2382 = vmatpush1.msra.mxu0 0.0
      %2383 = vmatprep.subr.mxu0 0.0
      %2384 = vmatpush1.msra.mxu0 0.0
      %2385 = vmatprep.subr.mxu0 0.0
      %2386 = vmatpush1.msra.mxu0 0.0
      %2387 = vmatprep.subr.mxu0 0.0
      %2388 = vmatpush1.msra.mxu0 0.0
      %2389 = vmatprep.subr.mxu0 0.0
      %2390 = vmatpush1.msra.mxu0 0.0
      %2391 = vmatprep.subr.mxu0 0.0
      %2392 = vmatpush1.msra.mxu0 0.0
      %2393 = vmatprep.subr.mxu0 0.0
      %2394 = vmatpush1.msra.mxu0 0.0
      %2395 = vmatprep.subr.mxu0 0.0
      %2396 = vmatpush1.msra.mxu0 0.0
      %2397 = vmatprep.subr.mxu0 0.0
      %2398 = vmatpush1.msra.mxu0 0.0
      %2399 = vmatprep.subr.mxu0 0.0
      %2400 = vmatpush1.msra.mxu0 0.0
      %2401 = vmatprep.subr.mxu0 0.0
      %2402 = vmatpush1.msra.mxu0 0.0
      %2403 = vmatprep.subr.mxu0 0.0
      %2404 = vmatpush1.msra.mxu0 0.0
      %2405 = vmatprep.subr.mxu0 0.0
      %2406 = vmatpush1.msra.mxu0 0.0
      %2407 = vmatprep.subr.mxu0 0.0
      %2408 = vmatpush1.msra.mxu0 0.0
      %2409 = vmatprep.subr.mxu0 0.0
      %2410 = vmatpush1.msra.mxu0 0.0
      %2411 = vmatprep.subr.mxu0 0.0
      %2412 = vmatpush1.msra.mxu0 0.0
      %2413 = vmatprep.subr.mxu0 0.0
      %2414 = vmatpush1.msra.mxu0 0.0
      %2415 = vmatprep.subr.mxu0 0.0
      %2416 = vmatpush1.msra.mxu0 0.0
      %2417 = vmatprep.subr.mxu0 0.0
      %2418 = vmatpush1.msra.mxu0 0.0
      %2419 = vmatprep.subr.mxu0 0.0
      %2420 = vmatpush1.msra.mxu0 0.0
      %2421 = vmatprep.subr.mxu0 0.0
      %2422 = vmatpush1.msra.mxu0 0.0
      %2423 = vmatprep.subr.mxu0 0.0
      %2424 = vmatpush1.msra.mxu0 0.0
      %2425 = vmatprep.subr.mxu0 0.0
      %2426 = vmatpush1.msra.mxu0 0.0
      %2427 = vmatprep.subr.mxu0 0.0
      %2428 = vmatpush1.msra.mxu0 0.0
      %2429 = vmatprep.subr.mxu0 0.0
      %2430 = vmatpush1.msra.mxu0 0.0
      %2431 = vmatprep.subr.mxu0 0.0
      %2432 = vmatpush1.msra.mxu0 0.0
      %2433 = vmatprep.subr.mxu0 0.0
      %2434 = vmatpush1.msra.mxu0 0.0
      %2435 = vmatprep.mubr.f32.mxu0 0.0
      %2436 = vmatmul.mubr.f32.gmra.mrb[0].mxu0 %v2369
      %v2437 = vpop.f32.mrb[0].mxu0
      %v2438 = vadd.f32 0.0, %v2437
      %v2439 = vpop.f32.mrb[0].mxu0
      %2440 = vdwg.mxu0
      %2442 = vrot.lane.b32.xlu0 %v2438, 80
      %v2443 = vpop.permute.xlu0 %2442
      %v2445 = vadd.f32 %v2364, %v2443
      %vm2446 = vcmask 982656
      %2447 = vst.msk [vmem:[#allocation4] sm:$0xff] %vm2446, %v2445
      %2448 = vrot.lane.b32.xlu0 %v654, 80
      %v2449 = vpop.permute.xlu0 %2448
      %2450 = vrot.lane.b32.xlu0 %v655, 80
      %v2451 = vpop.permute.xlu0 %2450
      %v2452 = vsel %vm675, %v2449, 0
      %v2454 = vsel %vm675, %v2451, 0
      %2456 = vmatprep.subr.mxu0 0.0
      %2457 = vmatpush1.xpose.msra.mxu0 %v2454
      %2458 = vmatprep.subr.mxu0 0.0
      %2459 = vmatpush1.xpose.msra.mxu0 0.0
      %2460 = vmatprep.subr.mxu0 0.0
      %2461 = vmatpush1.xpose.msra.mxu0 0.0
      %2462 = vmatprep.subr.mxu0 0.0
      %2463 = vmatpush1.xpose.msra.mxu0 0.0
      %2464 = vmatprep.subr.mxu0 0.0
      %2465 = vmatpush1.xpose.msra.mxu0 0.0
      %2466 = vmatprep.subr.mxu0 0.0
      %2467 = vmatpush1.xpose.msra.mxu0 0.0
      %2468 = vmatprep.subr.mxu0 0.0
      %2469 = vmatpush1.xpose.msra.mxu0 0.0
      %2470 = vmatprep.subr.mxu0 0.0
      %2471 = vmatpush1.xpose.msra.mxu0 0.0
      %2472 = vmatprep.subr.mxu0 0.0
      %2473 = vmatpush1.xpose.msra.mxu0 0.0
      %2474 = vmatprep.subr.mxu0 0.0
      %2475 = vmatpush1.xpose.msra.mxu0 0.0
      %2476 = vmatprep.subr.mxu0 0.0
      %2477 = vmatpush1.xpose.msra.mxu0 0.0
      %2478 = vmatprep.subr.mxu0 0.0
      %2479 = vmatpush1.xpose.msra.mxu0 0.0
      %2480 = vmatprep.subr.mxu0 0.0
      %2481 = vmatpush1.xpose.msra.mxu0 0.0
      %2482 = vmatprep.subr.mxu0 0.0
      %2483 = vmatpush1.xpose.msra.mxu0 0.0
      %2484 = vmatprep.subr.mxu0 0.0
      %2485 = vmatpush1.xpose.msra.mxu0 0.0
      %2486 = vmatprep.subr.mxu0 0.0
      %2487 = vmatpush1.xpose.msra.mxu0 0.0
      %2488 = vmatprep.subr.mxu0 0.0
      %2489 = vmatpush1.xpose.msra.mxu0 0.0
      %2490 = vmatprep.subr.mxu0 0.0
      %2491 = vmatpush1.xpose.msra.mxu0 0.0
      %2492 = vmatprep.subr.mxu0 0.0
      %2493 = vmatpush1.xpose.msra.mxu0 0.0
      %2494 = vmatprep.subr.mxu0 0.0
      %2495 = vmatpush1.xpose.msra.mxu0 0.0
      %2496 = vmatprep.subr.mxu0 0.0
      %2497 = vmatpush1.xpose.msra.mxu0 0.0
      %2498 = vmatprep.subr.mxu0 0.0
      %2499 = vmatpush1.xpose.msra.mxu0 0.0
      %2500 = vmatprep.subr.mxu0 0.0
      %2501 = vmatpush1.xpose.msra.mxu0 0.0
      %2502 = vmatprep.subr.mxu0 0.0
      %2503 = vmatpush1.xpose.msra.mxu0 0.0
      %2504 = vmatprep.subr.mxu0 0.0
      %2505 = vmatpush1.xpose.msra.mxu0 0.0
      %2506 = vmatprep.subr.mxu0 0.0
      %2507 = vmatpush1.xpose.msra.mxu0 0.0
      %2508 = vmatprep.subr.mxu0 0.0
      %2509 = vmatpush1.xpose.msra.mxu0 0.0
      %2510 = vmatprep.subr.mxu0 0.0
      %2511 = vmatpush1.xpose.msra.mxu0 0.0
      %2512 = vmatprep.subr.mxu0 0.0
      %2513 = vmatpush1.xpose.msra.mxu0 0.0
      %2514 = vmatprep.subr.mxu0 0.0
      %2515 = vmatpush1.xpose.msra.mxu0 0.0
      %2516 = vmatprep.subr.mxu0 0.0
      %2517 = vmatpush1.xpose.msra.mxu0 0.0
      %2518 = vmatprep.subr.mxu0 0.0
      %2519 = vmatpush1.xpose.msra.mxu0 0.0
      %2520 = vmatprep.mubr.f32.mxu0 0.0
      %2521 = vmatmul.mubr.f32.gmra.mrb[0].mxu0 %v2452
      %v2522 = vpop.f32.mrb[0].mxu0
      %v2523 = vadd.f32 0.0, %v2522
      %v2524 = vpop.f32.mrb[0].mxu0
      %2525 = vdwg.mxu0
      %v2526 = vmul.f32 %v2523, 0.25
      %2527 = vrot.lane.b32.xlu0 %v658, 92
      %v2528 = vpop.permute.xlu0 %2527
      %2529 = vrot.lane.b32.xlu0 %v659, 92
      %v2530 = vpop.permute.xlu0 %2529
      %v2531 = vsel %vm753, %v2528, 0
      %v2533 = vsel %vm753, %v2530, 0
      %2535 = vmatprep.subr.mxu0 0.0
      %2536 = vmatpush1.xpose.msra.mxu0 %v2533
      %2537 = vmatprep.subr.mxu0 0.0
      %2538 = vmatpush1.xpose.msra.mxu0 0.0
      %2539 = vmatprep.subr.mxu0 0.0
      %2540 = vmatpush1.xpose.msra.mxu0 0.0
      %2541 = vmatprep.subr.mxu0 0.0
      %2542 = vmatpush1.xpose.msra.mxu0 0.0
      %2543 = vmatprep.subr.mxu0 0.0
      %2544 = vmatpush1.xpose.msra.mxu0 0.0
      %2545 = vmatprep.subr.mxu0 0.0
      %2546 = vmatpush1.xpose.msra.mxu0 0.0
      %2547 = vmatprep.subr.mxu0 0.0
      %2548 = vmatpush1.xpose.msra.mxu0 0.0
      %2549 = vmatprep.subr.mxu0 0.0
      %2550 = vmatpush1.xpose.msra.mxu0 0.0
      %2551 = vmatprep.subr.mxu0 0.0
      %2552 = vmatpush1.xpose.msra.mxu0 0.0
      %2553 = vmatprep.subr.mxu0 0.0
      %2554 = vmatpush1.xpose.msra.mxu0 0.0
      %2555 = vmatprep.subr.mxu0 0.0
      %2556 = vmatpush1.xpose.msra.mxu0 0.0
      %2557 = vmatprep.subr.mxu0 0.0
      %2558 = vmatpush1.xpose.msra.mxu0 0.0
      %2559 = vmatprep.subr.mxu0 0.0
      %2560 = vmatpush1.xpose.msra.mxu0 0.0
      %2561 = vmatprep.subr.mxu0 0.0
      %2562 = vmatpush1.xpose.msra.mxu0 0.0
      %2563 = vmatprep.subr.mxu0 0.0
      %2564 = vmatpush1.xpose.msra.mxu0 0.0
      %2565 = vmatprep.subr.mxu0 0.0
      %2566 = vmatpush1.xpose.msra.mxu0 0.0
      %2567 = vmatprep.subr.mxu0 0.0
      %2568 = vmatpush1.xpose.msra.mxu0 0.0
      %2569 = vmatprep.subr.mxu0 0.0
      %2570 = vmatpush1.xpose.msra.mxu0 0.0
      %2571 = vmatprep.subr.mxu0 0.0
      %2572 = vmatpush1.xpose.msra.mxu0 0.0
      %2573 = vmatprep.subr.mxu0 0.0
      %2574 = vmatpush1.xpose.msra.mxu0 0.0
      %2575 = vmatprep.subr.mxu0 0.0
      %2576 = vmatpush1.xpose.msra.mxu0 0.0
      %2577 = vmatprep.subr.mxu0 0.0
      %2578 = vmatpush1.xpose.msra.mxu0 0.0
      %2579 = vmatprep.subr.mxu0 0.0
      %2580 = vmatpush1.xpose.msra.mxu0 0.0
      %2581 = vmatprep.subr.mxu0 0.0
      %2582 = vmatpush1.xpose.msra.mxu0 0.0
      %2583 = vmatprep.subr.mxu0 0.0
      %2584 = vmatpush1.xpose.msra.mxu0 0.0
      %2585 = vmatprep.subr.mxu0 0.0
      %2586 = vmatpush1.xpose.msra.mxu0 0.0
      %2587 = vmatprep.subr.mxu0 0.0
      %2588 = vmatpush1.xpose.msra.mxu0 0.0
      %2589 = vmatprep.subr.mxu0 0.0
      %2590 = vmatpush1.xpose.msra.mxu0 0.0
      %2591 = vmatprep.subr.mxu0 0.0
      %2592 = vmatpush1.xpose.msra.mxu0 0.0
      %2593 = vmatprep.subr.mxu0 0.0
      %2594 = vmatpush1.xpose.msra.mxu0 0.0
      %2595 = vmatprep.subr.mxu0 0.0
      %2596 = vmatpush1.xpose.msra.mxu0 0.0
      %2597 = vmatprep.subr.mxu0 0.0
      %2598 = vmatpush1.xpose.msra.mxu0 0.0
      %2599 = vmatprep.mubr.f32.mxu0 0.0
      %2600 = vmatmul.mubr.f32.gmra.mrb[0].mxu0 %v2531
      %v2601 = vpop.f32.mrb[0].mxu0
      %v2602 = vadd.f32 0.0, %v2601
      %v2603 = vpop.f32.mrb[0].mxu0
      %2604 = vdwg.mxu0
      %2605 = vset.pattern.permute.xlu0 12
      %2606 = vperm.xlu0 %2605, %v660
      %v2607 = vpop.permute.xlu0 %2606
      %v2609 = vlaneseq
      %v2610 = vshrl.u32 %v2609, 7
      %v2611 = vsub.s32 4, %v2610
      %v2612 = vrot.slane %v662, %v2611
      %v2613 = vadd.f32 %v2607, %v2612
      %v2614 = vmul.f32 %v2602, 2.0
      %v2615 = vsub.f32 %v2613, %v2614
      %v2616 = vmax.f32 %v2615, 0.0
      %v2617 = vrsqrt.pop %v2616
      %v2618 = vmul.f32 %v2616, %v2617
      %vm2619 = vcmp.eq.f32.partialorder %v2616, inf
      %v2620 = vsel %vm2619, %v2616, %v2618
      %vm2621 = vcmp.eq.f32.partialorder %v2616, 0.0
      %v2622 = vand.u32 %v2616, 2147483648
      %v2623 = vsel %vm2621, %v2622, %v2620
      %v2624 = vadd.f32 %v2623, 0.0
      %2625 = vrot.lane.b32.xlu0 %v658, 89
      %v2626 = vpop.permute.xlu0 %2625
      %2627 = vrot.lane.b32.xlu0 %v659, 89
      %v2628 = vpop.permute.xlu0 %2627
      %v2629 = vsel %vm753, %v2626, 0
      %v2631 = vsel %vm753, %v2628, 0
      %2633 = vmatprep.subr.mxu0 0.0
      %2634 = vmatpush1.xpose.msra.mxu0 %v2631
      %2635 = vmatprep.subr.mxu0 0.0
      %2636 = vmatpush1.xpose.msra.mxu0 0.0
      %2637 = vmatprep.subr.mxu0 0.0
      %2638 = vmatpush1.xpose.msra.mxu0 0.0
      %2639 = vmatprep.subr.mxu0 0.0
      %2640 = vmatpush1.xpose.msra.mxu0 0.0
      %2641 = vmatprep.subr.mxu0 0.0
      %2642 = vmatpush1.xpose.msra.mxu0 0.0
      %2643 = vmatprep.subr.mxu0 0.0
      %2644 = vmatpush1.xpose.msra.mxu0 0.0
      %2645 = vmatprep.subr.mxu0 0.0
      %2646 = vmatpush1.xpose.msra.mxu0 0.0
      %2647 = vmatprep.subr.mxu0 0.0
      %2648 = vmatpush1.xpose.msra.mxu0 0.0
      %2649 = vmatprep.subr.mxu0 0.0
      %2650 = vmatpush1.xpose.msra.mxu0 0.0
      %2651 = vmatprep.subr.mxu0 0.0
      %2652 = vmatpush1.xpose.msra.mxu0 0.0
      %2653 = vmatprep.subr.mxu0 0.0
      %2654 = vmatpush1.xpose.msra.mxu0 0.0
      %2655 = vmatprep.subr.mxu0 0.0
      %2656 = vmatpush1.xpose.msra.mxu0 0.0
      %2657 = vmatprep.subr.mxu0 0.0
      %2658 = vmatpush1.xpose.msra.mxu0 0.0
      %2659 = vmatprep.subr.mxu0 0.0
      %2660 = vmatpush1.xpose.msra.mxu0 0.0
      %2661 = vmatprep.subr.mxu0 0.0
      %2662 = vmatpush1.xpose.msra.mxu0 0.0
      %2663 = vmatprep.subr.mxu0 0.0
      %2664 = vmatpush1.xpose.msra.mxu0 0.0
      %2665 = vmatprep.subr.mxu0 0.0
      %2666 = vmatpush1.xpose.msra.mxu0 0.0
      %2667 = vmatprep.subr.mxu0 0.0
      %2668 = vmatpush1.xpose.msra.mxu0 0.0
      %2669 = vmatprep.subr.mxu0 0.0
      %2670 = vmatpush1.xpose.msra.mxu0 0.0
      %2671 = vmatprep.subr.mxu0 0.0
      %2672 = vmatpush1.xpose.msra.mxu0 0.0
      %2673 = vmatprep.subr.mxu0 0.0
      %2674 = vmatpush1.xpose.msra.mxu0 0.0
      %2675 = vmatprep.subr.mxu0 0.0
      %2676 = vmatpush1.xpose.msra.mxu0 0.0
      %2677 = vmatprep.subr.mxu0 0.0
      %2678 = vmatpush1.xpose.msra.mxu0 0.0
      %2679 = vmatprep.subr.mxu0 0.0
      %2680 = vmatpush1.xpose.msra.mxu0 0.0
      %2681 = vmatprep.subr.mxu0 0.0
      %2682 = vmatpush1.xpose.msra.mxu0 0.0
      %2683 = vmatprep.subr.mxu0 0.0
      %2684 = vmatpush1.xpose.msra.mxu0 0.0
      %2685 = vmatprep.subr.mxu0 0.0
      %2686 = vmatpush1.xpose.msra.mxu0 0.0
      %2687 = vmatprep.subr.mxu0 0.0
      %2688 = vmatpush1.xpose.msra.mxu0 0.0
      %2689 = vmatprep.subr.mxu0 0.0
      %2690 = vmatpush1.xpose.msra.mxu0 0.0
      %2691 = vmatprep.subr.mxu0 0.0
      %2692 = vmatpush1.xpose.msra.mxu0 0.0
      %2693 = vmatprep.subr.mxu0 0.0
      %2694 = vmatpush1.xpose.msra.mxu0 0.0
      %2695 = vmatprep.subr.mxu0 0.0
      %2696 = vmatpush1.xpose.msra.mxu0 0.0
      %2697 = vmatprep.mubr.f32.mxu0 0.0
      %2698 = vmatmul.mubr.f32.gmra.mrb[0].mxu0 %v2629
      %v2699 = vpop.f32.mrb[0].mxu0
      %v2700 = vadd.f32 0.0, %v2699
      %v2701 = vpop.f32.mrb[0].mxu0
      %2702 = vdwg.mxu0
      %2703 = vset.pattern.permute.xlu0 13
      %2704 = vperm.xlu0 %2703, %v660
      %v2705 = vpop.permute.xlu0 %2704
      %v2707 = vlaneseq
      %v2708 = vshrl.u32 %v2707, 7
      %v2709 = vsub.s32 5, %v2708
      %v2710 = vrot.slane %v662, %v2709
      %v2711 = vadd.f32 %v2705, %v2710
      %v2712 = vmul.f32 %v2700, 2.0
      %v2713 = vsub.f32 %v2711, %v2712
      %v2714 = vmax.f32 %v2713, 0.0
      %v2715 = vrsqrt.pop %v2714
      %v2716 = vmul.f32 %v2714, %v2715
      %vm2717 = vcmp.eq.f32.partialorder %v2714, inf
      %v2718 = vsel %vm2717, %v2714, %v2716
      %vm2719 = vcmp.eq.f32.partialorder %v2714, 0.0
      %v2720 = vand.u32 %v2714, 2147483648
      %v2721 = vsel %vm2719, %v2720, %v2718
      %v2722 = vadd.f32 %v2624, %v2721
      %2723 = vrot.lane.b32.xlu0 %v658, 86
      %v2724 = vpop.permute.xlu0 %2723
      %2725 = vrot.lane.b32.xlu0 %v659, 86
      %v2726 = vpop.permute.xlu0 %2725
      %v2727 = vsel %vm753, %v2724, 0
      %v2729 = vsel %vm753, %v2726, 0
      %2731 = vmatprep.subr.mxu0 0.0
      %2732 = vmatpush1.xpose.msra.mxu0 %v2729
      %2733 = vmatprep.subr.mxu0 0.0
      %2734 = vmatpush1.xpose.msra.mxu0 0.0
      %2735 = vmatprep.subr.mxu0 0.0
      %2736 = vmatpush1.xpose.msra.mxu0 0.0
      %2737 = vmatprep.subr.mxu0 0.0
      %2738 = vmatpush1.xpose.msra.mxu0 0.0
      %2739 = vmatprep.subr.mxu0 0.0
      %2740 = vmatpush1.xpose.msra.mxu0 0.0
      %2741 = vmatprep.subr.mxu0 0.0
      %2742 = vmatpush1.xpose.msra.mxu0 0.0
      %2743 = vmatprep.subr.mxu0 0.0
      %2744 = vmatpush1.xpose.msra.mxu0 0.0
      %2745 = vmatprep.subr.mxu0 0.0
      %2746 = vmatpush1.xpose.msra.mxu0 0.0
      %2747 = vmatprep.subr.mxu0 0.0
      %2748 = vmatpush1.xpose.msra.mxu0 0.0
      %2749 = vmatprep.subr.mxu0 0.0
      %2750 = vmatpush1.xpose.msra.mxu0 0.0
      %2751 = vmatprep.subr.mxu0 0.0
      %2752 = vmatpush1.xpose.msra.mxu0 0.0
      %2753 = vmatprep.subr.mxu0 0.0
      %2754 = vmatpush1.xpose.msra.mxu0 0.0
      %2755 = vmatprep.subr.mxu0 0.0
      %2756 = vmatpush1.xpose.msra.mxu0 0.0
      %2757 = vmatprep.subr.mxu0 0.0
      %2758 = vmatpush1.xpose.msra.mxu0 0.0
      %2759 = vmatprep.subr.mxu0 0.0
      %2760 = vmatpush1.xpose.msra.mxu0 0.0
      %2761 = vmatprep.subr.mxu0 0.0
      %2762 = vmatpush1.xpose.msra.mxu0 0.0
      %2763 = vmatprep.subr.mxu0 0.0
      %2764 = vmatpush1.xpose.msra.mxu0 0.0
      %2765 = vmatprep.subr.mxu0 0.0
      %2766 = vmatpush1.xpose.msra.mxu0 0.0
      %2767 = vmatprep.subr.mxu0 0.0
      %2768 = vmatpush1.xpose.msra.mxu0 0.0
      %2769 = vmatprep.subr.mxu0 0.0
      %2770 = vmatpush1.xpose.msra.mxu0 0.0
      %2771 = vmatprep.subr.mxu0 0.0
      %2772 = vmatpush1.xpose.msra.mxu0 0.0
      %2773 = vmatprep.subr.mxu0 0.0
      %2774 = vmatpush1.xpose.msra.mxu0 0.0
      %2775 = vmatprep.subr.mxu0 0.0
      %2776 = vmatpush1.xpose.msra.mxu0 0.0
      %2777 = vmatprep.subr.mxu0 0.0
      %2778 = vmatpush1.xpose.msra.mxu0 0.0
      %2779 = vmatprep.subr.mxu0 0.0
      %2780 = vmatpush1.xpose.msra.mxu0 0.0
      %2781 = vmatprep.subr.mxu0 0.0
      %2782 = vmatpush1.xpose.msra.mxu0 0.0
      %2783 = vmatprep.subr.mxu0 0.0
      %2784 = vmatpush1.xpose.msra.mxu0 0.0
      %2785 = vmatprep.subr.mxu0 0.0
      %2786 = vmatpush1.xpose.msra.mxu0 0.0
      %2787 = vmatprep.subr.mxu0 0.0
      %2788 = vmatpush1.xpose.msra.mxu0 0.0
      %2789 = vmatprep.subr.mxu0 0.0
      %2790 = vmatpush1.xpose.msra.mxu0 0.0
      %2791 = vmatprep.subr.mxu0 0.0
      %2792 = vmatpush1.xpose.msra.mxu0 0.0
      %2793 = vmatprep.subr.mxu0 0.0
      %2794 = vmatpush1.xpose.msra.mxu0 0.0
      %2795 = vmatprep.mubr.f32.mxu0 0.0
      %2796 = vmatmul.mubr.f32.gmra.mrb[0].mxu0 %v2727
      %v2797 = vpop.f32.mrb[0].mxu0
      %v2798 = vadd.f32 0.0, %v2797
      %v2799 = vpop.f32.mrb[0].mxu0
      %2800 = vdwg.mxu0
      %2801 = vset.pattern.permute.xlu0 14
      %2802 = vperm.xlu0 %2801, %v660
      %v2803 = vpop.permute.xlu0 %2802
      %v2805 = vlaneseq
      %v2806 = vshrl.u32 %v2805, 7
      %v2807 = vsub.s32 6, %v2806
      %v2808 = vrot.slane %v662, %v2807
      %v2809 = vadd.f32 %v2803, %v2808
      %v2810 = vmul.f32 %v2798, 2.0
      %v2811 = vsub.f32 %v2809, %v2810
      %v2812 = vmax.f32 %v2811, 0.0
      %v2813 = vrsqrt.pop %v2812
      %v2814 = vmul.f32 %v2812, %v2813
      %vm2815 = vcmp.eq.f32.partialorder %v2812, inf
      %v2816 = vsel %vm2815, %v2812, %v2814
      %vm2817 = vcmp.eq.f32.partialorder %v2812, 0.0
      %v2818 = vand.u32 %v2812, 2147483648
      %v2819 = vsel %vm2817, %v2818, %v2816
      %v2820 = vadd.f32 %v2722, %v2819
      %2821 = vrot.lane.b32.xlu0 %v658, 83
      %v2822 = vpop.permute.xlu0 %2821
      %2823 = vrot.lane.b32.xlu0 %v659, 83
      %v2824 = vpop.permute.xlu0 %2823
      %v2825 = vsel %vm753, %v2822, 0
      %v2827 = vsel %vm753, %v2824, 0
      %2829 = vmatprep.subr.mxu0 0.0
      %2830 = vmatpush1.xpose.msra.mxu0 %v2827
      %2831 = vmatprep.subr.mxu0 0.0
      %2832 = vmatpush1.xpose.msra.mxu0 0.0
      %2833 = vmatprep.subr.mxu0 0.0
      %2834 = vmatpush1.xpose.msra.mxu0 0.0
      %2835 = vmatprep.subr.mxu0 0.0
      %2836 = vmatpush1.xpose.msra.mxu0 0.0
      %2837 = vmatprep.subr.mxu0 0.0
      %2838 = vmatpush1.xpose.msra.mxu0 0.0
      %2839 = vmatprep.subr.mxu0 0.0
      %2840 = vmatpush1.xpose.msra.mxu0 0.0
      %2841 = vmatprep.subr.mxu0 0.0
      %2842 = vmatpush1.xpose.msra.mxu0 0.0
      %2843 = vmatprep.subr.mxu0 0.0
      %2844 = vmatpush1.xpose.msra.mxu0 0.0
      %2845 = vmatprep.subr.mxu0 0.0
      %2846 = vmatpush1.xpose.msra.mxu0 0.0
      %2847 = vmatprep.subr.mxu0 0.0
      %2848 = vmatpush1.xpose.msra.mxu0 0.0
      %2849 = vmatprep.subr.mxu0 0.0
      %2850 = vmatpush1.xpose.msra.mxu0 0.0
      %2851 = vmatprep.subr.mxu0 0.0
      %2852 = vmatpush1.xpose.msra.mxu0 0.0
      %2853 = vmatprep.subr.mxu0 0.0
      %2854 = vmatpush1.xpose.msra.mxu0 0.0
      %2855 = vmatprep.subr.mxu0 0.0
      %2856 = vmatpush1.xpose.msra.mxu0 0.0
      %2857 = vmatprep.subr.mxu0 0.0
      %2858 = vmatpush1.xpose.msra.mxu0 0.0
      %2859 = vmatprep.subr.mxu0 0.0
      %2860 = vmatpush1.xpose.msra.mxu0 0.0
      %2861 = vmatprep.subr.mxu0 0.0
      %2862 = vmatpush1.xpose.msra.mxu0 0.0
      %2863 = vmatprep.subr.mxu0 0.0
      %2864 = vmatpush1.xpose.msra.mxu0 0.0
      %2865 = vmatprep.subr.mxu0 0.0
      %2866 = vmatpush1.xpose.msra.mxu0 0.0
      %2867 = vmatprep.subr.mxu0 0.0
      %2868 = vmatpush1.xpose.msra.mxu0 0.0
      %2869 = vmatprep.subr.mxu0 0.0
      %2870 = vmatpush1.xpose.msra.mxu0 0.0
      %2871 = vmatprep.subr.mxu0 0.0
      %2872 = vmatpush1.xpose.msra.mxu0 0.0
      %2873 = vmatprep.subr.mxu0 0.0
      %2874 = vmatpush1.xpose.msra.mxu0 0.0
      %2875 = vmatprep.subr.mxu0 0.0
      %2876 = vmatpush1.xpose.msra.mxu0 0.0
      %2877 = vmatprep.subr.mxu0 0.0
      %2878 = vmatpush1.xpose.msra.mxu0 0.0
      %2879 = vmatprep.subr.mxu0 0.0
      %2880 = vmatpush1.xpose.msra.mxu0 0.0
      %2881 = vmatprep.subr.mxu0 0.0
      %2882 = vmatpush1.xpose.msra.mxu0 0.0
      %2883 = vmatprep.subr.mxu0 0.0
      %2884 = vmatpush1.xpose.msra.mxu0 0.0
      %2885 = vmatprep.subr.mxu0 0.0
      %2886 = vmatpush1.xpose.msra.mxu0 0.0
      %2887 = vmatprep.subr.mxu0 0.0
      %2888 = vmatpush1.xpose.msra.mxu0 0.0
      %2889 = vmatprep.subr.mxu0 0.0
      %2890 = vmatpush1.xpose.msra.mxu0 0.0
      %2891 = vmatprep.subr.mxu0 0.0
      %2892 = vmatpush1.xpose.msra.mxu0 0.0
      %2893 = vmatprep.mubr.f32.mxu0 0.0
      %2894 = vmatmul.mubr.f32.gmra.mrb[0].mxu0 %v2825
      %v2895 = vpop.f32.mrb[0].mxu0
      %v2896 = vadd.f32 0.0, %v2895
      %v2897 = vpop.f32.mrb[0].mxu0
      %2898 = vdwg.mxu0
      %2899 = vset.pattern.permute.xlu0 15
      %2900 = vperm.xlu0 %2899, %v660
      %v2901 = vpop.permute.xlu0 %2900
      %v2903 = vlaneseq
      %v2904 = vshrl.u32 %v2903, 7
      %v2905 = vsub.s32 7, %v2904
      %v2906 = vrot.slane %v662, %v2905
      %v2907 = vadd.f32 %v2901, %v2906
      %v2908 = vmul.f32 %v2896, 2.0
      %v2909 = vsub.f32 %v2907, %v2908
      %v2910 = vmax.f32 %v2909, 0.0
      %v2911 = vrsqrt.pop %v2910
      %v2912 = vmul.f32 %v2910, %v2911
      %vm2913 = vcmp.eq.f32.partialorder %v2910, inf
      %v2914 = vsel %vm2913, %v2910, %v2912
      %vm2915 = vcmp.eq.f32.partialorder %v2910, 0.0
      %v2916 = vand.u32 %v2910, 2147483648
      %v2917 = vsel %vm2915, %v2916, %v2914
      %v2918 = vadd.f32 %v2820, %v2917
      %s2919 = sld [smem:[#allocation7 + $0x3]]
      %v2920 = vadd.f32 %v2526, %v666
      %s2921 = smul.f32 %s2919, 0.11785113
      %v2922 = vstv %s2921
      %v2923 = vmul.f32 %v2922, %v2918
      %v2924 = vsub.f32 %v2920, %v2923
      %v2925 = vmul.f32 %v2924, 0.57735026
      %v2926 = vld [vmem:[#allocation2] sm:$0xff]
      %v2927 = vsel %vm1153, %v2925, -inf
      %2928 = vmax.xlane.f32.xlu0 %v2927
      %v2929 = vpop.xlane.xlu0 %2928
      %v2930 = vmax.f32 %v2926, %v2929
      %v2931 = vsub.f32 %v2926, %v2930
      %v2932 = vmul.f32 %v2931, 1.442695
      %v2933 = vpow.pop %v2932
      %2935 = vset.pattern.permute.xlu0 3
      %2936 = vperm.xlu0 %2935, %v2930
      %v2937 = vpop.permute.xlu0 %2936
      %v2939 = vsub.f32 %v2925, %v2937
      %v2940 = vmul.f32 %v2939, 1.442695
      %v2941 = vpow.pop %v2940
      %v2942 = vld [vmem:[#allocation3] sm:$0xff]
      %v2943 = vmul.f32 %v2933, %v2942
      %v2944 = vsel %vm1153, %v2941, 0.0
      %2945 = vadd.xlane.f32.xlu0 %v2944
      %v2946 = vpop.xlane.xlu0 %2945
      %v2947 = vadd.f32 %v2943, %v2946
      %vm2948 = vcmask 31768
      %2949 = vst.msk [vmem:[#allocation3] sm:$0xff] %vm2948, %v2947
      %2950 = vst.msk [vmem:[#allocation2] sm:$0xff] %vm2948, %v2930
      %v2951 = vld [vmem:[#allocation4] sm:$0xff]
      %v2952 = vld [vmem:[#allocation4 + $0x8] sm:$0xff]
      %2954 = vset.pattern.permute.xlu0 3
      %2955 = vperm.xlu0 %2954, %v2933
      %v2956 = vpop.permute.xlu0 %2955
      %v2958 = vmul.f32 %v2956, %v2951
      %v2959 = vmul.f32 %v2956, %v2952
      %2961 = vrot.lane.b32.xlu0 %v656, 8
      %v2962 = vpop.permute.xlu0 %2961
      %2963 = vrot.lane.b32.xlu0 %v657, 8
      %v2964 = vpop.permute.xlu0 %2963
      %v2965 = vsel %vm1153, %v2962, %v2964
      %v2968 = vsel %vm1153, %v2941, 0
      %2970 = vmatprep.subr.mxu0 0.0
      %2971 = vmatpush1.msra.mxu0 %v2965
      %2972 = vmatprep.subr.mxu0 0.0
      %2973 = vmatpush1.msra.mxu0 0.0
      %2974 = vmatprep.subr.mxu0 0.0
      %2975 = vmatpush1.msra.mxu0 0.0
      %2976 = vmatprep.subr.mxu0 0.0
      %2977 = vmatpush1.msra.mxu0 0.0
      %2978 = vmatprep.subr.mxu0 0.0
      %2979 = vmatpush1.msra.mxu0 0.0
      %2980 = vmatprep.subr.mxu0 0.0
      %2981 = vmatpush1.msra.mxu0 0.0
      %2982 = vmatprep.subr.mxu0 0.0
      %2983 = vmatpush1.msra.mxu0 0.0
      %2984 = vmatprep.subr.mxu0 0.0
      %2985 = vmatpush1.msra.mxu0 0.0
      %2986 = vmatprep.subr.mxu0 0.0
      %2987 = vmatpush1.msra.mxu0 0.0
      %2988 = vmatprep.subr.mxu0 0.0
      %2989 = vmatpush1.msra.mxu0 0.0
      %2990 = vmatprep.subr.mxu0 0.0
      %2991 = vmatpush1.msra.mxu0 0.0
      %2992 = vmatprep.subr.mxu0 0.0
      %2993 = vmatpush1.msra.mxu0 0.0
      %2994 = vmatprep.subr.mxu0 0.0
      %2995 = vmatpush1.msra.mxu0 0.0
      %2996 = vmatprep.subr.mxu0 0.0
      %2997 = vmatpush1.msra.mxu0 0.0
      %2998 = vmatprep.subr.mxu0 0.0
      %2999 = vmatpush1.msra.mxu0 0.0
      %3000 = vmatprep.subr.mxu0 0.0
      %3001 = vmatpush1.msra.mxu0 0.0
      %3002 = vmatprep.subr.mxu0 0.0
      %3003 = vmatpush1.msra.mxu0 0.0
      %3004 = vmatprep.subr.mxu0 0.0
      %3005 = vmatpush1.msra.mxu0 0.0
      %3006 = vmatprep.subr.mxu0 0.0
      %3007 = vmatpush1.msra.mxu0 0.0
      %3008 = vmatprep.subr.mxu0 0.0
      %3009 = vmatpush1.msra.mxu0 0.0
      %3010 = vmatprep.subr.mxu0 0.0
      %3011 = vmatpush1.msra.mxu0 0.0
      %3012 = vmatprep.subr.mxu0 0.0
      %3013 = vmatpush1.msra.mxu0 0.0
      %3014 = vmatprep.subr.mxu0 0.0
      %3015 = vmatpush1.msra.mxu0 0.0
      %3016 = vmatprep.subr.mxu0 0.0
      %3017 = vmatpush1.msra.mxu0 0.0
      %3018 = vmatprep.subr.mxu0 0.0
      %3019 = vmatpush1.msra.mxu0 0.0
      %3020 = vmatprep.subr.mxu0 0.0
      %3021 = vmatpush1.msra.mxu0 0.0
      %3022 = vmatprep.subr.mxu0 0.0
      %3023 = vmatpush1.msra.mxu0 0.0
      %3024 = vmatprep.subr.mxu0 0.0
      %3025 = vmatpush1.msra.mxu0 0.0
      %3026 = vmatprep.subr.mxu0 0.0
      %3027 = vmatpush1.msra.mxu0 0.0
      %3028 = vmatprep.subr.mxu0 0.0
      %3029 = vmatpush1.msra.mxu0 0.0
      %3030 = vmatprep.subr.mxu0 0.0
      %3031 = vmatpush1.msra.mxu0 0.0
      %3032 = vmatprep.subr.mxu0 0.0
      %3033 = vmatpush1.msra.mxu0 0.0
      %3034 = vmatprep.mubr.f32.mxu0 0.0
      %3035 = vmatmul.mubr.f32.gmra.mrb[0].mxu0 %v2968
      %v3036 = vpop.f32.mrb[0].mxu0
      %v3037 = vadd.f32 0.0, %v3036
      %v3038 = vpop.f32.mrb[0].mxu0
      %3039 = vdwg.mxu0
      %3041 = vrot.lane.b32.xlu0 %v3037, 120
      %v3042 = vpop.permute.xlu0 %3041
      %v3044 = vadd.f32 %v2958, %v3042
      %v3045 = vadd.f32 %v2959, %v3042
      %vm3046 = vcmask 1048512
      %3047 = vst.msk [vmem:[#allocation4] sm:$0xff] %vm3046, %v3044
      %vm3048 = vcmask 261120
      %3049 = vst.msk [vmem:[#allocation4 + $0x8] sm:$0xff] %vm3048, %v3045
      %v3050 = vcombine.high %v1168, %v1168
      %v3052 = vunpack.c.l.s4 1966171168
      %v3053 = vunpack.c.0.s8 %v3052
      %v3054 = vlaneseq
      %v3055 = vshrl.u32 %v3054, 7
      %v3056 = vsub.s32 %v3053, %v3055
      %v3057 = vrot.slane %v1168, %v3056
      %v3059 = vunpack.c.l.s4 1966171168
      %v3060 = vunpack.c.0.s8 %v3059
      %v3061 = vlaneseq
      %v3062 = vshrl.u32 %v3061, 7
      %v3063 = vsub.s32 %v3060, %v3062
      %v3064 = vrot.slane %v3050, %v3063
      %v3065 = vcombine.high %v3057, %v3057
      %v3066 = vcombine.high %v3064, %v3064
      %v3068 = vunpack.c.l.s4 1966171168
      %v3069 = vunpack.c.0.s8 %v3068
      %v3070 = vlaneseq
      %v3071 = vshrl.u32 %v3070, 7
      %v3072 = vsub.s32 %v3069, %v3071
      %v3073 = vrot.slane %v3057, %v3072
      %v3075 = vunpack.c.l.s4 1966171168
      %v3076 = vunpack.c.0.s8 %v3075
      %v3077 = vlaneseq
      %v3078 = vshrl.u32 %v3077, 7
      %v3079 = vsub.s32 %v3076, %v3078
      %v3080 = vrot.slane %v3064, %v3079
      %v3082 = vunpack.c.l.s4 1966171168
      %v3083 = vunpack.c.0.s8 %v3082
      %v3084 = vlaneseq
      %v3085 = vshrl.u32 %v3084, 7
      %v3086 = vsub.s32 %v3083, %v3085
      %v3087 = vrot.slane %v3065, %v3086
      %v3089 = vunpack.c.l.s4 1966171168
      %v3090 = vunpack.c.0.s8 %v3089
      %v3091 = vlaneseq
      %v3092 = vshrl.u32 %v3091, 7
      %v3093 = vsub.s32 %v3090, %v3092
      %v3094 = vrot.slane %v3066, %v3093
      %v3095 = vcombine.high %v3073, %v3073
      %v3096 = vcombine.high %v3080, %v3080
      %v3097 = vcombine.high %v3087, %v3087
      %v3098 = vcombine.high %v3094, %v3094
      %v3107 = vcombine.high %v1754, %v1754
      %v3109 = vunpack.c.l.s4 1966171168
      %v3110 = vunpack.c.0.s8 %v3109
      %v3111 = vlaneseq
      %v3112 = vshrl.u32 %v3111, 7
      %v3113 = vsub.s32 %v3110, %v3112
      %v3114 = vrot.slane %v1754, %v3113
      %v3116 = vunpack.c.l.s4 1966171168
      %v3117 = vunpack.c.0.s8 %v3116
      %v3118 = vlaneseq
      %v3119 = vshrl.u32 %v3118, 7
      %v3120 = vsub.s32 %v3117, %v3119
      %v3121 = vrot.slane %v3107, %v3120
      %v3122 = vcombine.high %v3114, %v3114
      %v3123 = vcombine.high %v3121, %v3121
      %v3125 = vunpack.c.l.s4 1966171168
      %v3126 = vunpack.c.0.s8 %v3125
      %v3127 = vlaneseq
      %v3128 = vshrl.u32 %v3127, 7
      %v3129 = vsub.s32 %v3126, %v3128
      %v3130 = vrot.slane %v3114, %v3129
      %v3132 = vunpack.c.l.s4 1966171168
      %v3133 = vunpack.c.0.s8 %v3132
      %v3134 = vlaneseq
      %v3135 = vshrl.u32 %v3134, 7
      %v3136 = vsub.s32 %v3133, %v3135
      %v3137 = vrot.slane %v3121, %v3136
      %v3139 = vunpack.c.l.s4 1966171168
      %v3140 = vunpack.c.0.s8 %v3139
      %v3141 = vlaneseq
      %v3142 = vshrl.u32 %v3141, 7
      %v3143 = vsub.s32 %v3140, %v3142
      %v3144 = vrot.slane %v3122, %v3143
      %v3146 = vunpack.c.l.s4 1966171168
      %v3147 = vunpack.c.0.s8 %v3146
      %v3148 = vlaneseq
      %v3149 = vshrl.u32 %v3148, 7
      %v3150 = vsub.s32 %v3147, %v3149
      %v3151 = vrot.slane %v3123, %v3150
      %v3152 = vcombine.high %v3130, %v3130
      %v3153 = vcombine.high %v3137, %v3137
      %v3154 = vcombine.high %v3144, %v3144
      %v3155 = vcombine.high %v3151, %v3151
      %v3156 = vcombine.high %v2348, %v2348
      %v3158 = vunpack.c.l.s4 1966171168
      %v3159 = vunpack.c.0.s8 %v3158
      %v3160 = vlaneseq
      %v3161 = vshrl.u32 %v3160, 7
      %v3162 = vsub.s32 %v3159, %v3161
      %v3163 = vrot.slane %v2348, %v3162
      %v3165 = vunpack.c.l.s4 1966171168
      %v3166 = vunpack.c.0.s8 %v3165
      %v3167 = vlaneseq
      %v3168 = vshrl.u32 %v3167, 7
      %v3169 = vsub.s32 %v3166, %v3168
      %v3170 = vrot.slane %v3156, %v3169
      %v3171 = vcombine.high %v3163, %v3163
      %v3172 = vcombine.high %v3170, %v3170
      %v3174 = vunpack.c.l.s4 1966171168
      %v3175 = vunpack.c.0.s8 %v3174
      %v3176 = vlaneseq
      %v3177 = vshrl.u32 %v3176, 7
      %v3178 = vsub.s32 %v3175, %v3177
      %v3179 = vrot.slane %v3163, %v3178
      %v3181 = vunpack.c.l.s4 1966171168
      %v3182 = vunpack.c.0.s8 %v3181
      %v3183 = vlaneseq
      %v3184 = vshrl.u32 %v3183, 7
      %v3185 = vsub.s32 %v3182, %v3184
      %v3186 = vrot.slane %v3170, %v3185
      %v3188 = vunpack.c.l.s4 1966171168
      %v3189 = vunpack.c.0.s8 %v3188
      %v3190 = vlaneseq
      %v3191 = vshrl.u32 %v3190, 7
      %v3192 = vsub.s32 %v3189, %v3191
      %v3193 = vrot.slane %v3171, %v3192
      %v3195 = vunpack.c.l.s4 1966171168
      %v3196 = vunpack.c.0.s8 %v3195
      %v3197 = vlaneseq
      %v3198 = vshrl.u32 %v3197, 7
      %v3199 = vsub.s32 %v3196, %v3198
      %v3200 = vrot.slane %v3172, %v3199
      %v3201 = vcombine.high %v3179, %v3179
      %v3202 = vcombine.high %v3186, %v3186
      %v3203 = vcombine.high %v3193, %v3193
      %v3204 = vcombine.high %v3200, %v3200
      %v3205 = vcombine.high %v2941, %v2941
      %v3207 = vunpack.c.l.s4 1966171168
      %v3208 = vunpack.c.0.s8 %v3207
      %v3209 = vlaneseq
      %v3210 = vshrl.u32 %v3209, 7
      %v3211 = vsub.s32 %v3208, %v3210
      %v3212 = vrot.slane %v2941, %v3211
      %v3214 = vunpack.c.l.s4 1966171168
      %v3215 = vunpack.c.0.s8 %v3214
      %v3216 = vlaneseq
      %v3217 = vshrl.u32 %v3216, 7
      %v3218 = vsub.s32 %v3215, %v3217
      %v3219 = vrot.slane %v3205, %v3218
      %v3220 = vcombine.high %v3212, %v3212
      %v3221 = vcombine.high %v3219, %v3219
      %v3223 = vunpack.c.l.s4 1966171168
      %v3224 = vunpack.c.0.s8 %v3223
      %v3225 = vlaneseq
      %v3226 = vshrl.u32 %v3225, 7
      %v3227 = vsub.s32 %v3224, %v3226
      %v3228 = vrot.slane %v3212, %v3227
      %v3230 = vunpack.c.l.s4 1966171168
      %v3231 = vunpack.c.0.s8 %v3230
      %v3232 = vlaneseq
      %v3233 = vshrl.u32 %v3232, 7
      %v3234 = vsub.s32 %v3231, %v3233
      %v3235 = vrot.slane %v3219, %v3234
      %v3237 = vunpack.c.l.s4 1966171168
      %v3238 = vunpack.c.0.s8 %v3237
      %v3239 = vlaneseq
      %v3240 = vshrl.u32 %v3239, 7
      %v3241 = vsub.s32 %v3238, %v3240
      %v3242 = vrot.slane %v3220, %v3241
      %v3244 = vunpack.c.l.s4 1966171168
      %v3245 = vunpack.c.0.s8 %v3244
      %v3246 = vlaneseq
      %v3247 = vshrl.u32 %v3246, 7
      %v3248 = vsub.s32 %v3245, %v3247
      %v3249 = vrot.slane %v3221, %v3248
      %v3250 = vcombine.high %v3228, %v3228
      %v3251 = vcombine.high %v3235, %v3235
      %v3252 = vcombine.high %v3242, %v3242
      %v3253 = vcombine.high %v3249, %v3249
      %v3254 = vlaneseq
      %v3255 = vshrl.u32 %v3254, 7
      %v3256 = vsub.s32 0, %v3255
      %v3257 = vrot.slane %v3130, %v3256
      %v3258 = vlaneseq
      %v3259 = vshrl.u32 %v3258, 7
      %v3260 = vsub.s32 0, %v3259
      %v3261 = vrot.slane %v3144, %v3260
      %v3262 = vlaneseq
      %v3263 = vshrl.u32 %v3262, 7
      %v3264 = vsub.s32 0, %v3263
      %v3265 = vrot.slane %v3152, %v3264
      %v3266 = vlaneseq
      %v3267 = vshrl.u32 %v3266, 7
      %v3268 = vsub.s32 0, %v3267
      %v3269 = vrot.slane %v3154, %v3268
      %v3270 = vlaneseq
      %v3271 = vshrl.u32 %v3270, 7
      %v3272 = vsub.s32 0, %v3271
      %v3273 = vrot.slane %v3137, %v3272
      %v3274 = vlaneseq
      %v3275 = vshrl.u32 %v3274, 7
      %v3276 = vsub.s32 0, %v3275
      %v3277 = vrot.slane %v3151, %v3276
      %v3278 = vlaneseq
      %v3279 = vshrl.u32 %v3278, 7
      %v3280 = vsub.s32 0, %v3279
      %v3281 = vrot.slane %v3153, %v3280
      %v3282 = vlaneseq
      %v3283 = vshrl.u32 %v3282, 7
      %v3284 = vsub.s32 0, %v3283
      %v3285 = vrot.slane %v3155, %v3284
      %v3294 = vlaneseq
      %v3295 = vshrl.u32 %v3294, 7
      %v3296 = vsub.s32 0, %v3295
      %v3297 = vrot.slane %v3179, %v3296
      %v3298 = vlaneseq
      %v3299 = vshrl.u32 %v3298, 7
      %v3300 = vsub.s32 0, %v3299
      %v3301 = vrot.slane %v3193, %v3300
      %v3302 = vlaneseq
      %v3303 = vshrl.u32 %v3302, 7
      %v3304 = vsub.s32 0, %v3303
      %v3305 = vrot.slane %v3201, %v3304
      %v3306 = vlaneseq
      %v3307 = vshrl.u32 %v3306, 7
      %v3308 = vsub.s32 0, %v3307
      %v3309 = vrot.slane %v3203, %v3308
      %v3310 = vlaneseq
      %v3311 = vshrl.u32 %v3310, 7
      %v3312 = vsub.s32 0, %v3311
      %v3313 = vrot.slane %v3186, %v3312
      %v3314 = vlaneseq
      %v3315 = vshrl.u32 %v3314, 7
      %v3316 = vsub.s32 0, %v3315
      %v3317 = vrot.slane %v3200, %v3316
      %v3318 = vlaneseq
      %v3319 = vshrl.u32 %v3318, 7
      %v3320 = vsub.s32 0, %v3319
      %v3321 = vrot.slane %v3202, %v3320
      %v3322 = vlaneseq
      %v3323 = vshrl.u32 %v3322, 7
      %v3324 = vsub.s32 0, %v3323
      %v3325 = vrot.slane %v3204, %v3324
      %v3334 = vlaneseq
      %v3335 = vshrl.u32 %v3334, 7
      %v3336 = vsub.s32 0, %v3335
      %v3337 = vrot.slane %v3228, %v3336
      %v3338 = vlaneseq
      %v3339 = vshrl.u32 %v3338, 7
      %v3340 = vsub.s32 0, %v3339
      %v3341 = vrot.slane %v3242, %v3340
      %v3342 = vlaneseq
      %v3343 = vshrl.u32 %v3342, 7
      %v3344 = vsub.s32 0, %v3343
      %v3345 = vrot.slane %v3250, %v3344
      %v3346 = vlaneseq
      %v3347 = vshrl.u32 %v3346, 7
      %v3348 = vsub.s32 0, %v3347
      %v3349 = vrot.slane %v3252, %v3348
      %v3350 = vlaneseq
      %v3351 = vshrl.u32 %v3350, 7
      %v3352 = vsub.s32 0, %v3351
      %v3353 = vrot.slane %v3235, %v3352
      %v3354 = vlaneseq
      %v3355 = vshrl.u32 %v3354, 7
      %v3356 = vsub.s32 0, %v3355
      %v3357 = vrot.slane %v3249, %v3356
      %v3358 = vlaneseq
      %v3359 = vshrl.u32 %v3358, 7
      %v3360 = vsub.s32 0, %v3359
      %v3361 = vrot.slane %v3251, %v3360
      %v3362 = vlaneseq
      %v3363 = vshrl.u32 %v3362, 7
      %v3364 = vsub.s32 0, %v3363
      %v3365 = vrot.slane %v3253, %v3364
      %vm3374 = vcmask 1040384
      %v3375 = vsel %vm3374, %v3073, %v3257
      %v3376 = vsel %vm3374, %v3087, %v3261
      %v3377 = vsel %vm3374, %v3095, %v3265
      %v3378 = vsel %vm3374, %v3097, %v3269
      %v3379 = vsel %vm3374, %v3080, %v3273
      %v3380 = vsel %vm3374, %v3094, %v3277
      %v3381 = vsel %vm3374, %v3096, %v3281
      %v3382 = vsel %vm3374, %v3098, %v3285
      %vm3383 = vcmask 1041408
      %v3384 = vsel %vm3383, %v3375, %v3297
      %v3385 = vsel %vm3383, %v3376, %v3301
      %v3386 = vsel %vm3383, %v3377, %v3305
      %v3387 = vsel %vm3383, %v3378, %v3309
      %v3388 = vsel %vm3383, %v3379, %v3313
      %v3389 = vsel %vm3383, %v3380, %v3317
      %v3390 = vsel %vm3383, %v3381, %v3321
      %v3391 = vsel %vm3383, %v3382, %v3325
      %vm3392 = vcmask 1042432
      %v3393 = vsel %vm3392, %v3384, %v3337
      %v3394 = vsel %vm3392, %v3385, %v3341
      %v3395 = vsel %vm3392, %v3386, %v3345
      %v3396 = vsel %vm3392, %v3387, %v3349
      %v3397 = vsel %vm3392, %v3388, %v3353
      %v3398 = vsel %vm3392, %v3389, %v3357
      %v3399 = vsel %vm3392, %v3390, %v3361
      %v3400 = vsel %vm3392, %v3391, %v3365
      %v3402 = vsel %vm1153, %v3393, 0
      %3404 = vmatprep.subr.mxu0 0.0
      %3405 = vmatpush1.msra.mxu0 %v667
      %3406 = vmatprep.subr.mxu0 0.0
      %3407 = vmatpush1.msra.mxu0 0.0
      %3408 = vmatprep.subr.mxu0 0.0
      %3409 = vmatpush1.msra.mxu0 0.0
      %3410 = vmatprep.subr.mxu0 0.0
      %3411 = vmatpush1.msra.mxu0 0.0
      %3412 = vmatprep.subr.mxu0 0.0
      %3413 = vmatpush1.msra.mxu0 0.0
      %3414 = vmatprep.subr.mxu0 0.0
      %3415 = vmatpush1.msra.mxu0 0.0
      %3416 = vmatprep.subr.mxu0 0.0
      %3417 = vmatpush1.msra.mxu0 0.0
      %3418 = vmatprep.subr.mxu0 0.0
      %3419 = vmatpush1.msra.mxu0 0.0
      %3420 = vmatprep.subr.mxu0 0.0
      %3421 = vmatpush1.msra.mxu0 0.0
      %3422 = vmatprep.subr.mxu0 0.0
      %3423 = vmatpush1.msra.mxu0 0.0
      %3424 = vmatprep.subr.mxu0 0.0
      %3425 = vmatpush1.msra.mxu0 0.0
      %3426 = vmatprep.subr.mxu0 0.0
      %3427 = vmatpush1.msra.mxu0 0.0
      %3428 = vmatprep.subr.mxu0 0.0
      %3429 = vmatpush1.msra.mxu0 0.0
      %3430 = vmatprep.subr.mxu0 0.0
      %3431 = vmatpush1.msra.mxu0 0.0
      %3432 = vmatprep.subr.mxu0 0.0
      %3433 = vmatpush1.msra.mxu0 0.0
      %3434 = vmatprep.subr.mxu0 0.0
      %3435 = vmatpush1.msra.mxu0 0.0
      %3436 = vmatprep.subr.mxu0 0.0
      %3437 = vmatpush1.msra.mxu0 0.0
      %3438 = vmatprep.subr.mxu0 0.0
      %3439 = vmatpush1.msra.mxu0 0.0
      %3440 = vmatprep.subr.mxu0 0.0
      %3441 = vmatpush1.msra.mxu0 0.0
      %3442 = vmatprep.subr.mxu0 0.0
      %3443 = vmatpush1.msra.mxu0 0.0
      %3444 = vmatprep.subr.mxu0 0.0
      %3445 = vmatpush1.msra.mxu0 0.0
      %3446 = vmatprep.subr.mxu0 0.0
      %3447 = vmatpush1.msra.mxu0 0.0
      %3448 = vmatprep.subr.mxu0 0.0
      %3449 = vmatpush1.msra.mxu0 0.0
      %3450 = vmatprep.subr.mxu0 0.0
      %3451 = vmatpush1.msra.mxu0 0.0
      %3452 = vmatprep.subr.mxu0 0.0
      %3453 = vmatpush1.msra.mxu0 0.0
      %3454 = vmatprep.subr.mxu0 0.0
      %3455 = vmatpush1.msra.mxu0 0.0
      %3456 = vmatprep.subr.mxu0 0.0
      %3457 = vmatpush1.msra.mxu0 0.0
      %3458 = vmatprep.subr.mxu0 0.0
      %3459 = vmatpush1.msra.mxu0 0.0
      %3460 = vmatprep.subr.mxu0 0.0
      %3461 = vmatpush1.msra.mxu0 0.0
      %3462 = vmatprep.subr.mxu0 0.0
      %3463 = vmatpush1.msra.mxu0 0.0
      %3464 = vmatprep.subr.mxu0 0.0
      %3465 = vmatpush1.msra.mxu0 0.0
      %3466 = vmatprep.subr.mxu0 0.0
      %3467 = vmatpush1.msra.mxu0 0.0
      %3468 = vmatprep.mubr.f32.mxu0 0.0
      %3469 = vmatmul.mubr.f32.gmra.mrb[0].mxu0 %v3402
      %v3470 = vpop.f32.mrb[0].mxu0
      %v3471 = vadd.f32 0.0, %v3470
      %v3472 = vpop.f32.mrb[0].mxu0
      %3473 = vdwg.mxu0
      %v3475 = vsel %vm1153, %v3394, 0
      %3477 = vmatprep.subr.mxu0 0.0
      %3478 = vmatpush1.msra.mxu0 %v668
      %3479 = vmatprep.subr.mxu0 0.0
      %3480 = vmatpush1.msra.mxu0 0.0
      %3481 = vmatprep.subr.mxu0 0.0
      %3482 = vmatpush1.msra.mxu0 0.0
      %3483 = vmatprep.subr.mxu0 0.0
      %3484 = vmatpush1.msra.mxu0 0.0
      %3485 = vmatprep.subr.mxu0 0.0
      %3486 = vmatpush1.msra.mxu0 0.0
      %3487 = vmatprep.subr.mxu0 0.0
      %3488 = vmatpush1.msra.mxu0 0.0
      %3489 = vmatprep.subr.mxu0 0.0
      %3490 = vmatpush1.msra.mxu0 0.0
      %3491 = vmatprep.subr.mxu0 0.0
      %3492 = vmatpush1.msra.mxu0 0.0
      %3493 = vmatprep.subr.mxu0 0.0
      %3494 = vmatpush1.msra.mxu0 0.0
      %3495 = vmatprep.subr.mxu0 0.0
      %3496 = vmatpush1.msra.mxu0 0.0
      %3497 = vmatprep.subr.mxu0 0.0
      %3498 = vmatpush1.msra.mxu0 0.0
      %3499 = vmatprep.subr.mxu0 0.0
      %3500 = vmatpush1.msra.mxu0 0.0
      %3501 = vmatprep.subr.mxu0 0.0
      %3502 = vmatpush1.msra.mxu0 0.0
      %3503 = vmatprep.subr.mxu0 0.0
      %3504 = vmatpush1.msra.mxu0 0.0
      %3505 = vmatprep.subr.mxu0 0.0
      %3506 = vmatpush1.msra.mxu0 0.0
      %3507 = vmatprep.subr.mxu0 0.0
      %3508 = vmatpush1.msra.mxu0 0.0
      %3509 = vmatprep.subr.mxu0 0.0
      %3510 = vmatpush1.msra.mxu0 0.0
      %3511 = vmatprep.subr.mxu0 0.0
      %3512 = vmatpush1.msra.mxu0 0.0
      %3513 = vmatprep.subr.mxu0 0.0
      %3514 = vmatpush1.msra.mxu0 0.0
      %3515 = vmatprep.subr.mxu0 0.0
      %3516 = vmatpush1.msra.mxu0 0.0
      %3517 = vmatprep.subr.mxu0 0.0
      %3518 = vmatpush1.msra.mxu0 0.0
      %3519 = vmatprep.subr.mxu0 0.0
      %3520 = vmatpush1.msra.mxu0 0.0
      %3521 = vmatprep.subr.mxu0 0.0
      %3522 = vmatpush1.msra.mxu0 0.0
      %3523 = vmatprep.subr.mxu0 0.0
      %3524 = vmatpush1.msra.mxu0 0.0
      %3525 = vmatprep.subr.mxu0 0.0
      %3526 = vmatpush1.msra.mxu0 0.0
      %3527 = vmatprep.subr.mxu0 0.0
      %3528 = vmatpush1.msra.mxu0 0.0
      %3529 = vmatprep.subr.mxu0 0.0
      %3530 = vmatpush1.msra.mxu0 0.0
      %3531 = vmatprep.subr.mxu0 0.0
      %3532 = vmatpush1.msra.mxu0 0.0
      %3533 = vmatprep.subr.mxu0 0.0
      %3534 = vmatpush1.msra.mxu0 0.0
      %3535 = vmatprep.subr.mxu0 0.0
      %3536 = vmatpush1.msra.mxu0 0.0
      %3537 = vmatprep.subr.mxu0 0.0
      %3538 = vmatpush1.msra.mxu0 0.0
      %3539 = vmatprep.subr.mxu0 0.0
      %3540 = vmatpush1.msra.mxu0 0.0
      %3541 = vmatprep.mubr.f32.mxu0 0.0
      %3542 = vmatmul.mubr.f32.gmra.mrb[0].mxu0 %v3475
      %v3543 = vpop.f32.mrb[0].mxu0
      %v3544 = vadd.f32 0.0, %v3543
      %v3545 = vpop.f32.mrb[0].mxu0
      %3546 = vdwg.mxu0
      %v3548 = vsel %vm1153, %v3395, 0
      %3550 = vmatprep.subr.mxu0 0.0
      %3551 = vmatpush1.msra.mxu0 %v669
      %3552 = vmatprep.subr.mxu0 0.0
      %3553 = vmatpush1.msra.mxu0 0.0
      %3554 = vmatprep.subr.mxu0 0.0
      %3555 = vmatpush1.msra.mxu0 0.0
      %3556 = vmatprep.subr.mxu0 0.0
      %3557 = vmatpush1.msra.mxu0 0.0
      %3558 = vmatprep.subr.mxu0 0.0
      %3559 = vmatpush1.msra.mxu0 0.0
      %3560 = vmatprep.subr.mxu0 0.0
      %3561 = vmatpush1.msra.mxu0 0.0
      %3562 = vmatprep.subr.mxu0 0.0
      %3563 = vmatpush1.msra.mxu0 0.0
      %3564 = vmatprep.subr.mxu0 0.0
      %3565 = vmatpush1.msra.mxu0 0.0
      %3566 = vmatprep.subr.mxu0 0.0
      %3567 = vmatpush1.msra.mxu0 0.0
      %3568 = vmatprep.subr.mxu0 0.0
      %3569 = vmatpush1.msra.mxu0 0.0
      %3570 = vmatprep.subr.mxu0 0.0
      %3571 = vmatpush1.msra.mxu0 0.0
      %3572 = vmatprep.subr.mxu0 0.0
      %3573 = vmatpush1.msra.mxu0 0.0
      %3574 = vmatprep.subr.mxu0 0.0
      %3575 = vmatpush1.msra.mxu0 0.0
      %3576 = vmatprep.subr.mxu0 0.0
      %3577 = vmatpush1.msra.mxu0 0.0
      %3578 = vmatprep.subr.mxu0 0.0
      %3579 = vmatpush1.msra.mxu0 0.0
      %3580 = vmatprep.subr.mxu0 0.0
      %3581 = vmatpush1.msra.mxu0 0.0
      %3582 = vmatprep.subr.mxu0 0.0
      %3583 = vmatpush1.msra.mxu0 0.0
      %3584 = vmatprep.subr.mxu0 0.0
      %3585 = vmatpush1.msra.mxu0 0.0
      %3586 = vmatprep.subr.mxu0 0.0
      %3587 = vmatpush1.msra.mxu0 0.0
      %3588 = vmatprep.subr.mxu0 0.0
      %3589 = vmatpush1.msra.mxu0 0.0
      %3590 = vmatprep.subr.mxu0 0.0
      %3591 = vmatpush1.msra.mxu0 0.0
      %3592 = vmatprep.subr.mxu0 0.0
      %3593 = vmatpush1.msra.mxu0 0.0
      %3594 = vmatprep.subr.mxu0 0.0
      %3595 = vmatpush1.msra.mxu0 0.0
      %3596 = vmatprep.subr.mxu0 0.0
      %3597 = vmatpush1.msra.mxu0 0.0
      %3598 = vmatprep.subr.mxu0 0.0
      %3599 = vmatpush1.msra.mxu0 0.0
      %3600 = vmatprep.subr.mxu0 0.0
      %3601 = vmatpush1.msra.mxu0 0.0
      %3602 = vmatprep.subr.mxu0 0.0
      %3603 = vmatpush1.msra.mxu0 0.0
      %3604 = vmatprep.subr.mxu0 0.0
      %3605 = vmatpush1.msra.mxu0 0.0
      %3606 = vmatprep.subr.mxu0 0.0
      %3607 = vmatpush1.msra.mxu0 0.0
      %3608 = vmatprep.subr.mxu0 0.0
      %3609 = vmatpush1.msra.mxu0 0.0
      %3610 = vmatprep.subr.mxu0 0.0
      %3611 = vmatpush1.msra.mxu0 0.0
      %3612 = vmatprep.subr.mxu0 0.0
      %3613 = vmatpush1.msra.mxu0 0.0
      %3614 = vmatprep.mubr.f32.mxu0 0.0
      %3615 = vmatmul.mubr.f32.gmra.mrb[0].mxu0 %v3548
      %v3616 = vpop.f32.mrb[0].mxu0
      %v3617 = vadd.f32 0.0, %v3616
      %v3618 = vpop.f32.mrb[0].mxu0
      %3619 = vdwg.mxu0
      %v3621 = vsel %vm1153, %v3396, 0
      %3623 = vmatprep.subr.mxu0 0.0
      %3624 = vmatpush1.msra.mxu0 %v670
      %3625 = vmatprep.subr.mxu0 0.0
      %3626 = vmatpush1.msra.mxu0 0.0
      %3627 = vmatprep.subr.mxu0 0.0
      %3628 = vmatpush1.msra.mxu0 0.0
      %3629 = vmatprep.subr.mxu0 0.0
      %3630 = vmatpush1.msra.mxu0 0.0
      %3631 = vmatprep.subr.mxu0 0.0
      %3632 = vmatpush1.msra.mxu0 0.0
      %3633 = vmatprep.subr.mxu0 0.0
      %3634 = vmatpush1.msra.mxu0 0.0
      %3635 = vmatprep.subr.mxu0 0.0
      %3636 = vmatpush1.msra.mxu0 0.0
      %3637 = vmatprep.subr.mxu0 0.0
      %3638 = vmatpush1.msra.mxu0 0.0
      %3639 = vmatprep.subr.mxu0 0.0
      %3640 = vmatpush1.msra.mxu0 0.0
      %3641 = vmatprep.subr.mxu0 0.0
      %3642 = vmatpush1.msra.mxu0 0.0
      %3643 = vmatprep.subr.mxu0 0.0
      %3644 = vmatpush1.msra.mxu0 0.0
      %3645 = vmatprep.subr.mxu0 0.0
      %3646 = vmatpush1.msra.mxu0 0.0
      %3647 = vmatprep.subr.mxu0 0.0
      %3648 = vmatpush1.msra.mxu0 0.0
      %3649 = vmatprep.subr.mxu0 0.0
      %3650 = vmatpush1.msra.mxu0 0.0
      %3651 = vmatprep.subr.mxu0 0.0
      %3652 = vmatpush1.msra.mxu0 0.0
      %3653 = vmatprep.subr.mxu0 0.0
      %3654 = vmatpush1.msra.mxu0 0.0
      %3655 = vmatprep.subr.mxu0 0.0
      %3656 = vmatpush1.msra.mxu0 0.0
      %3657 = vmatprep.subr.mxu0 0.0
      %3658 = vmatpush1.msra.mxu0 0.0
      %3659 = vmatprep.subr.mxu0 0.0
      %3660 = vmatpush1.msra.mxu0 0.0
      %3661 = vmatprep.subr.mxu0 0.0
      %3662 = vmatpush1.msra.mxu0 0.0
      %3663 = vmatprep.subr.mxu0 0.0
      %3664 = vmatpush1.msra.mxu0 0.0
      %3665 = vmatprep.subr.mxu0 0.0
      %3666 = vmatpush1.msra.mxu0 0.0
      %3667 = vmatprep.subr.mxu0 0.0
      %3668 = vmatpush1.msra.mxu0 0.0
      %3669 = vmatprep.subr.mxu0 0.0
      %3670 = vmatpush1.msra.mxu0 0.0
      %3671 = vmatprep.subr.mxu0 0.0
      %3672 = vmatpush1.msra.mxu0 0.0
      %3673 = vmatprep.subr.mxu0 0.0
      %3674 = vmatpush1.msra.mxu0 0.0
      %3675 = vmatprep.subr.mxu0 0.0
      %3676 = vmatpush1.msra.mxu0 0.0
      %3677 = vmatprep.subr.mxu0 0.0
      %3678 = vmatpush1.msra.mxu0 0.0
      %3679 = vmatprep.subr.mxu0 0.0
      %3680 = vmatpush1.msra.mxu0 0.0
      %3681 = vmatprep.subr.mxu0 0.0
      %3682 = vmatpush1.msra.mxu0 0.0
      %3683 = vmatprep.subr.mxu0 0.0
      %3684 = vmatpush1.msra.mxu0 0.0
      %3685 = vmatprep.subr.mxu0 0.0
      %3686 = vmatpush1.msra.mxu0 0.0
      %3687 = vmatprep.mubr.f32.mxu0 0.0
      %3688 = vmatmul.mubr.f32.gmra.mrb[0].mxu0 %v3621
      %v3689 = vpop.f32.mrb[0].mxu0
      %v3690 = vadd.f32 0.0, %v3689
      %v3691 = vpop.f32.mrb[0].mxu0
      %3692 = vdwg.mxu0
      %v3694 = vsel %vm1153, %v3397, 0
      %3696 = vmatprep.subr.mxu0 0.0
      %3697 = vmatpush1.msra.mxu0 %v671
      %3698 = vmatprep.subr.mxu0 0.0
      %3699 = vmatpush1.msra.mxu0 0.0
      %3700 = vmatprep.subr.mxu0 0.0
      %3701 = vmatpush1.msra.mxu0 0.0
      %3702 = vmatprep.subr.mxu0 0.0
      %3703 = vmatpush1.msra.mxu0 0.0
      %3704 = vmatprep.subr.mxu0 0.0
      %3705 = vmatpush1.msra.mxu0 0.0
      %3706 = vmatprep.subr.mxu0 0.0
      %3707 = vmatpush1.msra.mxu0 0.0
      %3708 = vmatprep.subr.mxu0 0.0
      %3709 = vmatpush1.msra.mxu0 0.0
      %3710 = vmatprep.subr.mxu0 0.0
      %3711 = vmatpush1.msra.mxu0 0.0
      %3712 = vmatprep.subr.mxu0 0.0
      %3713 = vmatpush1.msra.mxu0 0.0
      %3714 = vmatprep.subr.mxu0 0.0
      %3715 = vmatpush1.msra.mxu0 0.0
      %3716 = vmatprep.subr.mxu0 0.0
      %3717 = vmatpush1.msra.mxu0 0.0
      %3718 = vmatprep.subr.mxu0 0.0
      %3719 = vmatpush1.msra.mxu0 0.0
      %3720 = vmatprep.subr.mxu0 0.0
      %3721 = vmatpush1.msra.mxu0 0.0
      %3722 = vmatprep.subr.mxu0 0.0
      %3723 = vmatpush1.msra.mxu0 0.0
      %3724 = vmatprep.subr.mxu0 0.0
      %3725 = vmatpush1.msra.mxu0 0.0
      %3726 = vmatprep.subr.mxu0 0.0
      %3727 = vmatpush1.msra.mxu0 0.0
      %3728 = vmatprep.subr.mxu0 0.0
      %3729 = vmatpush1.msra.mxu0 0.0
      %3730 = vmatprep.subr.mxu0 0.0
      %3731 = vmatpush1.msra.mxu0 0.0
      %3732 = vmatprep.subr.mxu0 0.0
      %3733 = vmatpush1.msra.mxu0 0.0
      %3734 = vmatprep.subr.mxu0 0.0
      %3735 = vmatpush1.msra.mxu0 0.0
      %3736 = vmatprep.subr.mxu0 0.0
      %3737 = vmatpush1.msra.mxu0 0.0
      %3738 = vmatprep.subr.mxu0 0.0
      %3739 = vmatpush1.msra.mxu0 0.0
      %3740 = vmatprep.subr.mxu0 0.0
      %3741 = vmatpush1.msra.mxu0 0.0
      %3742 = vmatprep.subr.mxu0 0.0
      %3743 = vmatpush1.msra.mxu0 0.0
      %3744 = vmatprep.subr.mxu0 0.0
      %3745 = vmatpush1.msra.mxu0 0.0
      %3746 = vmatprep.subr.mxu0 0.0
      %3747 = vmatpush1.msra.mxu0 0.0
      %3748 = vmatprep.subr.mxu0 0.0
      %3749 = vmatpush1.msra.mxu0 0.0
      %3750 = vmatprep.subr.mxu0 0.0
      %3751 = vmatpush1.msra.mxu0 0.0
      %3752 = vmatprep.subr.mxu0 0.0
      %3753 = vmatpush1.msra.mxu0 0.0
      %3754 = vmatprep.subr.mxu0 0.0
      %3755 = vmatpush1.msra.mxu0 0.0
      %3756 = vmatprep.subr.mxu0 0.0
      %3757 = vmatpush1.msra.mxu0 0.0
      %3758 = vmatprep.subr.mxu0 0.0
      %3759 = vmatpush1.msra.mxu0 0.0
      %3760 = vmatprep.mubr.f32.mxu0 0.0
      %3761 = vmatmul.mubr.f32.gmra.mrb[0].mxu0 %v3694
      %v3762 = vpop.f32.mrb[0].mxu0
      %v3763 = vadd.f32 0.0, %v3762
      %v3764 = vpop.f32.mrb[0].mxu0
      %3765 = vdwg.mxu0
      %v3767 = vsel %vm1153, %v3398, 0
      %3769 = vmatprep.subr.mxu0 0.0
      %3770 = vmatpush1.msra.mxu0 %v672
      %3771 = vmatprep.subr.mxu0 0.0
      %3772 = vmatpush1.msra.mxu0 0.0
      %3773 = vmatprep.subr.mxu0 0.0
      %3774 = vmatpush1.msra.mxu0 0.0
      %3775 = vmatprep.subr.mxu0 0.0
      %3776 = vmatpush1.msra.mxu0 0.0
      %3777 = vmatprep.subr.mxu0 0.0
      %3778 = vmatpush1.msra.mxu0 0.0
      %3779 = vmatprep.subr.mxu0 0.0
      %3780 = vmatpush1.msra.mxu0 0.0
      %3781 = vmatprep.subr.mxu0 0.0
      %3782 = vmatpush1.msra.mxu0 0.0
      %3783 = vmatprep.subr.mxu0 0.0
      %3784 = vmatpush1.msra.mxu0 0.0
      %3785 = vmatprep.subr.mxu0 0.0
      %3786 = vmatpush1.msra.mxu0 0.0
      %3787 = vmatprep.subr.mxu0 0.0
      %3788 = vmatpush1.msra.mxu0 0.0
      %3789 = vmatprep.subr.mxu0 0.0
      %3790 = vmatpush1.msra.mxu0 0.0
      %3791 = vmatprep.subr.mxu0 0.0
      %3792 = vmatpush1.msra.mxu0 0.0
      %3793 = vmatprep.subr.mxu0 0.0
      %3794 = vmatpush1.msra.mxu0 0.0
      %3795 = vmatprep.subr.mxu0 0.0
      %3796 = vmatpush1.msra.mxu0 0.0
      %3797 = vmatprep.subr.mxu0 0.0
      %3798 = vmatpush1.msra.mxu0 0.0
      %3799 = vmatprep.subr.mxu0 0.0
      %3800 = vmatpush1.msra.mxu0 0.0
      %3801 = vmatprep.subr.mxu0 0.0
      %3802 = vmatpush1.msra.mxu0 0.0
      %3803 = vmatprep.subr.mxu0 0.0
      %3804 = vmatpush1.msra.mxu0 0.0
      %3805 = vmatprep.subr.mxu0 0.0
      %3806 = vmatpush1.msra.mxu0 0.0
      %3807 = vmatprep.subr.mxu0 0.0
      %3808 = vmatpush1.msra.mxu0 0.0
      %3809 = vmatprep.subr.mxu0 0.0
      %3810 = vmatpush1.msra.mxu0 0.0
      %3811 = vmatprep.subr.mxu0 0.0
      %3812 = vmatpush1.msra.mxu0 0.0
      %3813 = vmatprep.subr.mxu0 0.0
      %3814 = vmatpush1.msra.mxu0 0.0
      %3815 = vmatprep.subr.mxu0 0.0
      %3816 = vmatpush1.msra.mxu0 0.0
      %3817 = vmatprep.subr.mxu0 0.0
      %3818 = vmatpush1.msra.mxu0 0.0
      %3819 = vmatprep.subr.mxu0 0.0
      %3820 = vmatpush1.msra.mxu0 0.0
      %3821 = vmatprep.subr.mxu0 0.0
      %3822 = vmatpush1.msra.mxu0 0.0
      %3823 = vmatprep.subr.mxu0 0.0
      %3824 = vmatpush1.msra.mxu0 0.0
      %3825 = vmatprep.subr.mxu0 0.0
      %3826 = vmatpush1.msra.mxu0 0.0
      %3827 = vmatprep.subr.mxu0 0.0
      %3828 = vmatpush1.msra.mxu0 0.0
      %3829 = vmatprep.subr.mxu0 0.0
      %3830 = vmatpush1.msra.mxu0 0.0
      %3831 = vmatprep.subr.mxu0 0.0
      %3832 = vmatpush1.msra.mxu0 0.0
      %3833 = vmatprep.mubr.f32.mxu0 0.0
      %3834 = vmatmul.mubr.f32.gmra.mrb[0].mxu0 %v3767
      %v3835 = vpop.f32.mrb[0].mxu0
      %v3836 = vadd.f32 0.0, %v3835
      %v3837 = vpop.f32.mrb[0].mxu0
      %3838 = vdwg.mxu0
      %v3840 = vsel %vm1153, %v3399, 0
      %3842 = vmatprep.subr.mxu0 0.0
      %3843 = vmatpush1.msra.mxu0 %v673
      %3844 = vmatprep.subr.mxu0 0.0
      %3845 = vmatpush1.msra.mxu0 0.0
      %3846 = vmatprep.subr.mxu0 0.0
      %3847 = vmatpush1.msra.mxu0 0.0
      %3848 = vmatprep.subr.mxu0 0.0
      %3849 = vmatpush1.msra.mxu0 0.0
      %3850 = vmatprep.subr.mxu0 0.0
      %3851 = vmatpush1.msra.mxu0 0.0
      %3852 = vmatprep.subr.mxu0 0.0
      %3853 = vmatpush1.msra.mxu0 0.0
      %3854 = vmatprep.subr.mxu0 0.0
      %3855 = vmatpush1.msra.mxu0 0.0
      %3856 = vmatprep.subr.mxu0 0.0
      %3857 = vmatpush1.msra.mxu0 0.0
      %3858 = vmatprep.subr.mxu0 0.0
      %3859 = vmatpush1.msra.mxu0 0.0
      %3860 = vmatprep.subr.mxu0 0.0
      %3861 = vmatpush1.msra.mxu0 0.0
      %3862 = vmatprep.subr.mxu0 0.0
      %3863 = vmatpush1.msra.mxu0 0.0
      %3864 = vmatprep.subr.mxu0 0.0
      %3865 = vmatpush1.msra.mxu0 0.0
      %3866 = vmatprep.subr.mxu0 0.0
      %3867 = vmatpush1.msra.mxu0 0.0
      %3868 = vmatprep.subr.mxu0 0.0
      %3869 = vmatpush1.msra.mxu0 0.0
      %3870 = vmatprep.subr.mxu0 0.0
      %3871 = vmatpush1.msra.mxu0 0.0
      %3872 = vmatprep.subr.mxu0 0.0
      %3873 = vmatpush1.msra.mxu0 0.0
      %3874 = vmatprep.subr.mxu0 0.0
      %3875 = vmatpush1.msra.mxu0 0.0
      %3876 = vmatprep.subr.mxu0 0.0
      %3877 = vmatpush1.msra.mxu0 0.0
      %3878 = vmatprep.subr.mxu0 0.0
      %3879 = vmatpush1.msra.mxu0 0.0
      %3880 = vmatprep.subr.mxu0 0.0
      %3881 = vmatpush1.msra.mxu0 0.0
      %3882 = vmatprep.subr.mxu0 0.0
      %3883 = vmatpush1.msra.mxu0 0.0
      %3884 = vmatprep.subr.mxu0 0.0
      %3885 = vmatpush1.msra.mxu0 0.0
      %3886 = vmatprep.subr.mxu0 0.0
      %3887 = vmatpush1.msra.mxu0 0.0
      %3888 = vmatprep.subr.mxu0 0.0
      %3889 = vmatpush1.msra.mxu0 0.0
      %3890 = vmatprep.subr.mxu0 0.0
      %3891 = vmatpush1.msra.mxu0 0.0
      %3892 = vmatprep.subr.mxu0 0.0
      %3893 = vmatpush1.msra.mxu0 0.0
      %3894 = vmatprep.subr.mxu0 0.0
      %3895 = vmatpush1.msra.mxu0 0.0
      %3896 = vmatprep.subr.mxu0 0.0
      %3897 = vmatpush1.msra.mxu0 0.0
      %3898 = vmatprep.subr.mxu0 0.0
      %3899 = vmatpush1.msra.mxu0 0.0
      %3900 = vmatprep.subr.mxu0 0.0
      %3901 = vmatpush1.msra.mxu0 0.0
      %3902 = vmatprep.subr.mxu0 0.0
      %3903 = vmatpush1.msra.mxu0 0.0
      %3904 = vmatprep.subr.mxu0 0.0
      %3905 = vmatpush1.msra.mxu0 0.0
      %3906 = vmatprep.mubr.f32.mxu0 0.0
      %3907 = vmatmul.mubr.f32.gmra.mrb[0].mxu0 %v3840
      %v3908 = vpop.f32.mrb[0].mxu0
      %v3909 = vadd.f32 0.0, %v3908
      %v3910 = vpop.f32.mrb[0].mxu0
      %3911 = vdwg.mxu0
      %v3913 = vsel %vm1153, %v3400, 0
      %3915 = vmatprep.subr.mxu0 0.0
      %3916 = vmatpush1.msra.mxu0 %v674
      %3917 = vmatprep.subr.mxu0 0.0
      %3918 = vmatpush1.msra.mxu0 0.0
      %3919 = vmatprep.subr.mxu0 0.0
      %3920 = vmatpush1.msra.mxu0 0.0
      %3921 = vmatprep.subr.mxu0 0.0
      %3922 = vmatpush1.msra.mxu0 0.0
      %3923 = vmatprep.subr.mxu0 0.0
      %3924 = vmatpush1.msra.mxu0 0.0
      %3925 = vmatprep.subr.mxu0 0.0
      %3926 = vmatpush1.msra.mxu0 0.0
      %3927 = vmatprep.subr.mxu0 0.0
      %3928 = vmatpush1.msra.mxu0 0.0
      %3929 = vmatprep.subr.mxu0 0.0
      %3930 = vmatpush1.msra.mxu0 0.0
      %3931 = vmatprep.subr.mxu0 0.0
      %3932 = vmatpush1.msra.mxu0 0.0
      %3933 = vmatprep.subr.mxu0 0.0
      %3934 = vmatpush1.msra.mxu0 0.0
      %3935 = vmatprep.subr.mxu0 0.0
      %3936 = vmatpush1.msra.mxu0 0.0
      %3937 = vmatprep.subr.mxu0 0.0
      %3938 = vmatpush1.msra.mxu0 0.0
      %3939 = vmatprep.subr.mxu0 0.0
      %3940 = vmatpush1.msra.mxu0 0.0
      %3941 = vmatprep.subr.mxu0 0.0
      %3942 = vmatpush1.msra.mxu0 0.0
      %3943 = vmatprep.subr.mxu0 0.0
      %3944 = vmatpush1.msra.mxu0 0.0
      %3945 = vmatprep.subr.mxu0 0.0
      %3946 = vmatpush1.msra.mxu0 0.0
      %3947 = vmatprep.subr.mxu0 0.0
      %3948 = vmatpush1.msra.mxu0 0.0
      %3949 = vmatprep.subr.mxu0 0.0
      %3950 = vmatpush1.msra.mxu0 0.0
      %3951 = vmatprep.subr.mxu0 0.0
      %3952 = vmatpush1.msra.mxu0 0.0
      %3953 = vmatprep.subr.mxu0 0.0
      %3954 = vmatpush1.msra.mxu0 0.0
      %3955 = vmatprep.subr.mxu0 0.0
      %3956 = vmatpush1.msra.mxu0 0.0
      %3957 = vmatprep.subr.mxu0 0.0
      %3958 = vmatpush1.msra.mxu0 0.0
      %3959 = vmatprep.subr.mxu0 0.0
      %3960 = vmatpush1.msra.mxu0 0.0
      %3961 = vmatprep.subr.mxu0 0.0
      %3962 = vmatpush1.msra.mxu0 0.0
      %3963 = vmatprep.subr.mxu0 0.0
      %3964 = vmatpush1.msra.mxu0 0.0
      %3965 = vmatprep.subr.mxu0 0.0
      %3966 = vmatpush1.msra.mxu0 0.0
      %3967 = vmatprep.subr.mxu0 0.0
      %3968 = vmatpush1.msra.mxu0 0.0
      %3969 = vmatprep.subr.mxu0 0.0
      %3970 = vmatpush1.msra.mxu0 0.0
      %3971 = vmatprep.subr.mxu0 0.0
      %3972 = vmatpush1.msra.mxu0 0.0
      %3973 = vmatprep.subr.mxu0 0.0
      %3974 = vmatpush1.msra.mxu0 0.0
      %3975 = vmatprep.subr.mxu0 0.0
      %3976 = vmatpush1.msra.mxu0 0.0
      %3977 = vmatprep.subr.mxu0 0.0
      %3978 = vmatpush1.msra.mxu0 0.0
      %3979 = vmatprep.mubr.f32.mxu0 0.0
      %3980 = vmatmul.mubr.f32.gmra.mrb[0].mxu0 %v3913
      %v3981 = vpop.f32.mrb[0].mxu0
      %v3982 = vadd.f32 0.0, %v3981
      %v3983 = vpop.f32.mrb[0].mxu0
      %3984 = vdwg.mxu0
      %v3985 = vld [vmem:[#allocation5] sm:$0xff]
      %v3986 = vmul.f32 %v1182, %v3985
      %v3995 = vrot.slane %v3544, 7
      %vm3996 = vcmask 1041409
      %v3997 = vsel %vm3996, %v3995, %v3471
      %v3998 = vrot.slane %v3617, 6
      %vm3999 = vcmask 1042434
      %v4000 = vsel %vm3999, %v3998, %v3997
      %v4001 = vrot.slane %v3690, 5
      %vm4002 = vcmask 1043459
      %v4003 = vsel %vm4002, %v4001, %v4000
      %v4004 = vrot.slane %v3763, 4
      %vm4005 = vcmask 1044484
      %v4006 = vsel %vm4005, %v4004, %v4003
      %v4007 = vrot.slane %v3836, 3
      %vm4008 = vcmask 1045509
      %v4009 = vsel %vm4008, %v4007, %v4006
      %v4010 = vrot.slane %v3909, 2
      %vm4011 = vcmask 1046534
      %v4012 = vsel %vm4011, %v4010, %v4009
      %v4013 = vrot.slane %v3982, 1
      %vm4014 = vcmask 1047559
      %v4015 = vsel %vm4014, %v4013, %v4012
      %v4017 = vadd.f32 %v3986, %v4015
      %4018 = vst.msk [vmem:[#allocation5] sm:$0xff] %vm1153, %v4017
      %v4019 = vld [vmem:[#allocation5] sm:$0xff]
      %v4020 = vmul.f32 %v1768, %v4019
      %v4021 = vrot.slane %v3471, 1
      %v4022 = vsel %vm3996, %v3544, %v4021
      %v4023 = vrot.slane %v3617, 7
      %v4024 = vsel %vm3999, %v4023, %v4022
      %v4025 = vrot.slane %v3690, 6
      %v4026 = vsel %vm4002, %v4025, %v4024
      %v4027 = vrot.slane %v3763, 5
      %v4028 = vsel %vm4005, %v4027, %v4026
      %v4029 = vrot.slane %v3836, 4
      %v4030 = vsel %vm4008, %v4029, %v4028
      %v4031 = vrot.slane %v3909, 3
      %v4032 = vsel %vm4011, %v4031, %v4030
      %v4033 = vrot.slane %v3982, 2
      %v4034 = vsel %vm4014, %v4033, %v4032
      %4035 = vrot.lane.b32.xlu0 %v4034, 8
      %v4036 = vpop.permute.xlu0 %4035
      %v4038 = vadd.f32 %v4020, %v4036
      %vm4039 = vcmask 130112
      %4040 = vst.msk [vmem:[#allocation5] sm:$0xff] %vm4039, %v4038
      %v4041 = vld [vmem:[#allocation5] sm:$0xff]
      %v4042 = vmul.f32 %v2362, %v4041
      %v4043 = vrot.slane %v3471, 2
      %v4044 = vrot.slane %v3544, 1
      %v4045 = vsel %vm3996, %v4044, %v4043
      %v4046 = vsel %vm3999, %v3617, %v4045
      %v4047 = vrot.slane %v3690, 7
      %v4048 = vsel %vm4002, %v4047, %v4046
      %v4049 = vrot.slane %v3763, 6
      %v4050 = vsel %vm4005, %v4049, %v4048
      %v4051 = vrot.slane %v3836, 5
      %v4052 = vsel %vm4008, %v4051, %v4050
      %v4053 = vrot.slane %v3909, 4
      %v4054 = vsel %vm4011, %v4053, %v4052
      %v4055 = vrot.slane %v3982, 3
      %v4056 = vsel %vm4014, %v4055, %v4054
      %4057 = vrot.lane.b32.xlu0 %v4056, 16
      %v4058 = vpop.permute.xlu0 %4057
      %v4060 = vadd.f32 %v4042, %v4058
      %vm4061 = vcmask 195712
      %4062 = vst.msk [vmem:[#allocation5] sm:$0xff] %vm4061, %v4060
      %v4063 = vld [vmem:[#allocation5] sm:$0xff]
      %v4064 = vmul.f32 %v2956, %v4063
      %v4065 = vrot.slane %v3471, 3
      %v4066 = vrot.slane %v3544, 2
      %v4067 = vsel %vm3996, %v4066, %v4065
      %v4068 = vrot.slane %v3617, 1
      %v4069 = vsel %vm3999, %v4068, %v4067
      %v4070 = vsel %vm4002, %v3690, %v4069
      %v4071 = vrot.slane %v3763, 7
      %v4072 = vsel %vm4005, %v4071, %v4070
      %v4073 = vrot.slane %v3836, 6
      %v4074 = vsel %vm4008, %v4073, %v4072
      %v4075 = vrot.slane %v3909, 5
      %v4076 = vsel %vm4011, %v4075, %v4074
      %v4077 = vrot.slane %v3982, 4
      %v4078 = vsel %vm4014, %v4077, %v4076
      %4079 = vrot.lane.b32.xlu0 %v4078, 24
      %v4080 = vpop.permute.xlu0 %4079
      %v4082 = vadd.f32 %v4064, %v4080
      %vm4083 = vcmask 261312
      %4084 = vst.msk [vmem:[#allocation5] sm:$0xff] %vm4083, %v4082
      // Predicated region
      $region61: #{ipa_forward.1} parent=55 // pred_check
        %p4085 = pneg %p643
      $region62: #{ipa_forward.1} parent=55 // pred_check_branch
        %4087 = sbr.rel (%p4085) target = $region64
      $region63: #{ipa_forward.1} parent=55 // pred_region
        %v4088 = vld [vmem:[#allocation3] sm:$0xff]
        %v4089 = vrcp.pop %v4088
        %v4090 = vld [vmem:[#allocation4] sm:$0xff]
        %4092 = vset.pattern.permute.xlu0 0
        %4093 = vperm.xlu0 %4092, %v4089
        %v4094 = vpop.permute.xlu0 %4093
        %v4096 = vmul.f32 %v4090, %v4094
        %4097 = vst.msk [vmem:[%s642] sm:$0xff] %vm1259, %v4096
        %v4098 = vld [vmem:[#allocation5] sm:$0xff]
        %v4099 = vmul.f32 %v4098, %v4094
        %4101 = vrot.lane.b32.xlu0 %v4099, 40
        %v4102 = vpop.permute.xlu0 %4101
        %vm4104 = vcmask 392512
        %4105 = vst.msk [vmem:[%s642] sm:$0xff] %vm4104, %v4102
        %v4106 = vld [vmem:[#allocation3] sm:$0xff]
        %v4107 = vrcp.pop %v4106
        %v4108 = vld [vmem:[#allocation4] sm:$0xff]
        %4110 = vset.pattern.permute.xlu0 1
        %4111 = vperm.xlu0 %4110, %v4107
        %v4112 = vpop.permute.xlu0 %4111
        %v4114 = vmul.f32 %v4108, %v4112
        %4116 = vrot.lane.b32.xlu0 %v4114, 8
        %v4117 = vpop.permute.xlu0 %4116
        %vm4119 = vcmask 720256
        %4120 = vst.msk [vmem:[%s642] sm:$0xff] %vm4119, %v4117
        %v4121 = vld [vmem:[#allocation5] sm:$0xff]
        %v4122 = vmul.f32 %v4121, %v4112
        %4124 = vrot.lane.b32.xlu0 %v4122, 80
        %v4125 = vpop.permute.xlu0 %4124
        %vm4127 = vcmask 786112
        %4128 = vst.msk [vmem:[%s642] sm:$0xff] %vm4127, %v4125
        %v4129 = vld [vmem:[#allocation3] sm:$0xff]
        %v4130 = vrcp.pop %v4129
        %v4131 = vld [vmem:[#allocation4] sm:$0xff]
        %4133 = vset.pattern.permute.xlu0 2
        %4134 = vperm.xlu0 %4133, %v4130
        %v4135 = vpop.permute.xlu0 %4134
        %v4137 = vmul.f32 %v4131, %v4135
        %4139 = vrot.lane.b32.xlu0 %v4137, 16
        %v4140 = vpop.permute.xlu0 %4139
        %vm4142 = vcmask 1048320
        %4143 = vst.msk [vmem:[%s642] sm:$0xff] %vm4142, %v4140
        %4144 = vst.msk [vmem:[%s642 + $0x8] sm:$0xff] %vm1153, %v4140
        %v4145 = vld [vmem:[#allocation5] sm:$0xff]
        %v4146 = vmul.f32 %v4145, %v4135
        %4148 = vrot.lane.b32.xlu0 %v4146, 120
        %v4149 = vpop.permute.xlu0 %4148
        %4151 = vst.msk [vmem:[%s642 + $0x8] sm:$0xff] %vm4039, %v4149
        %v4152 = vld [vmem:[#allocation3] sm:$0xff]
        %v4153 = vrcp.pop %v4152
        %v4154 = vld [vmem:[#allocation4] sm:$0xff]
        %v4155 = vld [vmem:[#allocation4 + $0x8] sm:$0xff]
        %4157 = vset.pattern.permute.xlu0 3
        %4158 = vperm.xlu0 %4157, %v4153
        %v4159 = vpop.permute.xlu0 %4158
        %v4161 = vmul.f32 %v4154, %v4159
        %v4162 = vmul.f32 %v4155, %v4159
        %4165 = vrot.lane.b32.xlu0 %v4161, 24
        %v4166 = vpop.permute.xlu0 %4165
        %4167 = vrot.lane.b32.xlu0 %v4162, 24
        %v4168 = vpop.permute.xlu0 %4167
        %vm4169 = vcmask 195584
        %v4170 = vsel %vm4169, %v4166, %v4168
        %vm4172 = vcmask 457856
        %4173 = vst.msk [vmem:[%s642 + $0x8] sm:$0xff] %vm4172, %v4170
        %v4174 = vld [vmem:[#allocation5] sm:$0xff]
        %v4175 = vmul.f32 %v4174, %v4159
        %4177 = vrot.lane.b32.xlu0 %v4175, 32
        %v4178 = vpop.permute.xlu0 %4177
        %vm4180 = vcmask 523712
        %4181 = vst.msk [vmem:[%s642 + $0x8] sm:$0xff] %vm4180, %v4178
        %vm4182 = vcmask 1048064
        %4183 = vst.msk [vmem:[%s642 + $0x8] sm:$0xff] %vm4182, 0.0
      $region64: #{ipa_forward.1} parent=55 // pred_fallthru
        _
      %p4184 = scmp.lt.s32.totalorder %s32, 1
      %s4185 = scalar_select %p4184, %s32, 1
      %p4186 = scmp.lt.s32.totalorder %s33, 0
      %s4187 = scalar_select %p4186, %s33, 0
      %s4188 = smul.addr %s4187, 2
      %s4189 = smul.addr %s4185, 2
      %s4190 = sadd.s32 %s4188, %s4189
      %s4191 = smul.addr %s4190, 8
      %s4192 = scalar_lea.vmem %s10, %s4191
      // Predicated region
      $region65: #{ipa_forward.1} parent=55 // pred_check
        %p4193 = pneg %p322
      $region66: #{ipa_forward.1} parent=55 // pred_check_branch
        %4195 = sbr.rel (%p4193) target = $region68
      $region67: #{ipa_forward.1} parent=55 // pred_region
        _
      $region68: #{ipa_forward.1} parent=55 // pred_fallthru
        _
    $region56: #{ipa_forward.1} parent=5 // pred_fallthru
      _
    %p4196 = scmp.le.s32.totalorder 2, %s22
    // Predicated region
    $region69: #{ipa_forward.1} parent=5 // pred_check
      %p4197 = pneg %p4196
    $region70: #{ipa_forward.1} parent=5 // pred_check_branch
      %4199 = sbr.rel (%p4197) target = $region72
    $region71: #{ipa_forward.1} parent=5 // pred_region
      %s4200 = ssub.s32 %s22, 2
      // Predicated region
      $region73: #{ipa_forward.1} parent=71 // pred_check
        %p4201 = pneg %p328
      $region74: #{ipa_forward.1} parent=71 // pred_check_branch
        %4203 = sbr.rel (%p4201) target = $region76
      $region75: #{ipa_forward.1} parent=71 // pred_region
        %p4204 = scmp.lt.s32.totalorder %s35, 1
        %s4205 = scalar_select %p4204, %s35, 1
        %p4206 = scmp.lt.s32.totalorder %s36, 0
        %s4207 = scalar_select %p4206, %s36, 0
        %s4208 = smul.addr %s4207, 2
        %s4209 = smul.addr %s4205, 2
        %s4210 = sadd.s32 %s4208, %s4209
        %s4211 = smul.addr %s4210, 8
        %s4212 = scalar_lea.vmem %s10, %s4211
      $region76: #{ipa_forward.1} parent=71 // pred_fallthru
        _
    $region72: #{ipa_forward.1} parent=5 // pred_fallthru
      _
  $region6: #{ipa_forward.1} parent=0 // loop_footer
    %s26 = sadd.s32 1, %s22
  $region7: #{ipa_forward.1} parent=0 // loop_footer_branch
    %21 = sbr.rel target = $region3
  $region8: #{ipa_forward.1} parent=0 // loop_exit
    _

</llo_original>
